<compile_context>
chip_gen: v7x
topology: tpu7x:2x2x1
jax: 0.10.0
libtpu: 0.0.40
codegen_flags: <defaults>
</compile_context>

<pallas_src>
import functools

import jax
import jax.numpy as jnp
from jax.experimental import pallas as pl
from jax.experimental.pallas import tpu as pltpu

LATENT_CH = 4      # latent channels (AutoencoderKL uses a 4-channel latent)
PATCH = 4          # wrapper-side space-to-depth factor -> 4x spatial compression
HIDDEN = 64        # hidden channel width of the synthetic VAE
IMG_CH = 3


# --------------------------------------------------------------------------
# In-kernel building blocks
# --------------------------------------------------------------------------
def _conv3x3_im2col(a, w_ref, b_ref, not_left, not_right, *, width, apply_silu):
    """3x3 'same'-padded conv on a spatially-flattened activation.

    a:        (R, Cin) f32 value, rows are row-major over a (height, width) grid.
    w_ref:    (9*Cin, Cout) bf16 ref, taps ordered (dh, dw) row-major, cin fastest.
    b_ref:    (1, Cout) f32 ref.
    not_left/not_right: (R, 1) bool masks for the W-boundary columns.
    Returns (R, Cout) f32.
    """
    r, cin = a.shape
    zpad = jnp.zeros((width + 1, cin), a.dtype)
    ap = jnp.concatenate([zpad, a, zpad], axis=0)          # (R + 2*width + 2, Cin)
    taps = []
    for dh in (-1, 0, 1):
        for dw in (-1, 0, 1):
            off = (width + 1) + dh * width + dw
            t = ap[off:off + r, :]                         # static sublane slice
            if dw == -1:
                t = jnp.where(not_left, t, jnp.zeros_like(t))
            elif dw == 1:
                t = jnp.where(not_right, t, jnp.zeros_like(t))
            taps.append(t)
    patches = jnp.concatenate(taps, axis=1)                # (R, 9*Cin) im2col pack
    acc = jnp.dot(patches.astype(jnp.bfloat16), w_ref[...],
                  preferred_element_type=jnp.float32)      # single deep-K MXU matmul
    acc = acc + b_ref[...]
    if apply_silu:
        acc = acc * jax.nn.sigmoid(acc)
    return acc


def _vae_fused_kernel(x_ref, eps_ref,
                      we0, be0, we1, be1, we2, be2, we3, be3,
                      wd0, bd0, wd1, bd1, wd2, bd2, wd3, bd3,
                      o_ref, *, width):
    r = x_ref.shape[1]
    # Hoisted W-boundary masks (shared by all 8 convs).
    col = jax.lax.broadcasted_iota(jnp.int32, (r, 1), 0) % width
    not_left = col != 0
    not_right = col != (width - 1)
    conv = functools.partial(_conv3x3_im2col, not_left=not_left,
                             not_right=not_right, width=width)

    # ---- encoder ----
    h = x_ref[0]                                           # (R, 48) f32
    h = conv(h, we0, be0, apply_silu=True)
    h = conv(h, we1, be1, apply_silu=True)
    h = conv(h, we2, be2, apply_silu=True)
    moments = conv(h, we3, be3, apply_silu=False)          # (R, 2*LATENT_CH)

    # ---- DiagonalGaussianDistribution.sample() ----
    mean = moments[:, :LATENT_CH]
    logvar = jnp.clip(moments[:, LATENT_CH:], -30.0, 20.0)
    std = jnp.exp(0.5 * logvar)
    z = mean + std * eps_ref[0]                            # (R, LATENT_CH)

    # ---- decoder (sub-pixel: final conv emits 3*PATCH*PATCH channels) ----
    h = conv(z, wd0, bd0, apply_silu=True)
    h = conv(h, wd1, bd1, apply_silu=True)
    h = conv(h, wd2, bd2, apply_silu=True)
    y = conv(h, wd3, bd3, apply_silu=False)                # (R, 48)
    o_ref[0] = y.astype(o_ref.dtype)


# --------------------------------------------------------------------------
# Fused pallas_call wrapper
# --------------------------------------------------------------------------
_LAYERS = ("enc0", "enc1", "enc2", "enc3", "dec0", "dec1", "dec2", "dec3")


def _vae_pallas(params, x_flat, eps_flat, *, width):
    n, r, c_in = x_flat.shape
    operands = [x_flat, eps_flat]
    in_specs = [
        pl.BlockSpec((1, r, c_in), lambda i: (i, 0, 0)),
        pl.BlockSpec((1, r, LATENT_CH), lambda i: (i, 0, 0)),
    ]
    for name in _LAYERS:
        w, b = params[name]["w"], params[name]["b"]
        operands += [w, b]
        in_specs += [pl.BlockSpec(w.shape, lambda i: (0, 0)),
                     pl.BlockSpec(b.shape, lambda i: (0, 0))]
    kernel = functools.partial(_vae_fused_kernel, width=width)
    return pl.pallas_call(
        kernel,
        out_shape=jax.ShapeDtypeStruct((n, r, c_in), jnp.float32),
        grid_spec=pltpu.PrefetchScalarGridSpec(
            num_scalar_prefetch=0,
            grid=(n,),
            in_specs=in_specs,
            out_specs=pl.BlockSpec((1, r, c_in), lambda i: (i, 0, 0)),
        ),
        compiler_params=pltpu.CompilerParams(
            dimension_semantics=("parallel",),
        ),
    )(*operands)


# --------------------------------------------------------------------------
# Parameter setup (deterministic, synthetic)
# --------------------------------------------------------------------------
def _conv_params(key, cin, cout):
    kw_, kb_ = jax.random.split(key)
    scale = 1.0 / jnp.sqrt(9.0 * cin)
    w = jax.random.normal(kw_, (3, 3, cin, cout), jnp.float32) * scale
    b = jax.random.normal(kb_, (1, cout), jnp.float32) * 0.01
    # Pre-reshape to tap-packed matmul form and cast to bf16 for the MXU.
    return {"w": w.reshape(9 * cin, cout).astype(jnp.bfloat16), "b": b}


def init_params(key):
    keys = jax.random.split(key, 8)
    cin = IMG_CH * PATCH * PATCH                  # 48
    return {
        "enc0": _conv_params(keys[0], cin, HIDDEN),
        "enc1": _conv_params(keys[1], HIDDEN, HIDDEN),
        "enc2": _conv_params(keys[2], HIDDEN, HIDDEN),
        "enc3": _conv_params(keys[3], HIDDEN, 2 * LATENT_CH),
        "dec0": _conv_params(keys[4], LATENT_CH, HIDDEN),
        "dec1": _conv_params(keys[5], HIDDEN, HIDDEN),
        "dec2": _conv_params(keys[6], HIDDEN, HIDDEN),
        "dec3": _conv_params(keys[7], HIDDEN, cin),
    }


# --------------------------------------------------------------------------
# Wrapper-side layout plumbing (pure reshapes/transposes, no extra compute)
# --------------------------------------------------------------------------
def _space_to_depth(x, f):
    n, h, w, c = x.shape
    x = x.reshape(n, h // f, f, w // f, f, c)
    x = jnp.transpose(x, (0, 1, 3, 2, 4, 5))
    return x.reshape(n, h // f, w // f, f * f * c)


def _depth_to_space(x, f, c):
    n, s1, s2, _ = x.shape
    x = x.reshape(n, s1, s2, f, f, c)
    x = jnp.transpose(x, (0, 1, 3, 2, 4, 5))
    return x.reshape(n, s1 * f, s2 * f, c)


# --------------------------------------------------------------------------
# Forward: mirrors DiffusersCompression.forward (AutoencoderKL branch)
# --------------------------------------------------------------------------
def diffusers_compression_forward(params, image_nchw, sample_key):
    """x_hat = decode(encode(image).latent_dist.sample()).sample
    Input / output are NCHW, returned in the original dtype."""
    orig_dtype = image_nchw.dtype
    n = image_nchw.shape[0]
    h, w = image_nchw.shape[-2:]
    # TODO(synk): the bilinear F.interpolate resize branch for H/W not divisible
    # by 16 is not implemented in-kernel; example shapes are multiples of 16.
    assert h % 16 == 0 and w % 16 == 0
    x = jnp.transpose(image_nchw.astype(jnp.float32), (0, 2, 3, 1))   # NCHW->NHWC
    xs = _space_to_depth(x, PATCH)                     # (n, h/4, w/4, 48)
    s1, s2 = h // PATCH, w // PATCH
    x_flat = xs.reshape(n, s1 * s2, IMG_CH * PATCH * PATCH)
    eps = jax.random.normal(sample_key, (n, s1 * s2, LATENT_CH), jnp.float32)
    y_flat = _vae_pallas(params, x_flat, eps, width=s2)
    y = _depth_to_space(y_flat.reshape(n, s1, s2, IMG_CH * PATCH * PATCH),
                        PATCH, IMG_CH)                 # (n, h, w, 3)
    return jnp.transpose(y, (0, 3, 1, 2)).astype(orig_dtype)


# --------------------------------------------------------------------------
if __name__ == "__main__":
    key = jax.random.PRNGKey(0)
    pkey, xkey, skey = jax.random.split(key, 3)

    params = init_params(pkey)
    # image in [0, 1], NCHW like the PyTorch module expects
    image = jax.random.uniform(xkey, (2, 3, 16, 16), jnp.float32)

    fwd = jax.jit(diffusers_compression_forward)
    x_hat = fwd(params, image, skey)
    jax.block_until_ready(x_hat)

    assert x_hat.shape == image.shape, x_hat.shape
    assert x_hat.dtype == image.dtype, x_hat.dtype
    print("KERNEL_OK")
</pallas_src>

<mosaic_0001>
module attributes {stable_mosaic.version = 11 : i64} {
  func.func @_vae_fused_kernel(%arg0: i32, %arg1: memref<1x16x48xf32, #tpu.memory_space<vmem>>, %arg2: memref<1x16x4xf32, #tpu.memory_space<vmem>>, %arg3: memref<432x64xbf16, #tpu.memory_space<vmem>>, %arg4: memref<1x64xf32, #tpu.memory_space<vmem>>, %arg5: memref<576x64xbf16, #tpu.memory_space<vmem>>, %arg6: memref<1x64xf32, #tpu.memory_space<vmem>>, %arg7: memref<576x64xbf16, #tpu.memory_space<vmem>>, %arg8: memref<1x64xf32, #tpu.memory_space<vmem>>, %arg9: memref<576x8xbf16, #tpu.memory_space<vmem>>, %arg10: memref<1x8xf32, #tpu.memory_space<vmem>>, %arg11: memref<36x64xbf16, #tpu.memory_space<vmem>>, %arg12: memref<1x64xf32, #tpu.memory_space<vmem>>, %arg13: memref<576x64xbf16, #tpu.memory_space<vmem>>, %arg14: memref<1x64xf32, #tpu.memory_space<vmem>>, %arg15: memref<576x64xbf16, #tpu.memory_space<vmem>>, %arg16: memref<1x64xf32, #tpu.memory_space<vmem>>, %arg17: memref<576x48xbf16, #tpu.memory_space<vmem>>, %arg18: memref<1x48xf32, #tpu.memory_space<vmem>>, %arg19: memref<1x16x48xf32, #tpu.memory_space<vmem>>) attributes {dimension_semantics = [#tpu.dimension_semantics<parallel>], iteration_bounds = array<i64: 2>, scalar_prefetch = 0 : i64, scratch_operands = 0 : i64, tpu.core_type = #tpu.core_type<tc>, window_params = [{transform_indices = @transform_0, window_bounds = array<i64: 1, 16, 48>}, {transform_indices = @transform_1, window_bounds = array<i64: 1, 16, 4>}, {pipeline_mode = #tpu.pipeline_mode<synchronous>, transform_indices = @transform_2, window_bounds = array<i64: 432, 64>}, {pipeline_mode = #tpu.pipeline_mode<synchronous>, transform_indices = @transform_3, window_bounds = array<i64: 1, 64>}, {pipeline_mode = #tpu.pipeline_mode<synchronous>, transform_indices = @transform_4, window_bounds = array<i64: 576, 64>}, {pipeline_mode = #tpu.pipeline_mode<synchronous>, transform_indices = @transform_5, window_bounds = array<i64: 1, 64>}, {pipeline_mode = #tpu.pipeline_mode<synchronous>, transform_indices = @transform_6, window_bounds = array<i64: 576, 64>}, {pipeline_mode = #tpu.pipeline_mode<synchronous>, transform_indices = @transform_7, window_bounds = array<i64: 1, 64>}, {pipeline_mode = #tpu.pipeline_mode<synchronous>, transform_indices = @transform_8, window_bounds = array<i64: 576, 8>}, {pipeline_mode = #tpu.pipeline_mode<synchronous>, transform_indices = @transform_9, window_bounds = array<i64: 1, 8>}, {pipeline_mode = #tpu.pipeline_mode<synchronous>, transform_indices = @transform_10, window_bounds = array<i64: 36, 64>}, {pipeline_mode = #tpu.pipeline_mode<synchronous>, transform_indices = @transform_11, window_bounds = array<i64: 1, 64>}, {pipeline_mode = #tpu.pipeline_mode<synchronous>, transform_indices = @transform_12, window_bounds = array<i64: 576, 64>}, {pipeline_mode = #tpu.pipeline_mode<synchronous>, transform_indices = @transform_13, window_bounds = array<i64: 1, 64>}, {pipeline_mode = #tpu.pipeline_mode<synchronous>, transform_indices = @transform_14, window_bounds = array<i64: 576, 64>}, {pipeline_mode = #tpu.pipeline_mode<synchronous>, transform_indices = @transform_15, window_bounds = array<i64: 1, 64>}, {pipeline_mode = #tpu.pipeline_mode<synchronous>, transform_indices = @transform_16, window_bounds = array<i64: 576, 48>}, {pipeline_mode = #tpu.pipeline_mode<synchronous>, transform_indices = @transform_17, window_bounds = array<i64: 1, 48>}, {transform_indices = @transform_18, window_bounds = array<i64: 1, 16, 48>}]} {
    %0 = tpu.iota {dimensions = array<i32: 0>} : vector<16x1xi32>
    %c4_i32 = arith.constant 4 : i32
    %c0_i32 = arith.constant 0 : i32
    %1 = arith.cmpi eq, %c4_i32, %c0_i32 : i32
    %c1_i32 = arith.constant 1 : i32
    %2 = arith.select %1, %c1_i32, %c4_i32 : i32
    %3 = vector.broadcast %2 : i32 to vector<16x1xi32>
    %4 = arith.remsi %0, %3 : vector<16x1xi32>
    %c0_i32_0 = arith.constant 0 : i32
    %5 = vector.broadcast %c0_i32_0 : i32 to vector<16x1xi32>
    %6 = arith.cmpi ne, %4, %5 : vector<16x1xi32>
    %c0_i32_1 = arith.constant 0 : i32
    %7 = vector.broadcast %c0_i32_1 : i32 to vector<16x1xi32>
    %8 = arith.cmpi slt, %4, %7 : vector<16x1xi32>
    %c0_i32_2 = arith.constant 0 : i32
    %9 = arith.cmpi slt, %2, %c0_i32_2 : i32
    %10 = vector.broadcast %9 : i1 to vector<16x1xi1>
    %11 = vector.broadcast %10 : vector<16x1xi1> to vector<16x1xi1>
    %12 = arith.xori %8, %11 : vector<16x1xi1>
    %13 = arith.andi %12, %6 : vector<16x1xi1>
    %14 = vector.broadcast %2 : i32 to vector<16x1xi32>
    %15 = arith.addi %4, %14 : vector<16x1xi32>
    %16 = arith.select %13, %15, %4 : vector<16x1xi1>, vector<16x1xi32>
    %c0_i32_3 = arith.constant 0 : i32
    %17 = vector.broadcast %c0_i32_3 : i32 to vector<16x1xi32>
    %18 = arith.cmpi ne, %16, %17 : vector<16x1xi32>
    %c3_i32 = arith.constant 3 : i32
    %19 = vector.broadcast %c3_i32 : i32 to vector<16x1xi32>
    %20 = arith.cmpi ne, %16, %19 : vector<16x1xi32>
    %c0 = arith.constant 0 : index
    %c0_4 = arith.constant 0 : index
    %c0_5 = arith.constant 0 : index
    %21 = vector.load %arg1[%c0, %c0_4, %c0_5] : memref<1x16x48xf32, #tpu.memory_space<vmem>>, vector<1x16x48xf32>
    %22 = vector.shape_cast %21 : vector<1x16x48xf32> to vector<16x48xf32>
    %cst = arith.constant 0.000000e+00 : f32
    %23 = vector.broadcast %cst : f32 to vector<5x48xf32>
    %24 = tpu.concatenate %23, %22, %23 in 0 : vector<5x48xf32>, vector<16x48xf32>, vector<5x48xf32> -> vector<26x48xf32>
    %25 = vector.extract_strided_slice %24 {offsets = [0, 0], sizes = [16, 48], strides = [1, 1]} : vector<26x48xf32> to vector<16x48xf32>
    %cst_6 = arith.constant 0.000000e+00 : f32
    %26 = vector.broadcast %cst_6 : f32 to vector<16x48xf32>
    %27 = vector.shape_cast %18 : vector<16x1xi1> to vector<16x1xi1>
    %28 = vector.broadcast %27 : vector<16x1xi1> to vector<16x48xi1>
    %29 = arith.select %28, %25, %26 : vector<16x48xi1>, vector<16x48xf32>
    %30 = vector.extract_strided_slice %24 {offsets = [1, 0], sizes = [16, 48], strides = [1, 1]} : vector<26x48xf32> to vector<16x48xf32>
    %31 = vector.extract_strided_slice %24 {offsets = [2, 0], sizes = [16, 48], strides = [1, 1]} : vector<26x48xf32> to vector<16x48xf32>
    %cst_7 = arith.constant 0.000000e+00 : f32
    %32 = vector.broadcast %cst_7 : f32 to vector<16x48xf32>
    %33 = vector.shape_cast %20 : vector<16x1xi1> to vector<16x1xi1>
    %34 = vector.broadcast %33 : vector<16x1xi1> to vector<16x48xi1>
    %35 = arith.select %34, %31, %32 : vector<16x48xi1>, vector<16x48xf32>
    %36 = vector.extract_strided_slice %24 {offsets = [4, 0], sizes = [16, 48], strides = [1, 1]} : vector<26x48xf32> to vector<16x48xf32>
    %cst_8 = arith.constant 0.000000e+00 : f32
    %37 = vector.broadcast %cst_8 : f32 to vector<16x48xf32>
    %38 = vector.shape_cast %18 : vector<16x1xi1> to vector<16x1xi1>
    %39 = vector.broadcast %38 : vector<16x1xi1> to vector<16x48xi1>
    %40 = arith.select %39, %36, %37 : vector<16x48xi1>, vector<16x48xf32>
    %41 = vector.extract_strided_slice %24 {offsets = [5, 0], sizes = [16, 48], strides = [1, 1]} : vector<26x48xf32> to vector<16x48xf32>
    %42 = vector.extract_strided_slice %24 {offsets = [6, 0], sizes = [16, 48], strides = [1, 1]} : vector<26x48xf32> to vector<16x48xf32>
    %cst_9 = arith.constant 0.000000e+00 : f32
    %43 = vector.broadcast %cst_9 : f32 to vector<16x48xf32>
    %44 = vector.shape_cast %20 : vector<16x1xi1> to vector<16x1xi1>
    %45 = vector.broadcast %44 : vector<16x1xi1> to vector<16x48xi1>
    %46 = arith.select %45, %42, %43 : vector<16x48xi1>, vector<16x48xf32>
    %47 = vector.extract_strided_slice %24 {offsets = [8, 0], sizes = [16, 48], strides = [1, 1]} : vector<26x48xf32> to vector<16x48xf32>
    %cst_10 = arith.constant 0.000000e+00 : f32
    %48 = vector.broadcast %cst_10 : f32 to vector<16x48xf32>
    %49 = vector.shape_cast %18 : vector<16x1xi1> to vector<16x1xi1>
    %50 = vector.broadcast %49 : vector<16x1xi1> to vector<16x48xi1>
    %51 = arith.select %50, %47, %48 : vector<16x48xi1>, vector<16x48xf32>
    %52 = vector.extract_strided_slice %24 {offsets = [9, 0], sizes = [16, 48], strides = [1, 1]} : vector<26x48xf32> to vector<16x48xf32>
    %53 = vector.extract_strided_slice %24 {offsets = [10, 0], sizes = [16, 48], strides = [1, 1]} : vector<26x48xf32> to vector<16x48xf32>
    %cst_11 = arith.constant 0.000000e+00 : f32
    %54 = vector.broadcast %cst_11 : f32 to vector<16x48xf32>
    %55 = vector.shape_cast %20 : vector<16x1xi1> to vector<16x1xi1>
    %56 = vector.broadcast %55 : vector<16x1xi1> to vector<16x48xi1>
    %57 = arith.select %56, %53, %54 : vector<16x48xi1>, vector<16x48xf32>
    %58 = tpu.concatenate %29, %30, %35, %40, %41, %46, %51, %52, %57 in 1 : vector<16x48xf32>, vector<16x48xf32>, vector<16x48xf32>, vector<16x48xf32>, vector<16x48xf32>, vector<16x48xf32>, vector<16x48xf32>, vector<16x48xf32>, vector<16x48xf32> -> vector<16x432xf32>
    %59 = arith.truncf %58 : vector<16x432xf32> to vector<16x432xbf16>
    %c0_12 = arith.constant 0 : index
    %c0_13 = arith.constant 0 : index
    %60 = vector.load %arg3[%c0_12, %c0_13] : memref<432x64xbf16, #tpu.memory_space<vmem>>, vector<432x64xbf16>
    %cst_14 = arith.constant dense<0.000000e+00> : vector<16x64xf32>
    %61 = tpu.matmul %59, %60, %cst_14 {dimension_numbers = #tpu.dot_dimension_numbers<[1], [0], [0], [1], [0, 0, 1, 1], [], []>} : vector<16x432xbf16>, vector<432x64xbf16>, vector<16x64xf32> -> vector<16x64xf32>
    %c0_15 = arith.constant 0 : index
    %c0_16 = arith.constant 0 : index
    %62 = vector.load %arg4[%c0_15, %c0_16] : memref<1x64xf32, #tpu.memory_space<vmem>>, vector<1x64xf32>
    %63 = vector.broadcast %62 : vector<1x64xf32> to vector<16x64xf32>
    %64 = arith.addf %61, %63 : vector<16x64xf32>
    %65 = arith.negf %64 : vector<16x64xf32>
    %66 = math.exp %65 : vector<16x64xf32>
    %cst_17 = arith.constant 1.000000e+00 : f32
    %67 = vector.broadcast %cst_17 : f32 to vector<16x64xf32>
    %68 = arith.addf %67, %66 : vector<16x64xf32>
    %69 = arith.divf %67, %68 : vector<16x64xf32>
    %70 = arith.mulf %64, %69 : vector<16x64xf32>
    %cst_18 = arith.constant 0.000000e+00 : f32
    %71 = vector.broadcast %cst_18 : f32 to vector<5x64xf32>
    %72 = tpu.concatenate %71, %70, %71 in 0 : vector<5x64xf32>, vector<16x64xf32>, vector<5x64xf32> -> vector<26x64xf32>
    %73 = vector.extract_strided_slice %72 {offsets = [0, 0], sizes = [16, 64], strides = [1, 1]} : vector<26x64xf32> to vector<16x64xf32>
    %cst_19 = arith.constant 0.000000e+00 : f32
    %74 = vector.broadcast %cst_19 : f32 to vector<16x64xf32>
    %75 = vector.shape_cast %18 : vector<16x1xi1> to vector<16x1xi1>
    %76 = vector.broadcast %75 : vector<16x1xi1> to vector<16x64xi1>
    %77 = arith.select %76, %73, %74 : vector<16x64xi1>, vector<16x64xf32>
    %78 = vector.extract_strided_slice %72 {offsets = [1, 0], sizes = [16, 64], strides = [1, 1]} : vector<26x64xf32> to vector<16x64xf32>
    %79 = vector.extract_strided_slice %72 {offsets = [2, 0], sizes = [16, 64], strides = [1, 1]} : vector<26x64xf32> to vector<16x64xf32>
    %cst_20 = arith.constant 0.000000e+00 : f32
    %80 = vector.broadcast %cst_20 : f32 to vector<16x64xf32>
    %81 = vector.shape_cast %20 : vector<16x1xi1> to vector<16x1xi1>
    %82 = vector.broadcast %81 : vector<16x1xi1> to vector<16x64xi1>
    %83 = arith.select %82, %79, %80 : vector<16x64xi1>, vector<16x64xf32>
    %84 = vector.extract_strided_slice %72 {offsets = [4, 0], sizes = [16, 64], strides = [1, 1]} : vector<26x64xf32> to vector<16x64xf32>
    %cst_21 = arith.constant 0.000000e+00 : f32
    %85 = vector.broadcast %cst_21 : f32 to vector<16x64xf32>
    %86 = vector.shape_cast %18 : vector<16x1xi1> to vector<16x1xi1>
    %87 = vector.broadcast %86 : vector<16x1xi1> to vector<16x64xi1>
    %88 = arith.select %87, %84, %85 : vector<16x64xi1>, vector<16x64xf32>
    %89 = vector.extract_strided_slice %72 {offsets = [5, 0], sizes = [16, 64], strides = [1, 1]} : vector<26x64xf32> to vector<16x64xf32>
    %90 = vector.extract_strided_slice %72 {offsets = [6, 0], sizes = [16, 64], strides = [1, 1]} : vector<26x64xf32> to vector<16x64xf32>
    %cst_22 = arith.constant 0.000000e+00 : f32
    %91 = vector.broadcast %cst_22 : f32 to vector<16x64xf32>
    %92 = vector.shape_cast %20 : vector<16x1xi1> to vector<16x1xi1>
    %93 = vector.broadcast %92 : vector<16x1xi1> to vector<16x64xi1>
    %94 = arith.select %93, %90, %91 : vector<16x64xi1>, vector<16x64xf32>
    %95 = vector.extract_strided_slice %72 {offsets = [8, 0], sizes = [16, 64], strides = [1, 1]} : vector<26x64xf32> to vector<16x64xf32>
    %cst_23 = arith.constant 0.000000e+00 : f32
    %96 = vector.broadcast %cst_23 : f32 to vector<16x64xf32>
    %97 = vector.shape_cast %18 : vector<16x1xi1> to vector<16x1xi1>
    %98 = vector.broadcast %97 : vector<16x1xi1> to vector<16x64xi1>
    %99 = arith.select %98, %95, %96 : vector<16x64xi1>, vector<16x64xf32>
    %100 = vector.extract_strided_slice %72 {offsets = [9, 0], sizes = [16, 64], strides = [1, 1]} : vector<26x64xf32> to vector<16x64xf32>
    %101 = vector.extract_strided_slice %72 {offsets = [10, 0], sizes = [16, 64], strides = [1, 1]} : vector<26x64xf32> to vector<16x64xf32>
    %cst_24 = arith.constant 0.000000e+00 : f32
    %102 = vector.broadcast %cst_24 : f32 to vector<16x64xf32>
    %103 = vector.shape_cast %20 : vector<16x1xi1> to vector<16x1xi1>
    %104 = vector.broadcast %103 : vector<16x1xi1> to vector<16x64xi1>
    %105 = arith.select %104, %101, %102 : vector<16x64xi1>, vector<16x64xf32>
    %106 = tpu.concatenate %77, %78, %83, %88, %89, %94, %99, %100, %105 in 1 : vector<16x64xf32>, vector<16x64xf32>, vector<16x64xf32>, vector<16x64xf32>, vector<16x64xf32>, vector<16x64xf32>, vector<16x64xf32>, vector<16x64xf32>, vector<16x64xf32> -> vector<16x576xf32>
    %107 = arith.truncf %106 : vector<16x576xf32> to vector<16x576xbf16>
    %c0_25 = arith.constant 0 : index
    %c0_26 = arith.constant 0 : index
    %108 = vector.load %arg5[%c0_25, %c0_26] : memref<576x64xbf16, #tpu.memory_space<vmem>>, vector<576x64xbf16>
    %cst_27 = arith.constant dense<0.000000e+00> : vector<16x64xf32>
    %109 = tpu.matmul %107, %108, %cst_27 {dimension_numbers = #tpu.dot_dimension_numbers<[1], [0], [0], [1], [0, 0, 1, 1], [], []>} : vector<16x576xbf16>, vector<576x64xbf16>, vector<16x64xf32> -> vector<16x64xf32>
    %c0_28 = arith.constant 0 : index
    %c0_29 = arith.constant 0 : index
    %110 = vector.load %arg6[%c0_28, %c0_29] : memref<1x64xf32, #tpu.memory_space<vmem>>, vector<1x64xf32>
    %111 = vector.broadcast %110 : vector<1x64xf32> to vector<16x64xf32>
    %112 = arith.addf %109, %111 : vector<16x64xf32>
    %113 = arith.negf %112 : vector<16x64xf32>
    %114 = math.exp %113 : vector<16x64xf32>
    %cst_30 = arith.constant 1.000000e+00 : f32
    %115 = vector.broadcast %cst_30 : f32 to vector<16x64xf32>
    %116 = arith.addf %115, %114 : vector<16x64xf32>
    %117 = arith.divf %115, %116 : vector<16x64xf32>
    %118 = arith.mulf %112, %117 : vector<16x64xf32>
    %cst_31 = arith.constant 0.000000e+00 : f32
    %119 = vector.broadcast %cst_31 : f32 to vector<5x64xf32>
    %120 = tpu.concatenate %119, %118, %119 in 0 : vector<5x64xf32>, vector<16x64xf32>, vector<5x64xf32> -> vector<26x64xf32>
    %121 = vector.extract_strided_slice %120 {offsets = [0, 0], sizes = [16, 64], strides = [1, 1]} : vector<26x64xf32> to vector<16x64xf32>
    %cst_32 = arith.constant 0.000000e+00 : f32
    %122 = vector.broadcast %cst_32 : f32 to vector<16x64xf32>
    %123 = vector.shape_cast %18 : vector<16x1xi1> to vector<16x1xi1>
    %124 = vector.broadcast %123 : vector<16x1xi1> to vector<16x64xi1>
    %125 = arith.select %124, %121, %122 : vector<16x64xi1>, vector<16x64xf32>
    %126 = vector.extract_strided_slice %120 {offsets = [1, 0], sizes = [16, 64], strides = [1, 1]} : vector<26x64xf32> to vector<16x64xf32>
    %127 = vector.extract_strided_slice %120 {offsets = [2, 0], sizes = [16, 64], strides = [1, 1]} : vector<26x64xf32> to vector<16x64xf32>
    %cst_33 = arith.constant 0.000000e+00 : f32
    %128 = vector.broadcast %cst_33 : f32 to vector<16x64xf32>
    %129 = vector.shape_cast %20 : vector<16x1xi1> to vector<16x1xi1>
    %130 = vector.broadcast %129 : vector<16x1xi1> to vector<16x64xi1>
    %131 = arith.select %130, %127, %128 : vector<16x64xi1>, vector<16x64xf32>
    %132 = vector.extract_strided_slice %120 {offsets = [4, 0], sizes = [16, 64], strides = [1, 1]} : vector<26x64xf32> to vector<16x64xf32>
    %cst_34 = arith.constant 0.000000e+00 : f32
    %133 = vector.broadcast %cst_34 : f32 to vector<16x64xf32>
    %134 = vector.shape_cast %18 : vector<16x1xi1> to vector<16x1xi1>
    %135 = vector.broadcast %134 : vector<16x1xi1> to vector<16x64xi1>
    %136 = arith.select %135, %132, %133 : vector<16x64xi1>, vector<16x64xf32>
    %137 = vector.extract_strided_slice %120 {offsets = [5, 0], sizes = [16, 64], strides = [1, 1]} : vector<26x64xf32> to vector<16x64xf32>
    %138 = vector.extract_strided_slice %120 {offsets = [6, 0], sizes = [16, 64], strides = [1, 1]} : vector<26x64xf32> to vector<16x64xf32>
    %cst_35 = arith.constant 0.000000e+00 : f32
    %139 = vector.broadcast %cst_35 : f32 to vector<16x64xf32>
    %140 = vector.shape_cast %20 : vector<16x1xi1> to vector<16x1xi1>
    %141 = vector.broadcast %140 : vector<16x1xi1> to vector<16x64xi1>
    %142 = arith.select %141, %138, %139 : vector<16x64xi1>, vector<16x64xf32>
    %143 = vector.extract_strided_slice %120 {offsets = [8, 0], sizes = [16, 64], strides = [1, 1]} : vector<26x64xf32> to vector<16x64xf32>
    %cst_36 = arith.constant 0.000000e+00 : f32
    %144 = vector.broadcast %cst_36 : f32 to vector<16x64xf32>
    %145 = vector.shape_cast %18 : vector<16x1xi1> to vector<16x1xi1>
    %146 = vector.broadcast %145 : vector<16x1xi1> to vector<16x64xi1>
    %147 = arith.select %146, %143, %144 : vector<16x64xi1>, vector<16x64xf32>
    %148 = vector.extract_strided_slice %120 {offsets = [9, 0], sizes = [16, 64], strides = [1, 1]} : vector<26x64xf32> to vector<16x64xf32>
    %149 = vector.extract_strided_slice %120 {offsets = [10, 0], sizes = [16, 64], strides = [1, 1]} : vector<26x64xf32> to vector<16x64xf32>
    %cst_37 = arith.constant 0.000000e+00 : f32
    %150 = vector.broadcast %cst_37 : f32 to vector<16x64xf32>
    %151 = vector.shape_cast %20 : vector<16x1xi1> to vector<16x1xi1>
    %152 = vector.broadcast %151 : vector<16x1xi1> to vector<16x64xi1>
    %153 = arith.select %152, %149, %150 : vector<16x64xi1>, vector<16x64xf32>
    %154 = tpu.concatenate %125, %126, %131, %136, %137, %142, %147, %148, %153 in 1 : vector<16x64xf32>, vector<16x64xf32>, vector<16x64xf32>, vector<16x64xf32>, vector<16x64xf32>, vector<16x64xf32>, vector<16x64xf32>, vector<16x64xf32>, vector<16x64xf32> -> vector<16x576xf32>
    %155 = arith.truncf %154 : vector<16x576xf32> to vector<16x576xbf16>
    %c0_38 = arith.constant 0 : index
    %c0_39 = arith.constant 0 : index
    %156 = vector.load %arg7[%c0_38, %c0_39] : memref<576x64xbf16, #tpu.memory_space<vmem>>, vector<576x64xbf16>
    %cst_40 = arith.constant dense<0.000000e+00> : vector<16x64xf32>
    %157 = tpu.matmul %155, %156, %cst_40 {dimension_numbers = #tpu.dot_dimension_numbers<[1], [0], [0], [1], [0, 0, 1, 1], [], []>} : vector<16x576xbf16>, vector<576x64xbf16>, vector<16x64xf32> -> vector<16x64xf32>
    %c0_41 = arith.constant 0 : index
    %c0_42 = arith.constant 0 : index
    %158 = vector.load %arg8[%c0_41, %c0_42] : memref<1x64xf32, #tpu.memory_space<vmem>>, vector<1x64xf32>
    %159 = vector.broadcast %158 : vector<1x64xf32> to vector<16x64xf32>
    %160 = arith.addf %157, %159 : vector<16x64xf32>
    %161 = arith.negf %160 : vector<16x64xf32>
    %162 = math.exp %161 : vector<16x64xf32>
    %cst_43 = arith.constant 1.000000e+00 : f32
    %163 = vector.broadcast %cst_43 : f32 to vector<16x64xf32>
    %164 = arith.addf %163, %162 : vector<16x64xf32>
    %165 = arith.divf %163, %164 : vector<16x64xf32>
    %166 = arith.mulf %160, %165 : vector<16x64xf32>
    %cst_44 = arith.constant 0.000000e+00 : f32
    %167 = vector.broadcast %cst_44 : f32 to vector<5x64xf32>
    %168 = tpu.concatenate %167, %166, %167 in 0 : vector<5x64xf32>, vector<16x64xf32>, vector<5x64xf32> -> vector<26x64xf32>
    %169 = vector.extract_strided_slice %168 {offsets = [0, 0], sizes = [16, 64], strides = [1, 1]} : vector<26x64xf32> to vector<16x64xf32>
    %cst_45 = arith.constant 0.000000e+00 : f32
    %170 = vector.broadcast %cst_45 : f32 to vector<16x64xf32>
    %171 = vector.shape_cast %18 : vector<16x1xi1> to vector<16x1xi1>
    %172 = vector.broadcast %171 : vector<16x1xi1> to vector<16x64xi1>
    %173 = arith.select %172, %169, %170 : vector<16x64xi1>, vector<16x64xf32>
    %174 = vector.extract_strided_slice %168 {offsets = [1, 0], sizes = [16, 64], strides = [1, 1]} : vector<26x64xf32> to vector<16x64xf32>
    %175 = vector.extract_strided_slice %168 {offsets = [2, 0], sizes = [16, 64], strides = [1, 1]} : vector<26x64xf32> to vector<16x64xf32>
    %cst_46 = arith.constant 0.000000e+00 : f32
    %176 = vector.broadcast %cst_46 : f32 to vector<16x64xf32>
    %177 = vector.shape_cast %20 : vector<16x1xi1> to vector<16x1xi1>
    %178 = vector.broadcast %177 : vector<16x1xi1> to vector<16x64xi1>
    %179 = arith.select %178, %175, %176 : vector<16x64xi1>, vector<16x64xf32>
    %180 = vector.extract_strided_slice %168 {offsets = [4, 0], sizes = [16, 64], strides = [1, 1]} : vector<26x64xf32> to vector<16x64xf32>
    %cst_47 = arith.constant 0.000000e+00 : f32
    %181 = vector.broadcast %cst_47 : f32 to vector<16x64xf32>
    %182 = vector.shape_cast %18 : vector<16x1xi1> to vector<16x1xi1>
    %183 = vector.broadcast %182 : vector<16x1xi1> to vector<16x64xi1>
    %184 = arith.select %183, %180, %181 : vector<16x64xi1>, vector<16x64xf32>
    %185 = vector.extract_strided_slice %168 {offsets = [5, 0], sizes = [16, 64], strides = [1, 1]} : vector<26x64xf32> to vector<16x64xf32>
    %186 = vector.extract_strided_slice %168 {offsets = [6, 0], sizes = [16, 64], strides = [1, 1]} : vector<26x64xf32> to vector<16x64xf32>
    %cst_48 = arith.constant 0.000000e+00 : f32
    %187 = vector.broadcast %cst_48 : f32 to vector<16x64xf32>
    %188 = vector.shape_cast %20 : vector<16x1xi1> to vector<16x1xi1>
    %189 = vector.broadcast %188 : vector<16x1xi1> to vector<16x64xi1>
    %190 = arith.select %189, %186, %187 : vector<16x64xi1>, vector<16x64xf32>
    %191 = vector.extract_strided_slice %168 {offsets = [8, 0], sizes = [16, 64], strides = [1, 1]} : vector<26x64xf32> to vector<16x64xf32>
    %cst_49 = arith.constant 0.000000e+00 : f32
    %192 = vector.broadcast %cst_49 : f32 to vector<16x64xf32>
    %193 = vector.shape_cast %18 : vector<16x1xi1> to vector<16x1xi1>
    %194 = vector.broadcast %193 : vector<16x1xi1> to vector<16x64xi1>
    %195 = arith.select %194, %191, %192 : vector<16x64xi1>, vector<16x64xf32>
    %196 = vector.extract_strided_slice %168 {offsets = [9, 0], sizes = [16, 64], strides = [1, 1]} : vector<26x64xf32> to vector<16x64xf32>
    %197 = vector.extract_strided_slice %168 {offsets = [10, 0], sizes = [16, 64], strides = [1, 1]} : vector<26x64xf32> to vector<16x64xf32>
    %cst_50 = arith.constant 0.000000e+00 : f32
    %198 = vector.broadcast %cst_50 : f32 to vector<16x64xf32>
    %199 = vector.shape_cast %20 : vector<16x1xi1> to vector<16x1xi1>
    %200 = vector.broadcast %199 : vector<16x1xi1> to vector<16x64xi1>
    %201 = arith.select %200, %197, %198 : vector<16x64xi1>, vector<16x64xf32>
    %202 = tpu.concatenate %173, %174, %179, %184, %185, %190, %195, %196, %201 in 1 : vector<16x64xf32>, vector<16x64xf32>, vector<16x64xf32>, vector<16x64xf32>, vector<16x64xf32>, vector<16x64xf32>, vector<16x64xf32>, vector<16x64xf32>, vector<16x64xf32> -> vector<16x576xf32>
    %203 = arith.truncf %202 : vector<16x576xf32> to vector<16x576xbf16>
    %c0_51 = arith.constant 0 : index
    %c0_52 = arith.constant 0 : index
    %204 = vector.load %arg9[%c0_51, %c0_52] : memref<576x8xbf16, #tpu.memory_space<vmem>>, vector<576x8xbf16>
    %cst_53 = arith.constant dense<0.000000e+00> : vector<16x8xf32>
    %205 = tpu.matmul %203, %204, %cst_53 {dimension_numbers = #tpu.dot_dimension_numbers<[1], [0], [0], [1], [0, 0, 1, 1], [], []>} : vector<16x576xbf16>, vector<576x8xbf16>, vector<16x8xf32> -> vector<16x8xf32>
    %c0_54 = arith.constant 0 : index
    %c0_55 = arith.constant 0 : index
    %206 = vector.load %arg10[%c0_54, %c0_55] : memref<1x8xf32, #tpu.memory_space<vmem>>, vector<1x8xf32>
    %207 = vector.broadcast %206 : vector<1x8xf32> to vector<16x8xf32>
    %208 = arith.addf %205, %207 : vector<16x8xf32>
    %209 = vector.extract_strided_slice %208 {offsets = [0, 0], sizes = [16, 4], strides = [1, 1]} : vector<16x8xf32> to vector<16x4xf32>
    %210 = vector.extract_strided_slice %208 {offsets = [0, 4], sizes = [16, 4], strides = [1, 1]} : vector<16x8xf32> to vector<16x4xf32>
    %cst_56 = arith.constant -3.000000e+01 : f32
    %cst_57 = arith.constant 2.000000e+01 : f32
    %211 = vector.broadcast %cst_56 : f32 to vector<16x4xf32>
    %212 = arith.maximumf %211, %210 : vector<16x4xf32>
    %213 = vector.broadcast %cst_57 : f32 to vector<16x4xf32>
    %214 = arith.minimumf %213, %212 : vector<16x4xf32>
    %cst_58 = arith.constant 5.000000e-01 : f32
    %215 = vector.broadcast %cst_58 : f32 to vector<16x4xf32>
    %216 = arith.mulf %215, %214 : vector<16x4xf32>
    %217 = math.exp %216 : vector<16x4xf32>
    %c0_59 = arith.constant 0 : index
    %c0_60 = arith.constant 0 : index
    %c0_61 = arith.constant 0 : index
    %218 = vector.load %arg2[%c0_59, %c0_60, %c0_61] : memref<1x16x4xf32, #tpu.memory_space<vmem>>, vector<1x16x4xf32>
    %219 = vector.shape_cast %218 : vector<1x16x4xf32> to vector<16x4xf32>
    %220 = arith.mulf %217, %219 : vector<16x4xf32>
    %221 = arith.addf %209, %220 : vector<16x4xf32>
    %cst_62 = arith.constant 0.000000e+00 : f32
    %222 = vector.broadcast %cst_62 : f32 to vector<5x4xf32>
    %223 = tpu.concatenate %222, %221, %222 in 0 : vector<5x4xf32>, vector<16x4xf32>, vector<5x4xf32> -> vector<26x4xf32>
    %224 = vector.extract_strided_slice %223 {offsets = [0, 0], sizes = [16, 4], strides = [1, 1]} : vector<26x4xf32> to vector<16x4xf32>
    %cst_63 = arith.constant 0.000000e+00 : f32
    %225 = vector.broadcast %cst_63 : f32 to vector<16x4xf32>
    %226 = vector.shape_cast %18 : vector<16x1xi1> to vector<16x1xi1>
    %227 = vector.broadcast %226 : vector<16x1xi1> to vector<16x4xi1>
    %228 = arith.select %227, %224, %225 : vector<16x4xi1>, vector<16x4xf32>
    %229 = vector.extract_strided_slice %223 {offsets = [1, 0], sizes = [16, 4], strides = [1, 1]} : vector<26x4xf32> to vector<16x4xf32>
    %230 = vector.extract_strided_slice %223 {offsets = [2, 0], sizes = [16, 4], strides = [1, 1]} : vector<26x4xf32> to vector<16x4xf32>
    %cst_64 = arith.constant 0.000000e+00 : f32
    %231 = vector.broadcast %cst_64 : f32 to vector<16x4xf32>
    %232 = vector.shape_cast %20 : vector<16x1xi1> to vector<16x1xi1>
    %233 = vector.broadcast %232 : vector<16x1xi1> to vector<16x4xi1>
    %234 = arith.select %233, %230, %231 : vector<16x4xi1>, vector<16x4xf32>
    %235 = vector.extract_strided_slice %223 {offsets = [4, 0], sizes = [16, 4], strides = [1, 1]} : vector<26x4xf32> to vector<16x4xf32>
    %cst_65 = arith.constant 0.000000e+00 : f32
    %236 = vector.broadcast %cst_65 : f32 to vector<16x4xf32>
    %237 = vector.shape_cast %18 : vector<16x1xi1> to vector<16x1xi1>
    %238 = vector.broadcast %237 : vector<16x1xi1> to vector<16x4xi1>
    %239 = arith.select %238, %235, %236 : vector<16x4xi1>, vector<16x4xf32>
    %240 = vector.extract_strided_slice %223 {offsets = [5, 0], sizes = [16, 4], strides = [1, 1]} : vector<26x4xf32> to vector<16x4xf32>
    %241 = vector.extract_strided_slice %223 {offsets = [6, 0], sizes = [16, 4], strides = [1, 1]} : vector<26x4xf32> to vector<16x4xf32>
    %cst_66 = arith.constant 0.000000e+00 : f32
    %242 = vector.broadcast %cst_66 : f32 to vector<16x4xf32>
    %243 = vector.shape_cast %20 : vector<16x1xi1> to vector<16x1xi1>
    %244 = vector.broadcast %243 : vector<16x1xi1> to vector<16x4xi1>
    %245 = arith.select %244, %241, %242 : vector<16x4xi1>, vector<16x4xf32>
    %246 = vector.extract_strided_slice %223 {offsets = [8, 0], sizes = [16, 4], strides = [1, 1]} : vector<26x4xf32> to vector<16x4xf32>
    %cst_67 = arith.constant 0.000000e+00 : f32
    %247 = vector.broadcast %cst_67 : f32 to vector<16x4xf32>
    %248 = vector.shape_cast %18 : vector<16x1xi1> to vector<16x1xi1>
    %249 = vector.broadcast %248 : vector<16x1xi1> to vector<16x4xi1>
    %250 = arith.select %249, %246, %247 : vector<16x4xi1>, vector<16x4xf32>
    %251 = vector.extract_strided_slice %223 {offsets = [9, 0], sizes = [16, 4], strides = [1, 1]} : vector<26x4xf32> to vector<16x4xf32>
    %252 = vector.extract_strided_slice %223 {offsets = [10, 0], sizes = [16, 4], strides = [1, 1]} : vector<26x4xf32> to vector<16x4xf32>
    %cst_68 = arith.constant 0.000000e+00 : f32
    %253 = vector.broadcast %cst_68 : f32 to vector<16x4xf32>
    %254 = vector.shape_cast %20 : vector<16x1xi1> to vector<16x1xi1>
    %255 = vector.broadcast %254 : vector<16x1xi1> to vector<16x4xi1>
    %256 = arith.select %255, %252, %253 : vector<16x4xi1>, vector<16x4xf32>
    %257 = tpu.concatenate %228, %229, %234, %239, %240, %245, %250, %251, %256 in 1 : vector<16x4xf32>, vector<16x4xf32>, vector<16x4xf32>, vector<16x4xf32>, vector<16x4xf32>, vector<16x4xf32>, vector<16x4xf32>, vector<16x4xf32>, vector<16x4xf32> -> vector<16x36xf32>
    %258 = arith.truncf %257 : vector<16x36xf32> to vector<16x36xbf16>
    %c0_69 = arith.constant 0 : index
    %c0_70 = arith.constant 0 : index
    %259 = vector.load %arg11[%c0_69, %c0_70] : memref<36x64xbf16, #tpu.memory_space<vmem>>, vector<36x64xbf16>
    %cst_71 = arith.constant dense<0.000000e+00> : vector<16x64xf32>
    %260 = tpu.matmul %258, %259, %cst_71 {dimension_numbers = #tpu.dot_dimension_numbers<[1], [0], [0], [1], [0, 0, 1, 1], [], []>} : vector<16x36xbf16>, vector<36x64xbf16>, vector<16x64xf32> -> vector<16x64xf32>
    %c0_72 = arith.constant 0 : index
    %c0_73 = arith.constant 0 : index
    %261 = vector.load %arg12[%c0_72, %c0_73] : memref<1x64xf32, #tpu.memory_space<vmem>>, vector<1x64xf32>
    %262 = vector.broadcast %261 : vector<1x64xf32> to vector<16x64xf32>
    %263 = arith.addf %260, %262 : vector<16x64xf32>
    %264 = arith.negf %263 : vector<16x64xf32>
    %265 = math.exp %264 : vector<16x64xf32>
    %cst_74 = arith.constant 1.000000e+00 : f32
    %266 = vector.broadcast %cst_74 : f32 to vector<16x64xf32>
    %267 = arith.addf %266, %265 : vector<16x64xf32>
    %268 = arith.divf %266, %267 : vector<16x64xf32>
    %269 = arith.mulf %263, %268 : vector<16x64xf32>
    %cst_75 = arith.constant 0.000000e+00 : f32
    %270 = vector.broadcast %cst_75 : f32 to vector<5x64xf32>
    %271 = tpu.concatenate %270, %269, %270 in 0 : vector<5x64xf32>, vector<16x64xf32>, vector<5x64xf32> -> vector<26x64xf32>
    %272 = vector.extract_strided_slice %271 {offsets = [0, 0], sizes = [16, 64], strides = [1, 1]} : vector<26x64xf32> to vector<16x64xf32>
    %cst_76 = arith.constant 0.000000e+00 : f32
    %273 = vector.broadcast %cst_76 : f32 to vector<16x64xf32>
    %274 = vector.shape_cast %18 : vector<16x1xi1> to vector<16x1xi1>
    %275 = vector.broadcast %274 : vector<16x1xi1> to vector<16x64xi1>
    %276 = arith.select %275, %272, %273 : vector<16x64xi1>, vector<16x64xf32>
    %277 = vector.extract_strided_slice %271 {offsets = [1, 0], sizes = [16, 64], strides = [1, 1]} : vector<26x64xf32> to vector<16x64xf32>
    %278 = vector.extract_strided_slice %271 {offsets = [2, 0], sizes = [16, 64], strides = [1, 1]} : vector<26x64xf32> to vector<16x64xf32>
    %cst_77 = arith.constant 0.000000e+00 : f32
    %279 = vector.broadcast %cst_77 : f32 to vector<16x64xf32>
    %280 = vector.shape_cast %20 : vector<16x1xi1> to vector<16x1xi1>
    %281 = vector.broadcast %280 : vector<16x1xi1> to vector<16x64xi1>
    %282 = arith.select %281, %278, %279 : vector<16x64xi1>, vector<16x64xf32>
    %283 = vector.extract_strided_slice %271 {offsets = [4, 0], sizes = [16, 64], strides = [1, 1]} : vector<26x64xf32> to vector<16x64xf32>
    %cst_78 = arith.constant 0.000000e+00 : f32
    %284 = vector.broadcast %cst_78 : f32 to vector<16x64xf32>
    %285 = vector.shape_cast %18 : vector<16x1xi1> to vector<16x1xi1>
    %286 = vector.broadcast %285 : vector<16x1xi1> to vector<16x64xi1>
    %287 = arith.select %286, %283, %284 : vector<16x64xi1>, vector<16x64xf32>
    %288 = vector.extract_strided_slice %271 {offsets = [5, 0], sizes = [16, 64], strides = [1, 1]} : vector<26x64xf32> to vector<16x64xf32>
    %289 = vector.extract_strided_slice %271 {offsets = [6, 0], sizes = [16, 64], strides = [1, 1]} : vector<26x64xf32> to vector<16x64xf32>
    %cst_79 = arith.constant 0.000000e+00 : f32
    %290 = vector.broadcast %cst_79 : f32 to vector<16x64xf32>
    %291 = vector.shape_cast %20 : vector<16x1xi1> to vector<16x1xi1>
    %292 = vector.broadcast %291 : vector<16x1xi1> to vector<16x64xi1>
    %293 = arith.select %292, %289, %290 : vector<16x64xi1>, vector<16x64xf32>
    %294 = vector.extract_strided_slice %271 {offsets = [8, 0], sizes = [16, 64], strides = [1, 1]} : vector<26x64xf32> to vector<16x64xf32>
    %cst_80 = arith.constant 0.000000e+00 : f32
    %295 = vector.broadcast %cst_80 : f32 to vector<16x64xf32>
    %296 = vector.shape_cast %18 : vector<16x1xi1> to vector<16x1xi1>
    %297 = vector.broadcast %296 : vector<16x1xi1> to vector<16x64xi1>
    %298 = arith.select %297, %294, %295 : vector<16x64xi1>, vector<16x64xf32>
    %299 = vector.extract_strided_slice %271 {offsets = [9, 0], sizes = [16, 64], strides = [1, 1]} : vector<26x64xf32> to vector<16x64xf32>
    %300 = vector.extract_strided_slice %271 {offsets = [10, 0], sizes = [16, 64], strides = [1, 1]} : vector<26x64xf32> to vector<16x64xf32>
    %cst_81 = arith.constant 0.000000e+00 : f32
    %301 = vector.broadcast %cst_81 : f32 to vector<16x64xf32>
    %302 = vector.shape_cast %20 : vector<16x1xi1> to vector<16x1xi1>
    %303 = vector.broadcast %302 : vector<16x1xi1> to vector<16x64xi1>
    %304 = arith.select %303, %300, %301 : vector<16x64xi1>, vector<16x64xf32>
    %305 = tpu.concatenate %276, %277, %282, %287, %288, %293, %298, %299, %304 in 1 : vector<16x64xf32>, vector<16x64xf32>, vector<16x64xf32>, vector<16x64xf32>, vector<16x64xf32>, vector<16x64xf32>, vector<16x64xf32>, vector<16x64xf32>, vector<16x64xf32> -> vector<16x576xf32>
    %306 = arith.truncf %305 : vector<16x576xf32> to vector<16x576xbf16>
    %c0_82 = arith.constant 0 : index
    %c0_83 = arith.constant 0 : index
    %307 = vector.load %arg13[%c0_82, %c0_83] : memref<576x64xbf16, #tpu.memory_space<vmem>>, vector<576x64xbf16>
    %cst_84 = arith.constant dense<0.000000e+00> : vector<16x64xf32>
    %308 = tpu.matmul %306, %307, %cst_84 {dimension_numbers = #tpu.dot_dimension_numbers<[1], [0], [0], [1], [0, 0, 1, 1], [], []>} : vector<16x576xbf16>, vector<576x64xbf16>, vector<16x64xf32> -> vector<16x64xf32>
    %c0_85 = arith.constant 0 : index
    %c0_86 = arith.constant 0 : index
    %309 = vector.load %arg14[%c0_85, %c0_86] : memref<1x64xf32, #tpu.memory_space<vmem>>, vector<1x64xf32>
    %310 = vector.broadcast %309 : vector<1x64xf32> to vector<16x64xf32>
    %311 = arith.addf %308, %310 : vector<16x64xf32>
    %312 = arith.negf %311 : vector<16x64xf32>
    %313 = math.exp %312 : vector<16x64xf32>
    %cst_87 = arith.constant 1.000000e+00 : f32
    %314 = vector.broadcast %cst_87 : f32 to vector<16x64xf32>
    %315 = arith.addf %314, %313 : vector<16x64xf32>
    %316 = arith.divf %314, %315 : vector<16x64xf32>
    %317 = arith.mulf %311, %316 : vector<16x64xf32>
    %cst_88 = arith.constant 0.000000e+00 : f32
    %318 = vector.broadcast %cst_88 : f32 to vector<5x64xf32>
    %319 = tpu.concatenate %318, %317, %318 in 0 : vector<5x64xf32>, vector<16x64xf32>, vector<5x64xf32> -> vector<26x64xf32>
    %320 = vector.extract_strided_slice %319 {offsets = [0, 0], sizes = [16, 64], strides = [1, 1]} : vector<26x64xf32> to vector<16x64xf32>
    %cst_89 = arith.constant 0.000000e+00 : f32
    %321 = vector.broadcast %cst_89 : f32 to vector<16x64xf32>
    %322 = vector.shape_cast %18 : vector<16x1xi1> to vector<16x1xi1>
    %323 = vector.broadcast %322 : vector<16x1xi1> to vector<16x64xi1>
    %324 = arith.select %323, %320, %321 : vector<16x64xi1>, vector<16x64xf32>
    %325 = vector.extract_strided_slice %319 {offsets = [1, 0], sizes = [16, 64], strides = [1, 1]} : vector<26x64xf32> to vector<16x64xf32>
    %326 = vector.extract_strided_slice %319 {offsets = [2, 0], sizes = [16, 64], strides = [1, 1]} : vector<26x64xf32> to vector<16x64xf32>
    %cst_90 = arith.constant 0.000000e+00 : f32
    %327 = vector.broadcast %cst_90 : f32 to vector<16x64xf32>
    %328 = vector.shape_cast %20 : vector<16x1xi1> to vector<16x1xi1>
    %329 = vector.broadcast %328 : vector<16x1xi1> to vector<16x64xi1>
    %330 = arith.select %329, %326, %327 : vector<16x64xi1>, vector<16x64xf32>
    %331 = vector.extract_strided_slice %319 {offsets = [4, 0], sizes = [16, 64], strides = [1, 1]} : vector<26x64xf32> to vector<16x64xf32>
    %cst_91 = arith.constant 0.000000e+00 : f32
    %332 = vector.broadcast %cst_91 : f32 to vector<16x64xf32>
    %333 = vector.shape_cast %18 : vector<16x1xi1> to vector<16x1xi1>
    %334 = vector.broadcast %333 : vector<16x1xi1> to vector<16x64xi1>
    %335 = arith.select %334, %331, %332 : vector<16x64xi1>, vector<16x64xf32>
    %336 = vector.extract_strided_slice %319 {offsets = [5, 0], sizes = [16, 64], strides = [1, 1]} : vector<26x64xf32> to vector<16x64xf32>
    %337 = vector.extract_strided_slice %319 {offsets = [6, 0], sizes = [16, 64], strides = [1, 1]} : vector<26x64xf32> to vector<16x64xf32>
    %cst_92 = arith.constant 0.000000e+00 : f32
    %338 = vector.broadcast %cst_92 : f32 to vector<16x64xf32>
    %339 = vector.shape_cast %20 : vector<16x1xi1> to vector<16x1xi1>
    %340 = vector.broadcast %339 : vector<16x1xi1> to vector<16x64xi1>
    %341 = arith.select %340, %337, %338 : vector<16x64xi1>, vector<16x64xf32>
    %342 = vector.extract_strided_slice %319 {offsets = [8, 0], sizes = [16, 64], strides = [1, 1]} : vector<26x64xf32> to vector<16x64xf32>
    %cst_93 = arith.constant 0.000000e+00 : f32
    %343 = vector.broadcast %cst_93 : f32 to vector<16x64xf32>
    %344 = vector.shape_cast %18 : vector<16x1xi1> to vector<16x1xi1>
    %345 = vector.broadcast %344 : vector<16x1xi1> to vector<16x64xi1>
    %346 = arith.select %345, %342, %343 : vector<16x64xi1>, vector<16x64xf32>
    %347 = vector.extract_strided_slice %319 {offsets = [9, 0], sizes = [16, 64], strides = [1, 1]} : vector<26x64xf32> to vector<16x64xf32>
    %348 = vector.extract_strided_slice %319 {offsets = [10, 0], sizes = [16, 64], strides = [1, 1]} : vector<26x64xf32> to vector<16x64xf32>
    %cst_94 = arith.constant 0.000000e+00 : f32
    %349 = vector.broadcast %cst_94 : f32 to vector<16x64xf32>
    %350 = vector.shape_cast %20 : vector<16x1xi1> to vector<16x1xi1>
    %351 = vector.broadcast %350 : vector<16x1xi1> to vector<16x64xi1>
    %352 = arith.select %351, %348, %349 : vector<16x64xi1>, vector<16x64xf32>
    %353 = tpu.concatenate %324, %325, %330, %335, %336, %341, %346, %347, %352 in 1 : vector<16x64xf32>, vector<16x64xf32>, vector<16x64xf32>, vector<16x64xf32>, vector<16x64xf32>, vector<16x64xf32>, vector<16x64xf32>, vector<16x64xf32>, vector<16x64xf32> -> vector<16x576xf32>
    %354 = arith.truncf %353 : vector<16x576xf32> to vector<16x576xbf16>
    %c0_95 = arith.constant 0 : index
    %c0_96 = arith.constant 0 : index
    %355 = vector.load %arg15[%c0_95, %c0_96] : memref<576x64xbf16, #tpu.memory_space<vmem>>, vector<576x64xbf16>
    %cst_97 = arith.constant dense<0.000000e+00> : vector<16x64xf32>
    %356 = tpu.matmul %354, %355, %cst_97 {dimension_numbers = #tpu.dot_dimension_numbers<[1], [0], [0], [1], [0, 0, 1, 1], [], []>} : vector<16x576xbf16>, vector<576x64xbf16>, vector<16x64xf32> -> vector<16x64xf32>
    %c0_98 = arith.constant 0 : index
    %c0_99 = arith.constant 0 : index
    %357 = vector.load %arg16[%c0_98, %c0_99] : memref<1x64xf32, #tpu.memory_space<vmem>>, vector<1x64xf32>
    %358 = vector.broadcast %357 : vector<1x64xf32> to vector<16x64xf32>
    %359 = arith.addf %356, %358 : vector<16x64xf32>
    %360 = arith.negf %359 : vector<16x64xf32>
    %361 = math.exp %360 : vector<16x64xf32>
    %cst_100 = arith.constant 1.000000e+00 : f32
    %362 = vector.broadcast %cst_100 : f32 to vector<16x64xf32>
    %363 = arith.addf %362, %361 : vector<16x64xf32>
    %364 = arith.divf %362, %363 : vector<16x64xf32>
    %365 = arith.mulf %359, %364 : vector<16x64xf32>
    %cst_101 = arith.constant 0.000000e+00 : f32
    %366 = vector.broadcast %cst_101 : f32 to vector<5x64xf32>
    %367 = tpu.concatenate %366, %365, %366 in 0 : vector<5x64xf32>, vector<16x64xf32>, vector<5x64xf32> -> vector<26x64xf32>
    %368 = vector.extract_strided_slice %367 {offsets = [0, 0], sizes = [16, 64], strides = [1, 1]} : vector<26x64xf32> to vector<16x64xf32>
    %cst_102 = arith.constant 0.000000e+00 : f32
    %369 = vector.broadcast %cst_102 : f32 to vector<16x64xf32>
    %370 = vector.shape_cast %18 : vector<16x1xi1> to vector<16x1xi1>
    %371 = vector.broadcast %370 : vector<16x1xi1> to vector<16x64xi1>
    %372 = arith.select %371, %368, %369 : vector<16x64xi1>, vector<16x64xf32>
    %373 = vector.extract_strided_slice %367 {offsets = [1, 0], sizes = [16, 64], strides = [1, 1]} : vector<26x64xf32> to vector<16x64xf32>
    %374 = vector.extract_strided_slice %367 {offsets = [2, 0], sizes = [16, 64], strides = [1, 1]} : vector<26x64xf32> to vector<16x64xf32>
    %cst_103 = arith.constant 0.000000e+00 : f32
    %375 = vector.broadcast %cst_103 : f32 to vector<16x64xf32>
    %376 = vector.shape_cast %20 : vector<16x1xi1> to vector<16x1xi1>
    %377 = vector.broadcast %376 : vector<16x1xi1> to vector<16x64xi1>
    %378 = arith.select %377, %374, %375 : vector<16x64xi1>, vector<16x64xf32>
    %379 = vector.extract_strided_slice %367 {offsets = [4, 0], sizes = [16, 64], strides = [1, 1]} : vector<26x64xf32> to vector<16x64xf32>
    %cst_104 = arith.constant 0.000000e+00 : f32
    %380 = vector.broadcast %cst_104 : f32 to vector<16x64xf32>
    %381 = vector.shape_cast %18 : vector<16x1xi1> to vector<16x1xi1>
    %382 = vector.broadcast %381 : vector<16x1xi1> to vector<16x64xi1>
    %383 = arith.select %382, %379, %380 : vector<16x64xi1>, vector<16x64xf32>
    %384 = vector.extract_strided_slice %367 {offsets = [5, 0], sizes = [16, 64], strides = [1, 1]} : vector<26x64xf32> to vector<16x64xf32>
    %385 = vector.extract_strided_slice %367 {offsets = [6, 0], sizes = [16, 64], strides = [1, 1]} : vector<26x64xf32> to vector<16x64xf32>
    %cst_105 = arith.constant 0.000000e+00 : f32
    %386 = vector.broadcast %cst_105 : f32 to vector<16x64xf32>
    %387 = vector.shape_cast %20 : vector<16x1xi1> to vector<16x1xi1>
    %388 = vector.broadcast %387 : vector<16x1xi1> to vector<16x64xi1>
    %389 = arith.select %388, %385, %386 : vector<16x64xi1>, vector<16x64xf32>
    %390 = vector.extract_strided_slice %367 {offsets = [8, 0], sizes = [16, 64], strides = [1, 1]} : vector<26x64xf32> to vector<16x64xf32>
    %cst_106 = arith.constant 0.000000e+00 : f32
    %391 = vector.broadcast %cst_106 : f32 to vector<16x64xf32>
    %392 = vector.shape_cast %18 : vector<16x1xi1> to vector<16x1xi1>
    %393 = vector.broadcast %392 : vector<16x1xi1> to vector<16x64xi1>
    %394 = arith.select %393, %390, %391 : vector<16x64xi1>, vector<16x64xf32>
    %395 = vector.extract_strided_slice %367 {offsets = [9, 0], sizes = [16, 64], strides = [1, 1]} : vector<26x64xf32> to vector<16x64xf32>
    %396 = vector.extract_strided_slice %367 {offsets = [10, 0], sizes = [16, 64], strides = [1, 1]} : vector<26x64xf32> to vector<16x64xf32>
    %cst_107 = arith.constant 0.000000e+00 : f32
    %397 = vector.broadcast %cst_107 : f32 to vector<16x64xf32>
    %398 = vector.shape_cast %20 : vector<16x1xi1> to vector<16x1xi1>
    %399 = vector.broadcast %398 : vector<16x1xi1> to vector<16x64xi1>
    %400 = arith.select %399, %396, %397 : vector<16x64xi1>, vector<16x64xf32>
    %401 = tpu.concatenate %372, %373, %378, %383, %384, %389, %394, %395, %400 in 1 : vector<16x64xf32>, vector<16x64xf32>, vector<16x64xf32>, vector<16x64xf32>, vector<16x64xf32>, vector<16x64xf32>, vector<16x64xf32>, vector<16x64xf32>, vector<16x64xf32> -> vector<16x576xf32>
    %402 = arith.truncf %401 : vector<16x576xf32> to vector<16x576xbf16>
    %c0_108 = arith.constant 0 : index
    %c0_109 = arith.constant 0 : index
    %403 = vector.load %arg17[%c0_108, %c0_109] : memref<576x48xbf16, #tpu.memory_space<vmem>>, vector<576x48xbf16>
    %cst_110 = arith.constant dense<0.000000e+00> : vector<16x48xf32>
    %404 = tpu.matmul %402, %403, %cst_110 {dimension_numbers = #tpu.dot_dimension_numbers<[1], [0], [0], [1], [0, 0, 1, 1], [], []>} : vector<16x576xbf16>, vector<576x48xbf16>, vector<16x48xf32> -> vector<16x48xf32>
    %c0_111 = arith.constant 0 : index
    %c0_112 = arith.constant 0 : index
    %405 = vector.load %arg18[%c0_111, %c0_112] : memref<1x48xf32, #tpu.memory_space<vmem>>, vector<1x48xf32>
    %406 = vector.broadcast %405 : vector<1x48xf32> to vector<16x48xf32>
    %407 = arith.addf %404, %406 : vector<16x48xf32>
    %c0_113 = arith.constant 0 : index
    %c0_114 = arith.constant 0 : index
    %c0_115 = arith.constant 0 : index
    %408 = vector.load %arg19[%c0_113, %c0_114, %c0_115] : memref<1x16x48xf32, #tpu.memory_space<vmem>>, vector<1x16x48xf32>
    %409 = vector.shape_cast %408 : vector<1x16x48xf32> to vector<16x48xf32>
    %410 = vector.shape_cast %407 : vector<16x48xf32> to vector<1x16x48xf32>
    tpu.vector_store %arg19[%c0_113, %c0_114, %c0_115], %410 {strides = array<i32>} : memref<1x16x48xf32, #tpu.memory_space<vmem>>, vector<1x16x48xf32>,
    return
  }
  func.func @transform_0(%arg0: i32) -> (i32, i32, i32) {
    %c0_i32 = arith.constant 0 : i32
    %c0_i32_0 = arith.constant 0 : i32
    %c0_i32_1 = arith.constant 0 : i32
    return %arg0, %c0_i32, %c0_i32_0 : i32, i32, i32
  }
  func.func @transform_1(%arg0: i32) -> (i32, i32, i32) {
    %c0_i32 = arith.constant 0 : i32
    %c0_i32_0 = arith.constant 0 : i32
    %c0_i32_1 = arith.constant 0 : i32
    return %arg0, %c0_i32, %c0_i32_0 : i32, i32, i32
  }
  func.func @transform_2(%arg0: i32) -> (i32, i32) {
    %c0_i32 = arith.constant 0 : i32
    %c0_i32_0 = arith.constant 0 : i32
    %c0_i32_1 = arith.constant 0 : i32
    return %c0_i32, %c0_i32_0 : i32, i32
  }
  func.func @transform_3(%arg0: i32) -> (i32, i32) {
    %c0_i32 = arith.constant 0 : i32
    %c0_i32_0 = arith.constant 0 : i32
    %c0_i32_1 = arith.constant 0 : i32
    return %c0_i32, %c0_i32_0 : i32, i32
  }
  func.func @transform_4(%arg0: i32) -> (i32, i32) {
    %c0_i32 = arith.constant 0 : i32
    %c0_i32_0 = arith.constant 0 : i32
    %c0_i32_1 = arith.constant 0 : i32
    return %c0_i32, %c0_i32_0 : i32, i32
  }
  func.func @transform_5(%arg0: i32) -> (i32, i32) {
    %c0_i32 = arith.constant 0 : i32
    %c0_i32_0 = arith.constant 0 : i32
    %c0_i32_1 = arith.constant 0 : i32
    return %c0_i32, %c0_i32_0 : i32, i32
  }
  func.func @transform_6(%arg0: i32) -> (i32, i32) {
    %c0_i32 = arith.constant 0 : i32
    %c0_i32_0 = arith.constant 0 : i32
    %c0_i32_1 = arith.constant 0 : i32
    return %c0_i32, %c0_i32_0 : i32, i32
  }
  func.func @transform_7(%arg0: i32) -> (i32, i32) {
    %c0_i32 = arith.constant 0 : i32
    %c0_i32_0 = arith.constant 0 : i32
    %c0_i32_1 = arith.constant 0 : i32
    return %c0_i32, %c0_i32_0 : i32, i32
  }
  func.func @transform_8(%arg0: i32) -> (i32, i32) {
    %c0_i32 = arith.constant 0 : i32
    %c0_i32_0 = arith.constant 0 : i32
    %c0_i32_1 = arith.constant 0 : i32
    return %c0_i32, %c0_i32_0 : i32, i32
  }
  func.func @transform_9(%arg0: i32) -> (i32, i32) {
    %c0_i32 = arith.constant 0 : i32
    %c0_i32_0 = arith.constant 0 : i32
    %c0_i32_1 = arith.constant 0 : i32
    return %c0_i32, %c0_i32_0 : i32, i32
  }
  func.func @transform_10(%arg0: i32) -> (i32, i32) {
    %c0_i32 = arith.constant 0 : i32
    %c0_i32_0 = arith.constant 0 : i32
    %c0_i32_1 = arith.constant 0 : i32
    return %c0_i32, %c0_i32_0 : i32, i32
  }
  func.func @transform_11(%arg0: i32) -> (i32, i32) {
    %c0_i32 = arith.constant 0 : i32
    %c0_i32_0 = arith.constant 0 : i32
    %c0_i32_1 = arith.constant 0 : i32
    return %c0_i32, %c0_i32_0 : i32, i32
  }
  func.func @transform_12(%arg0: i32) -> (i32, i32) {
    %c0_i32 = arith.constant 0 : i32
    %c0_i32_0 = arith.constant 0 : i32
    %c0_i32_1 = arith.constant 0 : i32
    return %c0_i32, %c0_i32_0 : i32, i32
  }
  func.func @transform_13(%arg0: i32) -> (i32, i32) {
    %c0_i32 = arith.constant 0 : i32
    %c0_i32_0 = arith.constant 0 : i32
    %c0_i32_1 = arith.constant 0 : i32
    return %c0_i32, %c0_i32_0 : i32, i32
  }
  func.func @transform_14(%arg0: i32) -> (i32, i32) {
    %c0_i32 = arith.constant 0 : i32
    %c0_i32_0 = arith.constant 0 : i32
    %c0_i32_1 = arith.constant 0 : i32
    return %c0_i32, %c0_i32_0 : i32, i32
  }
  func.func @transform_15(%arg0: i32) -> (i32, i32) {
    %c0_i32 = arith.constant 0 : i32
    %c0_i32_0 = arith.constant 0 : i32
    %c0_i32_1 = arith.constant 0 : i32
    return %c0_i32, %c0_i32_0 : i32, i32
  }
  func.func @transform_16(%arg0: i32) -> (i32, i32) {
    %c0_i32 = arith.constant 0 : i32
    %c0_i32_0 = arith.constant 0 : i32
    %c0_i32_1 = arith.constant 0 : i32
    return %c0_i32, %c0_i32_0 : i32, i32
  }
  func.func @transform_17(%arg0: i32) -> (i32, i32) {
    %c0_i32 = arith.constant 0 : i32
    %c0_i32_0 = arith.constant 0 : i32
    %c0_i32_1 = arith.constant 0 : i32
    return %c0_i32, %c0_i32_0 : i32, i32
  }
  func.func @transform_18(%arg0: i32) -> (i32, i32, i32) {
    %c0_i32 = arith.constant 0 : i32
    %c0_i32_0 = arith.constant 0 : i32
    %c0_i32_1 = arith.constant 0 : i32
    return %arg0, %c0_i32, %c0_i32_0 : i32, i32, i32
  }
}

</mosaic_0001>

<llo_original>
// kernel: diffusers_compression_forward.1
$region0: #{diffusers_compression_forward.1}
  #allocation0 [shape = 'u32[]', space=smem, size = 0x4, offset = 0x4, fixed_abs, tag = 'smem constant byte address 0x4 - core index']
  #allocation1 [shape = 'u32[144,128]{1,0:T(1,128)}', space=vmem, size = 0x12000, scoped, tag = 'internal scratch']
  %s0 = inlined_call_operand.vmem [shape: f32[2,16,48], index: 0, kind: input, shape index: {}]
  %s1 = inlined_call_operand.vmem [shape: f32[2,16,4], index: 1, kind: input, shape index: {}]
  %s2 = inlined_call_operand.vmem [shape: bf16[432,64], index: 2, kind: input, shape index: {}]
  %s3 = inlined_call_operand.vmem [shape: f32[1,64], index: 3, kind: input, shape index: {}]
  %s4 = inlined_call_operand.vmem [shape: bf16[576,64], index: 4, kind: input, shape index: {}]
  %s5 = inlined_call_operand.vmem [shape: f32[1,64], index: 5, kind: input, shape index: {}]
  %s6 = inlined_call_operand.vmem [shape: bf16[576,64], index: 6, kind: input, shape index: {}]
  %s7 = inlined_call_operand.vmem [shape: f32[1,64], index: 7, kind: input, shape index: {}]
  %s8 = inlined_call_operand.vmem [shape: bf16[576,8], index: 8, kind: input, shape index: {}]
  %s9 = inlined_call_operand.vmem [shape: f32[1,8], index: 9, kind: input, shape index: {}]
  %s10 = inlined_call_operand.vmem [shape: bf16[36,64], index: 10, kind: input, shape index: {}]
  %s11 = inlined_call_operand.vmem [shape: f32[1,64], index: 11, kind: input, shape index: {}]
  %s12 = inlined_call_operand.vmem [shape: bf16[576,64], index: 12, kind: input, shape index: {}]
  %s13 = inlined_call_operand.vmem [shape: f32[1,64], index: 13, kind: input, shape index: {}]
  %s14 = inlined_call_operand.vmem [shape: bf16[576,64], index: 14, kind: input, shape index: {}]
  %s15 = inlined_call_operand.vmem [shape: f32[1,64], index: 15, kind: input, shape index: {}]
  %s16 = inlined_call_operand.vmem [shape: bf16[576,48], index: 16, kind: input, shape index: {}]
  %s17 = inlined_call_operand.vmem [shape: f32[1,48], index: 17, kind: input, shape index: {}]
  %s18 = inlined_call_operand.vmem [shape: f32[2,16,48], index: 18, kind: output, shape index: {}]
  %s19 = sld [smem:[#allocation0]]
  $region105: #{diffusers_compression_forward.1} parent=0
    _
  %s21 = ssub.s32 1, %s19
  %s22 = scalar_select 0, %s21, %s19
  loop: start=0, step=1, limit=4
  $region2: #{diffusers_compression_forward.1} parent=0 // loop_pre_header
    _
  $region3: #{diffusers_compression_forward.1} parent=0 // loop_header
    %s24 = sphi 0, %s28
    %p25 = scmp.ge.s32.totalorder %s24, 4
    %s34 = sphi 0, %s36
    %s37 = sphi 0, %s34
    %s38 = sphi 0, %s37
    %s54 = sphi 0, %s38
    %s60 = sphi 0, %s62
    %s63 = sphi 0, %s60
    %s64 = sphi 0, %s63
    %s80 = sphi 0, %s64
    %s84 = sphi 0, %s84
    %s86 = sphi 0, %s84
    %s87 = sphi 0, %s86
    %s101 = sphi 0, %s87
    %s105 = sphi 0, %s105
    %s107 = sphi 0, %s105
    %s108 = sphi 0, %s107
    %s122 = sphi 0, %s108
    %s126 = sphi 0, %s126
    %s128 = sphi 0, %s126
    %s129 = sphi 0, %s128
    %s143 = sphi 0, %s129
    %s147 = sphi 0, %s147
    %s149 = sphi 0, %s147
    %s150 = sphi 0, %s149
    %s164 = sphi 0, %s150
    %s168 = sphi 0, %s168
    %s170 = sphi 0, %s168
    %s171 = sphi 0, %s170
    %s185 = sphi 0, %s171
    %s189 = sphi 0, %s189
    %s191 = sphi 0, %s189
    %s192 = sphi 0, %s191
    %s206 = sphi 0, %s192
    %s210 = sphi 0, %s210
    %s212 = sphi 0, %s210
    %s213 = sphi 0, %s212
    %s227 = sphi 0, %s213
    %s231 = sphi 0, %s231
    %s233 = sphi 0, %s231
    %s234 = sphi 0, %s233
    %s248 = sphi 0, %s234
    %s252 = sphi 0, %s252
    %s254 = sphi 0, %s252
    %s255 = sphi 0, %s254
    %s269 = sphi 0, %s255
    %s273 = sphi 0, %s273
    %s275 = sphi 0, %s273
    %s276 = sphi 0, %s275
    %s290 = sphi 0, %s276
    %s294 = sphi 0, %s294
    %s296 = sphi 0, %s294
    %s297 = sphi 0, %s296
    %s311 = sphi 0, %s297
    %s315 = sphi 0, %s315
    %s317 = sphi 0, %s315
    %s318 = sphi 0, %s317
    %s332 = sphi 0, %s318
    %s336 = sphi 0, %s336
    %s338 = sphi 0, %s336
    %s339 = sphi 0, %s338
    %s353 = sphi 0, %s339
    %s357 = sphi 0, %s357
    %s359 = sphi 0, %s357
    %s360 = sphi 0, %s359
    %s374 = sphi 0, %s360
    %s378 = sphi 0, %s378
    %s380 = sphi 0, %s378
    %s381 = sphi 0, %s380
    %s395 = sphi 0, %s381
    %s399 = sphi 0, %s399
    %s401 = sphi 0, %s399
    %s402 = sphi 0, %s401
    %s416 = sphi 0, %s402
    %s422 = sphi 0, %s424
    %s425 = sphi 0, %s422
    %s426 = sphi 0, %s425
    %s442 = sphi 0, %s426
  $region4: #{diffusers_compression_forward.1} parent=0 // loop_header_branch
    %27 = sbr.rel (%p25) target = $region8
  $region5: #{diffusers_compression_forward.1} parent=0 // loop_body
    %s29 = ssub.s32 %s24, 1
    %s30 = ssub.s32 %s24, 2
    %s31 = sadd.s32 %s24, 1
    %s32 = ssub.s32 %s24, %s31
    %p33 = scmp.eq.s32.totalorder %s32, 0
    %s35 = sadd.s32 %s34, 1
    %s36 = scalar_select %p33, %s34, %s35
    %p39 = pneg %p33
    %p40 = scmp.eq.s32.totalorder %s24, 1
    %p41 = por %p39, %p40
    %p42 = scmp.ne.s32.totalorder %s34, %s37
    %p43 = scmp.eq.s32.totalorder %s24, 0
    %p44 = por %p42, %p43
    %p45 = scmp.ne.s32.totalorder %s34, %s37
    %p46 = scmp.eq.s32.totalorder %s29, 1
    %p47 = por %p45, %p46
    %p48 = scmp.ne.s32.totalorder %s37, %s38
    %p49 = scmp.eq.s32.totalorder %s29, 0
    %p50 = por %p48, %p49
    %p51 = scmp.ne.s32.totalorder %s37, %s38
    %p52 = scmp.eq.s32.totalorder %s30, 1
    %p53 = por %p51, %p52
    %p55 = scmp.ne.s32.totalorder %s38, %s54
    %p56 = scmp.eq.s32.totalorder %s30, 0
    %p57 = por %p55, %p56
    %s58 = ssub.s32 %s24, %s31
    %p59 = scmp.eq.s32.totalorder %s58, 0
    %s61 = sadd.s32 %s60, 1
    %s62 = scalar_select %p59, %s60, %s61
    %p65 = pneg %p59
    %p66 = scmp.eq.s32.totalorder %s24, 1
    %p67 = por %p65, %p66
    %p68 = scmp.ne.s32.totalorder %s60, %s63
    %p69 = scmp.eq.s32.totalorder %s24, 0
    %p70 = por %p68, %p69
    %p71 = scmp.ne.s32.totalorder %s60, %s63
    %p72 = scmp.eq.s32.totalorder %s29, 1
    %p73 = por %p71, %p72
    %p74 = scmp.ne.s32.totalorder %s63, %s64
    %p75 = scmp.eq.s32.totalorder %s29, 0
    %p76 = por %p74, %p75
    %p77 = scmp.ne.s32.totalorder %s63, %s64
    %p78 = scmp.eq.s32.totalorder %s30, 1
    %p79 = por %p77, %p78
    %p81 = scmp.ne.s32.totalorder %s64, %s80
    %p82 = scmp.eq.s32.totalorder %s30, 0
    %p83 = por %p81, %p82
    %s85 = sadd.s32 %s84, 1
    %p88 = scmp.eq.s32.totalorder %s24, 1
    %p89 = scmp.ne.s32.totalorder %s84, %s86
    %p90 = scmp.eq.s32.totalorder %s24, 0
    %p91 = por %p89, %p90
    %p92 = scmp.ne.s32.totalorder %s84, %s86
    %p93 = scmp.eq.s32.totalorder %s29, 1
    %p94 = por %p92, %p93
    %p95 = scmp.ne.s32.totalorder %s86, %s87
    %p96 = scmp.eq.s32.totalorder %s29, 0
    %p97 = por %p95, %p96
    %p98 = scmp.ne.s32.totalorder %s86, %s87
    %p99 = scmp.eq.s32.totalorder %s30, 1
    %p100 = por %p98, %p99
    %p102 = scmp.ne.s32.totalorder %s87, %s101
    %p103 = scmp.eq.s32.totalorder %s30, 0
    %p104 = por %p102, %p103
    %s106 = sadd.s32 %s105, 1
    %p109 = scmp.eq.s32.totalorder %s24, 1
    %p110 = scmp.ne.s32.totalorder %s105, %s107
    %p111 = scmp.eq.s32.totalorder %s24, 0
    %p112 = por %p110, %p111
    %p113 = scmp.ne.s32.totalorder %s105, %s107
    %p114 = scmp.eq.s32.totalorder %s29, 1
    %p115 = por %p113, %p114
    %p116 = scmp.ne.s32.totalorder %s107, %s108
    %p117 = scmp.eq.s32.totalorder %s29, 0
    %p118 = por %p116, %p117
    %p119 = scmp.ne.s32.totalorder %s107, %s108
    %p120 = scmp.eq.s32.totalorder %s30, 1
    %p121 = por %p119, %p120
    %p123 = scmp.ne.s32.totalorder %s108, %s122
    %p124 = scmp.eq.s32.totalorder %s30, 0
    %p125 = por %p123, %p124
    %s127 = sadd.s32 %s126, 1
    %p130 = scmp.eq.s32.totalorder %s24, 1
    %p131 = scmp.ne.s32.totalorder %s126, %s128
    %p132 = scmp.eq.s32.totalorder %s24, 0
    %p133 = por %p131, %p132
    %p134 = scmp.ne.s32.totalorder %s126, %s128
    %p135 = scmp.eq.s32.totalorder %s29, 1
    %p136 = por %p134, %p135
    %p137 = scmp.ne.s32.totalorder %s128, %s129
    %p138 = scmp.eq.s32.totalorder %s29, 0
    %p139 = por %p137, %p138
    %p140 = scmp.ne.s32.totalorder %s128, %s129
    %p141 = scmp.eq.s32.totalorder %s30, 1
    %p142 = por %p140, %p141
    %p144 = scmp.ne.s32.totalorder %s129, %s143
    %p145 = scmp.eq.s32.totalorder %s30, 0
    %p146 = por %p144, %p145
    %s148 = sadd.s32 %s147, 1
    %p151 = scmp.eq.s32.totalorder %s24, 1
    %p152 = scmp.ne.s32.totalorder %s147, %s149
    %p153 = scmp.eq.s32.totalorder %s24, 0
    %p154 = por %p152, %p153
    %p155 = scmp.ne.s32.totalorder %s147, %s149
    %p156 = scmp.eq.s32.totalorder %s29, 1
    %p157 = por %p155, %p156
    %p158 = scmp.ne.s32.totalorder %s149, %s150
    %p159 = scmp.eq.s32.totalorder %s29, 0
    %p160 = por %p158, %p159
    %p161 = scmp.ne.s32.totalorder %s149, %s150
    %p162 = scmp.eq.s32.totalorder %s30, 1
    %p163 = por %p161, %p162
    %p165 = scmp.ne.s32.totalorder %s150, %s164
    %p166 = scmp.eq.s32.totalorder %s30, 0
    %p167 = por %p165, %p166
    %s169 = sadd.s32 %s168, 1
    %p172 = scmp.eq.s32.totalorder %s24, 1
    %p173 = scmp.ne.s32.totalorder %s168, %s170
    %p174 = scmp.eq.s32.totalorder %s24, 0
    %p175 = por %p173, %p174
    %p176 = scmp.ne.s32.totalorder %s168, %s170
    %p177 = scmp.eq.s32.totalorder %s29, 1
    %p178 = por %p176, %p177
    %p179 = scmp.ne.s32.totalorder %s170, %s171
    %p180 = scmp.eq.s32.totalorder %s29, 0
    %p181 = por %p179, %p180
    %p182 = scmp.ne.s32.totalorder %s170, %s171
    %p183 = scmp.eq.s32.totalorder %s30, 1
    %p184 = por %p182, %p183
    %p186 = scmp.ne.s32.totalorder %s171, %s185
    %p187 = scmp.eq.s32.totalorder %s30, 0
    %p188 = por %p186, %p187
    %s190 = sadd.s32 %s189, 1
    %p193 = scmp.eq.s32.totalorder %s24, 1
    %p194 = scmp.ne.s32.totalorder %s189, %s191
    %p195 = scmp.eq.s32.totalorder %s24, 0
    %p196 = por %p194, %p195
    %p197 = scmp.ne.s32.totalorder %s189, %s191
    %p198 = scmp.eq.s32.totalorder %s29, 1
    %p199 = por %p197, %p198
    %p200 = scmp.ne.s32.totalorder %s191, %s192
    %p201 = scmp.eq.s32.totalorder %s29, 0
    %p202 = por %p200, %p201
    %p203 = scmp.ne.s32.totalorder %s191, %s192
    %p204 = scmp.eq.s32.totalorder %s30, 1
    %p205 = por %p203, %p204
    %p207 = scmp.ne.s32.totalorder %s192, %s206
    %p208 = scmp.eq.s32.totalorder %s30, 0
    %p209 = por %p207, %p208
    %s211 = sadd.s32 %s210, 1
    %p214 = scmp.eq.s32.totalorder %s24, 1
    %p215 = scmp.ne.s32.totalorder %s210, %s212
    %p216 = scmp.eq.s32.totalorder %s24, 0
    %p217 = por %p215, %p216
    %p218 = scmp.ne.s32.totalorder %s210, %s212
    %p219 = scmp.eq.s32.totalorder %s29, 1
    %p220 = por %p218, %p219
    %p221 = scmp.ne.s32.totalorder %s212, %s213
    %p222 = scmp.eq.s32.totalorder %s29, 0
    %p223 = por %p221, %p222
    %p224 = scmp.ne.s32.totalorder %s212, %s213
    %p225 = scmp.eq.s32.totalorder %s30, 1
    %p226 = por %p224, %p225
    %p228 = scmp.ne.s32.totalorder %s213, %s227
    %p229 = scmp.eq.s32.totalorder %s30, 0
    %p230 = por %p228, %p229
    %s232 = sadd.s32 %s231, 1
    %p235 = scmp.eq.s32.totalorder %s24, 1
    %p236 = scmp.ne.s32.totalorder %s231, %s233
    %p237 = scmp.eq.s32.totalorder %s24, 0
    %p238 = por %p236, %p237
    %p239 = scmp.ne.s32.totalorder %s231, %s233
    %p240 = scmp.eq.s32.totalorder %s29, 1
    %p241 = por %p239, %p240
    %p242 = scmp.ne.s32.totalorder %s233, %s234
    %p243 = scmp.eq.s32.totalorder %s29, 0
    %p244 = por %p242, %p243
    %p245 = scmp.ne.s32.totalorder %s233, %s234
    %p246 = scmp.eq.s32.totalorder %s30, 1
    %p247 = por %p245, %p246
    %p249 = scmp.ne.s32.totalorder %s234, %s248
    %p250 = scmp.eq.s32.totalorder %s30, 0
    %p251 = por %p249, %p250
    %s253 = sadd.s32 %s252, 1
    %p256 = scmp.eq.s32.totalorder %s24, 1
    %p257 = scmp.ne.s32.totalorder %s252, %s254
    %p258 = scmp.eq.s32.totalorder %s24, 0
    %p259 = por %p257, %p258
    %p260 = scmp.ne.s32.totalorder %s252, %s254
    %p261 = scmp.eq.s32.totalorder %s29, 1
    %p262 = por %p260, %p261
    %p263 = scmp.ne.s32.totalorder %s254, %s255
    %p264 = scmp.eq.s32.totalorder %s29, 0
    %p265 = por %p263, %p264
    %p266 = scmp.ne.s32.totalorder %s254, %s255
    %p267 = scmp.eq.s32.totalorder %s30, 1
    %p268 = por %p266, %p267
    %p270 = scmp.ne.s32.totalorder %s255, %s269
    %p271 = scmp.eq.s32.totalorder %s30, 0
    %p272 = por %p270, %p271
    %s274 = sadd.s32 %s273, 1
    %p277 = scmp.eq.s32.totalorder %s24, 1
    %p278 = scmp.ne.s32.totalorder %s273, %s275
    %p279 = scmp.eq.s32.totalorder %s24, 0
    %p280 = por %p278, %p279
    %p281 = scmp.ne.s32.totalorder %s273, %s275
    %p282 = scmp.eq.s32.totalorder %s29, 1
    %p283 = por %p281, %p282
    %p284 = scmp.ne.s32.totalorder %s275, %s276
    %p285 = scmp.eq.s32.totalorder %s29, 0
    %p286 = por %p284, %p285
    %p287 = scmp.ne.s32.totalorder %s275, %s276
    %p288 = scmp.eq.s32.totalorder %s30, 1
    %p289 = por %p287, %p288
    %p291 = scmp.ne.s32.totalorder %s276, %s290
    %p292 = scmp.eq.s32.totalorder %s30, 0
    %p293 = por %p291, %p292
    %s295 = sadd.s32 %s294, 1
    %p298 = scmp.eq.s32.totalorder %s24, 1
    %p299 = scmp.ne.s32.totalorder %s294, %s296
    %p300 = scmp.eq.s32.totalorder %s24, 0
    %p301 = por %p299, %p300
    %p302 = scmp.ne.s32.totalorder %s294, %s296
    %p303 = scmp.eq.s32.totalorder %s29, 1
    %p304 = por %p302, %p303
    %p305 = scmp.ne.s32.totalorder %s296, %s297
    %p306 = scmp.eq.s32.totalorder %s29, 0
    %p307 = por %p305, %p306
    %p308 = scmp.ne.s32.totalorder %s296, %s297
    %p309 = scmp.eq.s32.totalorder %s30, 1
    %p310 = por %p308, %p309
    %p312 = scmp.ne.s32.totalorder %s297, %s311
    %p313 = scmp.eq.s32.totalorder %s30, 0
    %p314 = por %p312, %p313
    %s316 = sadd.s32 %s315, 1
    %p319 = scmp.eq.s32.totalorder %s24, 1
    %p320 = scmp.ne.s32.totalorder %s315, %s317
    %p321 = scmp.eq.s32.totalorder %s24, 0
    %p322 = por %p320, %p321
    %p323 = scmp.ne.s32.totalorder %s315, %s317
    %p324 = scmp.eq.s32.totalorder %s29, 1
    %p325 = por %p323, %p324
    %p326 = scmp.ne.s32.totalorder %s317, %s318
    %p327 = scmp.eq.s32.totalorder %s29, 0
    %p328 = por %p326, %p327
    %p329 = scmp.ne.s32.totalorder %s317, %s318
    %p330 = scmp.eq.s32.totalorder %s30, 1
    %p331 = por %p329, %p330
    %p333 = scmp.ne.s32.totalorder %s318, %s332
    %p334 = scmp.eq.s32.totalorder %s30, 0
    %p335 = por %p333, %p334
    %s337 = sadd.s32 %s336, 1
    %p340 = scmp.eq.s32.totalorder %s24, 1
    %p341 = scmp.ne.s32.totalorder %s336, %s338
    %p342 = scmp.eq.s32.totalorder %s24, 0
    %p343 = por %p341, %p342
    %p344 = scmp.ne.s32.totalorder %s336, %s338
    %p345 = scmp.eq.s32.totalorder %s29, 1
    %p346 = por %p344, %p345
    %p347 = scmp.ne.s32.totalorder %s338, %s339
    %p348 = scmp.eq.s32.totalorder %s29, 0
    %p349 = por %p347, %p348
    %p350 = scmp.ne.s32.totalorder %s338, %s339
    %p351 = scmp.eq.s32.totalorder %s30, 1
    %p352 = por %p350, %p351
    %p354 = scmp.ne.s32.totalorder %s339, %s353
    %p355 = scmp.eq.s32.totalorder %s30, 0
    %p356 = por %p354, %p355
    %s358 = sadd.s32 %s357, 1
    %p361 = scmp.eq.s32.totalorder %s24, 1
    %p362 = scmp.ne.s32.totalorder %s357, %s359
    %p363 = scmp.eq.s32.totalorder %s24, 0
    %p364 = por %p362, %p363
    %p365 = scmp.ne.s32.totalorder %s357, %s359
    %p366 = scmp.eq.s32.totalorder %s29, 1
    %p367 = por %p365, %p366
    %p368 = scmp.ne.s32.totalorder %s359, %s360
    %p369 = scmp.eq.s32.totalorder %s29, 0
    %p370 = por %p368, %p369
    %p371 = scmp.ne.s32.totalorder %s359, %s360
    %p372 = scmp.eq.s32.totalorder %s30, 1
    %p373 = por %p371, %p372
    %p375 = scmp.ne.s32.totalorder %s360, %s374
    %p376 = scmp.eq.s32.totalorder %s30, 0
    %p377 = por %p375, %p376
    %s379 = sadd.s32 %s378, 1
    %p382 = scmp.eq.s32.totalorder %s24, 1
    %p383 = scmp.ne.s32.totalorder %s378, %s380
    %p384 = scmp.eq.s32.totalorder %s24, 0
    %p385 = por %p383, %p384
    %p386 = scmp.ne.s32.totalorder %s378, %s380
    %p387 = scmp.eq.s32.totalorder %s29, 1
    %p388 = por %p386, %p387
    %p389 = scmp.ne.s32.totalorder %s380, %s381
    %p390 = scmp.eq.s32.totalorder %s29, 0
    %p391 = por %p389, %p390
    %p392 = scmp.ne.s32.totalorder %s380, %s381
    %p393 = scmp.eq.s32.totalorder %s30, 1
    %p394 = por %p392, %p393
    %p396 = scmp.ne.s32.totalorder %s381, %s395
    %p397 = scmp.eq.s32.totalorder %s30, 0
    %p398 = por %p396, %p397
    %s400 = sadd.s32 %s399, 1
    %p403 = scmp.eq.s32.totalorder %s24, 1
    %p404 = scmp.ne.s32.totalorder %s399, %s401
    %p405 = scmp.eq.s32.totalorder %s24, 0
    %p406 = por %p404, %p405
    %p407 = scmp.ne.s32.totalorder %s399, %s401
    %p408 = scmp.eq.s32.totalorder %s29, 1
    %p409 = por %p407, %p408
    %p410 = scmp.ne.s32.totalorder %s401, %s402
    %p411 = scmp.eq.s32.totalorder %s29, 0
    %p412 = por %p410, %p411
    %p413 = scmp.ne.s32.totalorder %s401, %s402
    %p414 = scmp.eq.s32.totalorder %s30, 1
    %p415 = por %p413, %p414
    %p417 = scmp.ne.s32.totalorder %s402, %s416
    %p418 = scmp.eq.s32.totalorder %s30, 0
    %p419 = por %p417, %p418
    %s420 = ssub.s32 %s24, %s31
    %p421 = scmp.eq.s32.totalorder %s420, 0
    %s423 = sadd.s32 %s422, 1
    %s424 = scalar_select %p421, %s422, %s423
    %p427 = pneg %p421
    %p428 = scmp.eq.s32.totalorder %s24, 1
    %p429 = por %p427, %p428
    %p430 = scmp.ne.s32.totalorder %s422, %s425
    %p431 = scmp.eq.s32.totalorder %s24, 0
    %p432 = por %p430, %p431
    %p433 = scmp.ne.s32.totalorder %s422, %s425
    %p434 = scmp.eq.s32.totalorder %s29, 1
    %p435 = por %p433, %p434
    %p436 = scmp.ne.s32.totalorder %s425, %s426
    %p437 = scmp.eq.s32.totalorder %s29, 0
    %p438 = por %p436, %p437
    %p439 = scmp.ne.s32.totalorder %s425, %s426
    %p440 = scmp.eq.s32.totalorder %s30, 1
    %p441 = por %p439, %p440
    %p443 = scmp.ne.s32.totalorder %s426, %s442
    %p444 = scmp.eq.s32.totalorder %s30, 0
    %p445 = por %p443, %p444
    %p446 = scmp.le.s32.totalorder 1, %s24
    %p447 = scmp.lt.s32.totalorder %s24, 3
    %p448 = pnand %p446, %p447
    %p449 = pneg %p448
    // Predicated region
    $region9: #{diffusers_compression_forward.1} parent=5 // pred_check
      _
    $region10: #{diffusers_compression_forward.1} parent=5 // pred_check_branch
      %451 = sbr.rel (%p448) target = $region12
    $region11: #{diffusers_compression_forward.1} parent=5 // pred_region
      %s452 = ssub.s32 %s24, 1
      // Predicated region
      $region13: #{diffusers_compression_forward.1} parent=11 // pred_check
        %p453 = pneg %p97
      $region14: #{diffusers_compression_forward.1} parent=11 // pred_check_branch
        %455 = sbr.rel (%p453) target = $region16
      $region15: #{diffusers_compression_forward.1} parent=11 // pred_region
        _
      $region16: #{diffusers_compression_forward.1} parent=11 // pred_fallthru
        _
      // Predicated region
      $region17: #{diffusers_compression_forward.1} parent=11 // pred_check
        %p456 = pneg %p118
      $region18: #{diffusers_compression_forward.1} parent=11 // pred_check_branch
        %458 = sbr.rel (%p456) target = $region20
      $region19: #{diffusers_compression_forward.1} parent=11 // pred_region
        _
      $region20: #{diffusers_compression_forward.1} parent=11 // pred_fallthru
        _
      // Predicated region
      $region21: #{diffusers_compression_forward.1} parent=11 // pred_check
        %p459 = pneg %p139
      $region22: #{diffusers_compression_forward.1} parent=11 // pred_check_branch
        %461 = sbr.rel (%p459) target = $region24
      $region23: #{diffusers_compression_forward.1} parent=11 // pred_region
        _
      $region24: #{diffusers_compression_forward.1} parent=11 // pred_fallthru
        _
      // Predicated region
      $region25: #{diffusers_compression_forward.1} parent=11 // pred_check
        %p462 = pneg %p160
      $region26: #{diffusers_compression_forward.1} parent=11 // pred_check_branch
        %464 = sbr.rel (%p462) target = $region28
      $region27: #{diffusers_compression_forward.1} parent=11 // pred_region
        _
      $region28: #{diffusers_compression_forward.1} parent=11 // pred_fallthru
        _
      // Predicated region
      $region29: #{diffusers_compression_forward.1} parent=11 // pred_check
        %p465 = pneg %p181
      $region30: #{diffusers_compression_forward.1} parent=11 // pred_check_branch
        %467 = sbr.rel (%p465) target = $region32
      $region31: #{diffusers_compression_forward.1} parent=11 // pred_region
        _
      $region32: #{diffusers_compression_forward.1} parent=11 // pred_fallthru
        _
      // Predicated region
      $region33: #{diffusers_compression_forward.1} parent=11 // pred_check
        %p468 = pneg %p202
      $region34: #{diffusers_compression_forward.1} parent=11 // pred_check_branch
        %470 = sbr.rel (%p468) target = $region36
      $region35: #{diffusers_compression_forward.1} parent=11 // pred_region
        _
      $region36: #{diffusers_compression_forward.1} parent=11 // pred_fallthru
        _
      // Predicated region
      $region37: #{diffusers_compression_forward.1} parent=11 // pred_check
        %p471 = pneg %p223
      $region38: #{diffusers_compression_forward.1} parent=11 // pred_check_branch
        %473 = sbr.rel (%p471) target = $region40
      $region39: #{diffusers_compression_forward.1} parent=11 // pred_region
        _
      $region40: #{diffusers_compression_forward.1} parent=11 // pred_fallthru
        _
      // Predicated region
      $region41: #{diffusers_compression_forward.1} parent=11 // pred_check
        %p474 = pneg %p244
      $region42: #{diffusers_compression_forward.1} parent=11 // pred_check_branch
        %476 = sbr.rel (%p474) target = $region44
      $region43: #{diffusers_compression_forward.1} parent=11 // pred_region
        _
      $region44: #{diffusers_compression_forward.1} parent=11 // pred_fallthru
        _
      // Predicated region
      $region45: #{diffusers_compression_forward.1} parent=11 // pred_check
        %p477 = pneg %p265
      $region46: #{diffusers_compression_forward.1} parent=11 // pred_check_branch
        %479 = sbr.rel (%p477) target = $region48
      $region47: #{diffusers_compression_forward.1} parent=11 // pred_region
        _
      $region48: #{diffusers_compression_forward.1} parent=11 // pred_fallthru
        _
      // Predicated region
      $region49: #{diffusers_compression_forward.1} parent=11 // pred_check
        %p480 = pneg %p286
      $region50: #{diffusers_compression_forward.1} parent=11 // pred_check_branch
        %482 = sbr.rel (%p480) target = $region52
      $region51: #{diffusers_compression_forward.1} parent=11 // pred_region
        _
      $region52: #{diffusers_compression_forward.1} parent=11 // pred_fallthru
        _
      // Predicated region
      $region53: #{diffusers_compression_forward.1} parent=11 // pred_check
        %p483 = pneg %p307
      $region54: #{diffusers_compression_forward.1} parent=11 // pred_check_branch
        %485 = sbr.rel (%p483) target = $region56
      $region55: #{diffusers_compression_forward.1} parent=11 // pred_region
        _
      $region56: #{diffusers_compression_forward.1} parent=11 // pred_fallthru
        _
      // Predicated region
      $region57: #{diffusers_compression_forward.1} parent=11 // pred_check
        %p486 = pneg %p328
      $region58: #{diffusers_compression_forward.1} parent=11 // pred_check_branch
        %488 = sbr.rel (%p486) target = $region60
      $region59: #{diffusers_compression_forward.1} parent=11 // pred_region
        _
      $region60: #{diffusers_compression_forward.1} parent=11 // pred_fallthru
        _
      // Predicated region
      $region61: #{diffusers_compression_forward.1} parent=11 // pred_check
        %p489 = pneg %p349
      $region62: #{diffusers_compression_forward.1} parent=11 // pred_check_branch
        %491 = sbr.rel (%p489) target = $region64
      $region63: #{diffusers_compression_forward.1} parent=11 // pred_region
        _
      $region64: #{diffusers_compression_forward.1} parent=11 // pred_fallthru
        _
      // Predicated region
      $region65: #{diffusers_compression_forward.1} parent=11 // pred_check
        %p492 = pneg %p370
      $region66: #{diffusers_compression_forward.1} parent=11 // pred_check_branch
        %494 = sbr.rel (%p492) target = $region68
      $region67: #{diffusers_compression_forward.1} parent=11 // pred_region
        _
      $region68: #{diffusers_compression_forward.1} parent=11 // pred_fallthru
        _
      // Predicated region
      $region69: #{diffusers_compression_forward.1} parent=11 // pred_check
        %p495 = pneg %p391
      $region70: #{diffusers_compression_forward.1} parent=11 // pred_check_branch
        %497 = sbr.rel (%p495) target = $region72
      $region71: #{diffusers_compression_forward.1} parent=11 // pred_region
        _
      $region72: #{diffusers_compression_forward.1} parent=11 // pred_fallthru
        _
      // Predicated region
      $region73: #{diffusers_compression_forward.1} parent=11 // pred_check
        %p498 = pneg %p412
      $region74: #{diffusers_compression_forward.1} parent=11 // pred_check_branch
        %500 = sbr.rel (%p498) target = $region76
      $region75: #{diffusers_compression_forward.1} parent=11 // pred_region
        _
      $region76: #{diffusers_compression_forward.1} parent=11 // pred_fallthru
        _
    $region12: #{diffusers_compression_forward.1} parent=5 // pred_fallthru
      _
    %p501 = scmp.lt.s32.totalorder %s24, 2
    // Predicated region
    $region77: #{diffusers_compression_forward.1} parent=5 // pred_check
      %p502 = pneg %p501
    $region78: #{diffusers_compression_forward.1} parent=5 // pred_check_branch
      %504 = sbr.rel (%p502) target = $region80
    $region79: #{diffusers_compression_forward.1} parent=5 // pred_region
      // Predicated region
      $region81: #{diffusers_compression_forward.1} parent=79 // pred_check
        %p505 = pneg %p44
      $region82: #{diffusers_compression_forward.1} parent=79 // pred_check_branch
        %507 = sbr.rel (%p505) target = $region84
      $region83: #{diffusers_compression_forward.1} parent=79 // pred_region
        %p508 = scmp.lt.s32.totalorder %s24, 1
        %s509 = scalar_select %p508, %s24, 1
        %s510 = smul.addr %s509, 2
        %s511 = smul.addr %s510, 8
        %s512 = scalar_lea.vmem %s0, %s511
      $region84: #{diffusers_compression_forward.1} parent=79 // pred_fallthru
        _
      // Predicated region
      $region85: #{diffusers_compression_forward.1} parent=79 // pred_check
        %p513 = pneg %p70
      $region86: #{diffusers_compression_forward.1} parent=79 // pred_check_branch
        %515 = sbr.rel (%p513) target = $region88
      $region87: #{diffusers_compression_forward.1} parent=79 // pred_region
        %p516 = scmp.lt.s32.totalorder %s24, 1
        %s517 = scalar_select %p516, %s24, 1
        %s518 = smul.addr %s517, 2
        %s519 = smul.addr %s518, 8
        %s520 = scalar_lea.vmem %s1, %s519
      $region88: #{diffusers_compression_forward.1} parent=79 // pred_fallthru
        _
    $region80: #{diffusers_compression_forward.1} parent=5 // pred_fallthru
      _
    %p521 = scmp.le.s32.totalorder 1, %s24
    %p522 = scmp.lt.s32.totalorder %s24, 3
    %p523 = pnand %p521, %p522
    %p524 = pneg %p523
    // Predicated region
    $region89: #{diffusers_compression_forward.1} parent=5 // pred_check
      _
    $region90: #{diffusers_compression_forward.1} parent=5 // pred_check_branch
      %526 = sbr.rel (%p523) target = $region92
    $region91: #{diffusers_compression_forward.1} parent=5 // pred_region
      %s527 = ssub.s32 %s24, 1
      %p528 = scmp.lt.s32.totalorder %s29, 1
      %s529 = scalar_select %p528, %s29, 1
      %s530 = smul.addr %s529, 2
      %s531 = smul.addr %s530, 8
      %s532 = scalar_lea.vmem %s0, %s531
      %p533 = pneg %p50
      %p534 = pneg %p47
      %p535 = scmp.lt.s32.totalorder %s29, 1
      %s536 = scalar_select %p535, %s29, 1
      %s537 = smul.addr %s536, 2
      %s538 = smul.addr %s537, 8
      %s539 = scalar_lea.vmem %s1, %s538
      %p540 = pneg %p76
      %p541 = pneg %p73
      %p542 = pneg %p97
      %p543 = pneg %p94
      %p544 = pneg %p118
      %p545 = pneg %p115
      %p546 = pneg %p139
      %p547 = pneg %p136
      %p548 = pneg %p160
      %p549 = pneg %p157
      %p550 = pneg %p181
      %p551 = pneg %p178
      %p552 = pneg %p202
      %p553 = pneg %p199
      %p554 = pneg %p223
      %p555 = pneg %p220
      %p556 = pneg %p244
      %p557 = pneg %p241
      %p558 = pneg %p265
      %p559 = pneg %p262
      %p560 = pneg %p286
      %p561 = pneg %p283
      %p562 = pneg %p307
      %p563 = pneg %p304
      %p564 = pneg %p328
      %p565 = pneg %p325
      %p566 = pneg %p349
      %p567 = pneg %p346
      %p568 = pneg %p370
      %p569 = pneg %p367
      %p570 = pneg %p391
      %p571 = pneg %p388
      %p572 = pneg %p412
      %p573 = pneg %p409
      %p574 = pneg %p438
      %p575 = pneg %p435
      %p576 = scmp.lt.s32.totalorder %s29, 1
      %s577 = scalar_select %p576, %s29, 1
      %s578 = smul.addr %s577, 2
      %s579 = smul.addr %s578, 8
      %s580 = scalar_lea.vmem %s18, %s579
      %p581 = scmp.lt.s32.totalorder %s29, 1
      %s582 = scalar_select %p581, %s29, 1
      %s583 = smul.addr %s582, 2
      %s584 = smul.addr %s583, 8
      %s585 = scalar_lea.vmem %s0, %s584
      %p586 = scmp.lt.s32.totalorder %s29, 1
      %s587 = scalar_select %p586, %s29, 1
      %s588 = smul.addr %s587, 2
      %s589 = smul.addr %s588, 8
      %s590 = scalar_lea.vmem %s1, %s589
      %p591 = scmp.lt.s32.totalorder %s29, 1
      %s592 = scalar_select %p591, %s29, 1
      %s593 = smul.addr %s592, 2
      %s594 = smul.addr %s593, 8
      %s595 = scalar_lea.vmem %s18, %s594
      %v597 = vlaneseq
      %v598 = vshrl.u32 %v597, 7
      %v599 = vadd.s32 %v598, 8
      %vm600 = vcmp.lt.s32.totalorder %v598, 0
      %v601 = vsub.s32 0, %v598
      %v602 = vsel %vm600, %v601, %v598
      %v603 = vshrl.u32 %v602, 2
      %v604 = vand.u32 %v602, 3
      %v605 = vsub.s32 0, %v604
      %v606 = vsel %vm600, %v605, %v604
      %vm607 = vcmp.lt.s32.totalorder %v599, 0
      %v608 = vsub.s32 0, %v599
      %v609 = vsel %vm607, %v608, %v599
      %v610 = vshrl.u32 %v609, 2
      %v611 = vand.u32 %v609, 3
      %v612 = vsub.s32 0, %v611
      %v613 = vsel %vm607, %v612, %v611
      %vm614 = vcmp.ne.s32.totalorder %v606, 0
      %vm615 = vcmp.ne.s32.totalorder %v613, 0
      %vm616 = vcmp.lt.s32.totalorder %v606, 0
      %vm617 = vcmp.lt.s32.totalorder %v613, 0
      %vm618 = vmand %vm616, %vm614
      %vm619 = vmand %vm617, %vm615
      %v620 = vadd.s32 %v606, 4
      %v621 = vadd.s32 %v613, 4
      %v622 = vsel %vm618, %v620, %v606
      %v623 = vsel %vm619, %v621, %v613
      %vm624 = vcmp.ne.s32.totalorder %v622, 0
      %vm625 = vcmp.ne.s32.totalorder %v623, 0
      %vm626 = vcmp.ne.s32.totalorder %v622, 3
      %vm627 = vcmp.ne.s32.totalorder %v623, 3
      %v628 = vld [vmem:[%s585] sm:$0xff]
      %v629 = vld [vmem:[%s585 + $0x8] sm:$0xff]
      %vm632 = vcmask 1044480
      %v633 = vrot.slane %v628, 3
      %v634 = vrot.slane %v629, 3
      %v635 = vsel %vm632, %v633, %v634
      %v639 = vsel %vm632, 0.0, %v633
      %v640 = vsel %vm632, %v634, 0.0
      %v641 = vsel %vm624, 1, 0
      %v642 = vsel %vm625, 1, 0
      %vm643 = vcmp.eq.s32.totalorder %v641, 1
      %vm644 = vcmp.eq.s32.totalorder %v642, 1
      %v645 = vsel %vm643, %v639, 0.0
      %v646 = vsel %vm644, %v635, 0.0
      %v647 = vsel %vm626, 1, 0
      %v648 = vsel %vm627, 1, 0
      %vm649 = vcmp.eq.s32.totalorder %v647, 1
      %vm650 = vcmp.eq.s32.totalorder %v648, 1
      %vm653 = vcmask 1045504
      %v654 = vrot.slane %v639, 2
      %v655 = vrot.slane %v635, 2
      %v656 = vsel %vm653, %v654, %v655
      %v657 = vrot.slane %v640, 2
      %v658 = vsel %vm653, %v655, %v657
      %v661 = vsel %vm649, %v656, 0.0
      %v662 = vsel %vm650, %v658, 0.0
      %vm663 = vcmask 1043456
      %v664 = vrot.slane %v639, 4
      %v665 = vrot.slane %v635, 4
      %v666 = vsel %vm663, %v664, %v665
      %v667 = vrot.slane %v640, 4
      %v668 = vsel %vm663, %v665, %v667
      %v671 = vsel %vm643, %v666, 0.0
      %v672 = vsel %vm644, %v668, 0.0
      %vm673 = vcmask 1041408
      %v674 = vrot.slane %v639, 6
      %v675 = vrot.slane %v635, 6
      %v676 = vsel %vm673, %v674, %v675
      %v677 = vrot.slane %v640, 6
      %v678 = vsel %vm673, %v675, %v677
      %v681 = vsel %vm649, %v676, 0.0
      %v682 = vsel %vm650, %v678, 0.0
      %v683 = vsel %vm643, %v635, 0.0
      %v684 = vsel %vm644, %v640, 0.0
      %v686 = vrot.slane 0.0, 2
      %v687 = vsel %vm653, %v657, %v686
      %v689 = vsel %vm649, %v658, 0.0
      %v690 = vsel %vm650, %v687, 0.0
      %vm691 = vcmask 1046528
      %v692 = vrot.slane %v639, 1
      %v693 = vrot.slane %v635, 1
      %v694 = vsel %vm691, %v692, %v693
      %v695 = vrot.slane %v640, 1
      %v696 = vsel %vm691, %v693, %v695
      %697 = vrot.lane.b32.xlu0 %v694, 48
      %v698 = vpop.permute.xlu0 %697
      %699 = vrot.lane.b32.xlu0 %v696, 48
      %v700 = vpop.permute.xlu0 %699
      %705 = vrot.lane.b32.xlu0 %v661, 96
      %v706 = vpop.permute.xlu0 %705
      %707 = vrot.lane.b32.xlu0 %v662, 96
      %v708 = vpop.permute.xlu0 %707
      %713 = vrot.lane.b32.xlu0 %v671, 16
      %v714 = vpop.permute.xlu0 %713
      %715 = vrot.lane.b32.xlu0 %v672, 16
      %v716 = vpop.permute.xlu0 %715
      %vm719 = vcmask 1042432
      %v720 = vrot.slane %v639, 5
      %v721 = vrot.slane %v635, 5
      %v722 = vsel %vm719, %v720, %v721
      %v723 = vrot.slane %v640, 5
      %v724 = vsel %vm719, %v721, %v723
      %725 = vrot.lane.b32.xlu0 %v722, 64
      %v726 = vpop.permute.xlu0 %725
      %727 = vrot.lane.b32.xlu0 %v724, 64
      %v728 = vpop.permute.xlu0 %727
      %733 = vrot.lane.b32.xlu0 %v681, 112
      %v734 = vpop.permute.xlu0 %733
      %735 = vrot.lane.b32.xlu0 %v682, 112
      %v736 = vpop.permute.xlu0 %735
      %741 = vrot.lane.b32.xlu0 %v683, 32
      %v742 = vpop.permute.xlu0 %741
      %743 = vrot.lane.b32.xlu0 %v684, 32
      %v744 = vpop.permute.xlu0 %743
      %v747 = vrot.slane 0.0, 1
      %v748 = vsel %vm691, %v695, %v747
      %749 = vrot.lane.b32.xlu0 %v696, 80
      %v750 = vpop.permute.xlu0 %749
      %751 = vrot.lane.b32.xlu0 %v748, 80
      %v752 = vpop.permute.xlu0 %751
      %vm755 = vcmask 392192
      %v756 = vsel %vm755, %v645, %v698
      %v757 = vsel %vm755, %v646, %v700
      %vm758 = vcmask 785408
      %v759 = vsel %vm758, %v756, %v706
      %v760 = vsel %vm758, %v757, %v708
      %vm761 = vcmask 130048
      %v762 = vsel %vm761, %v706, %v714
      %v763 = vsel %vm761, %v708, %v716
      %vm764 = vcmask 523264
      %v765 = vsel %vm764, %v762, %v726
      %v766 = vsel %vm764, %v763, %v728
      %vm767 = vcmask 916480
      %v768 = vsel %vm767, %v765, %v734
      %v769 = vsel %vm767, %v766, %v736
      %vm770 = vcmask 261120
      %v771 = vsel %vm770, %v734, %v742
      %v772 = vsel %vm770, %v736, %v744
      %vm773 = vcmask 654336
      %v774 = vsel %vm773, %v771, %v750
      %v775 = vsel %vm773, %v772, %v752
      %v776 = vpack.c.bf16 %v760, %v759
      %v777 = vpack.c.bf16 %v769, %v768
      %v778 = vpack.c.bf16 %v775, %v774
      %v779 = vpack.c.bf16 %v690, %v689
      %v780 = vld [vmem:[%s2] sm:$0xf]
      %v781 = vld [vmem:[%s2 + $0x4] sm:$0xf]
      %v782 = vld [vmem:[%s2 + $0x8] sm:$0xf]
      %v783 = vld [vmem:[%s2 + $0xc] sm:$0xf]
      %v784 = vld [vmem:[%s2 + $0x10] sm:$0xf]
      %v785 = vld [vmem:[%s2 + $0x14] sm:$0xf]
      %v786 = vld [vmem:[%s2 + $0x18] sm:$0xf]
      %v787 = vld [vmem:[%s2 + $0x1c] sm:$0xf]
      %v788 = vld [vmem:[%s2 + $0x20] sm:$0xf]
      %v789 = vld [vmem:[%s2 + $0x24] sm:$0xf]
      %v790 = vld [vmem:[%s2 + $0x28] sm:$0xf]
      %v791 = vld [vmem:[%s2 + $0x2c] sm:$0xf]
      %v792 = vld [vmem:[%s2 + $0x30] sm:$0xf]
      %v793 = vld [vmem:[%s2 + $0x34] sm:$0xf]
      %v794 = vld [vmem:[%s2 + $0x38] sm:$0xf]
      %v795 = vld [vmem:[%s2 + $0x3c] sm:$0xf]
      %v796 = vld [vmem:[%s2 + $0x40] sm:$0xf]
      %v797 = vld [vmem:[%s2 + $0x44] sm:$0xf]
      %v798 = vld [vmem:[%s2 + $0x48] sm:$0xf]
      %v799 = vld [vmem:[%s2 + $0x4c] sm:$0xf]
      %v800 = vld [vmem:[%s2 + $0x50] sm:$0xf]
      %v801 = vld [vmem:[%s2 + $0x54] sm:$0xf]
      %v802 = vld [vmem:[%s2 + $0x58] sm:$0xf]
      %v803 = vld [vmem:[%s2 + $0x5c] sm:$0xf]
      %v804 = vld [vmem:[%s2 + $0x60] sm:$0xf]
      %v805 = vld [vmem:[%s2 + $0x64] sm:$0xf]
      %v806 = vld [vmem:[%s2 + $0x68] sm:$0xf]
      %v807 = vld [vmem:[%s2 + $0x6c] sm:$0xf]
      %v808 = vld [vmem:[%s2 + $0x70] sm:$0xf]
      %v809 = vld [vmem:[%s2 + $0x74] sm:$0xf]
      %v810 = vld [vmem:[%s2 + $0x78] sm:$0xf]
      %v811 = vld [vmem:[%s2 + $0x7c] sm:$0xf]
      %v812 = vld [vmem:[%s2 + $0x80] sm:$0xf]
      %v813 = vld [vmem:[%s2 + $0x84] sm:$0xf]
      %v814 = vld [vmem:[%s2 + $0x88] sm:$0xf]
      %v815 = vld [vmem:[%s2 + $0x8c] sm:$0xf]
      %v816 = vld [vmem:[%s2 + $0x90] sm:$0xf]
      %v817 = vld [vmem:[%s2 + $0x94] sm:$0xf]
      %v818 = vld [vmem:[%s2 + $0x98] sm:$0xf]
      %v819 = vld [vmem:[%s2 + $0x9c] sm:$0xf]
      %v820 = vld [vmem:[%s2 + $0xa0] sm:$0xf]
      %v821 = vld [vmem:[%s2 + $0xa4] sm:$0xf]
      %v822 = vld [vmem:[%s2 + $0xa8] sm:$0xf]
      %v823 = vld [vmem:[%s2 + $0xac] sm:$0xf]
      %v824 = vld [vmem:[%s2 + $0xb0] sm:$0xf]
      %v825 = vld [vmem:[%s2 + $0xb4] sm:$0xf]
      %v826 = vld [vmem:[%s2 + $0xb8] sm:$0xf]
      %v827 = vld [vmem:[%s2 + $0xbc] sm:$0xf]
      %v828 = vld [vmem:[%s2 + $0xc0] sm:$0xf]
      %v829 = vld [vmem:[%s2 + $0xc4] sm:$0xf]
      %v830 = vld [vmem:[%s2 + $0xc8] sm:$0xf]
      %v831 = vld [vmem:[%s2 + $0xcc] sm:$0xf]
      %v832 = vld [vmem:[%s2 + $0xd0] sm:$0xf]
      %v833 = vld [vmem:[%s2 + $0xd4] sm:$0xf]
      %v834 = vld [vmem:[%s3] sm:$0x1]
      %v836 = vlaneseq
      %v837 = vshrl.u32 %v836, 7
      %v838 = vsub.s32 0, %v837
      %v839 = vrot.slane %v834, %v838
      %v895 = vunpack.c.l.b16 %v780
      %v896 = vunpack.c.l.b16 %v781
      %v897 = vunpack.c.l.b16 %v782
      %v898 = vunpack.c.l.b16 %v783
      %v899 = vunpack.c.l.b16 %v784
      %v900 = vunpack.c.l.b16 %v785
      %v901 = vunpack.c.l.b16 %v786
      %v902 = vunpack.c.l.b16 %v787
      %v903 = vunpack.c.l.b16 %v788
      %v904 = vunpack.c.l.b16 %v789
      %v905 = vunpack.c.l.b16 %v790
      %v906 = vunpack.c.l.b16 %v791
      %v907 = vunpack.c.l.b16 %v792
      %v908 = vunpack.c.l.b16 %v793
      %v909 = vunpack.c.l.b16 %v794
      %v910 = vunpack.c.l.b16 %v795
      %v911 = vunpack.c.l.b16 %v796
      %v912 = vunpack.c.l.b16 %v797
      %v913 = vunpack.c.l.b16 %v798
      %v914 = vunpack.c.l.b16 %v799
      %v915 = vunpack.c.l.b16 %v800
      %v916 = vunpack.c.l.b16 %v801
      %v917 = vunpack.c.l.b16 %v802
      %v918 = vunpack.c.l.b16 %v803
      %v919 = vunpack.c.l.b16 %v804
      %v920 = vunpack.c.l.b16 %v805
      %v921 = vunpack.c.l.b16 %v806
      %v922 = vunpack.c.l.b16 %v807
      %v923 = vunpack.c.l.b16 %v808
      %v924 = vunpack.c.l.b16 %v809
      %v925 = vunpack.c.l.b16 %v810
      %v926 = vunpack.c.l.b16 %v811
      %v927 = vunpack.c.l.b16 %v812
      %v928 = vunpack.c.l.b16 %v813
      %v929 = vunpack.c.l.b16 %v814
      %v930 = vunpack.c.l.b16 %v815
      %v931 = vunpack.c.l.b16 %v816
      %v932 = vunpack.c.l.b16 %v817
      %v933 = vunpack.c.l.b16 %v818
      %v934 = vunpack.c.l.b16 %v819
      %v935 = vunpack.c.l.b16 %v820
      %v936 = vunpack.c.l.b16 %v821
      %v937 = vunpack.c.l.b16 %v822
      %v938 = vunpack.c.l.b16 %v823
      %v939 = vunpack.c.l.b16 %v824
      %v940 = vunpack.c.l.b16 %v825
      %v941 = vunpack.c.l.b16 %v826
      %v942 = vunpack.c.l.b16 %v827
      %v943 = vunpack.c.l.b16 %v828
      %v944 = vunpack.c.l.b16 %v829
      %v945 = vunpack.c.l.b16 %v830
      %v946 = vunpack.c.l.b16 %v831
      %v947 = vunpack.c.l.b16 %v832
      %v948 = vunpack.c.l.b16 %v833
      %v949 = vpack.c.b16 %v896, %v895
      %v950 = vpack.c.b16 %v898, %v897
      %v951 = vpack.c.b16 %v900, %v899
      %v952 = vpack.c.b16 %v902, %v901
      %v953 = vpack.c.b16 %v904, %v903
      %v954 = vpack.c.b16 %v906, %v905
      %v955 = vpack.c.b16 %v908, %v907
      %v956 = vpack.c.b16 %v910, %v909
      %v957 = vpack.c.b16 %v912, %v911
      %v958 = vpack.c.b16 %v914, %v913
      %v959 = vpack.c.b16 %v916, %v915
      %v960 = vpack.c.b16 %v918, %v917
      %v961 = vpack.c.b16 %v920, %v919
      %v962 = vpack.c.b16 %v922, %v921
      %v963 = vpack.c.b16 %v924, %v923
      %v964 = vpack.c.b16 %v926, %v925
      %v965 = vpack.c.b16 %v928, %v927
      %v966 = vpack.c.b16 %v930, %v929
      %v967 = vpack.c.b16 %v932, %v931
      %v968 = vpack.c.b16 %v934, %v933
      %v969 = vpack.c.b16 %v936, %v935
      %v970 = vpack.c.b16 %v938, %v937
      %v971 = vpack.c.b16 %v940, %v939
      %v972 = vpack.c.b16 %v942, %v941
      %v973 = vpack.c.b16 %v944, %v943
      %v974 = vpack.c.b16 %v946, %v945
      %v975 = vpack.c.b16 %v948, %v947
      %v1004 = vsel %vm755, %v779, 0
      %1006 = vmatprep.subr.bf16.mxu0 0
      %1007 = vmatpush1.bf16.msra.mxu0 %v949
      %1008 = vmatprep.subr.bf16.mxu0 0
      %1009 = vmatpush1.bf16.msra.mxu0 %v950
      %1010 = vmatprep.subr.bf16.mxu0 0
      %1011 = vmatpush1.bf16.msra.mxu0 %v951
      %1012 = vmatprep.subr.bf16.mxu0 0
      %1013 = vmatpush1.bf16.msra.mxu0 %v952
      %1014 = vmatprep.subr.bf16.mxu0 0
      %1015 = vmatpush1.bf16.msra.mxu0 %v953
      %1016 = vmatprep.subr.bf16.mxu0 0
      %1017 = vmatpush1.bf16.msra.mxu0 %v954
      %1018 = vmatprep.subr.bf16.mxu0 0
      %1019 = vmatpush1.bf16.msra.mxu0 %v955
      %1020 = vmatprep.subr.bf16.mxu0 0
      %1021 = vmatpush1.bf16.msra.mxu0 %v956
      %1022 = vmatprep.subr.bf16.mxu0 0
      %1023 = vmatpush1.bf16.msra.mxu0 %v957
      %1024 = vmatprep.subr.bf16.mxu0 0
      %1025 = vmatpush1.bf16.msra.mxu0 %v958
      %1026 = vmatprep.subr.bf16.mxu0 0
      %1027 = vmatpush1.bf16.msra.mxu0 %v959
      %1028 = vmatprep.subr.bf16.mxu0 0
      %1029 = vmatpush1.bf16.msra.mxu0 %v960
      %1030 = vmatprep.subr.bf16.mxu0 0
      %1031 = vmatpush1.bf16.msra.mxu0 %v961
      %1032 = vmatprep.subr.bf16.mxu0 0
      %1033 = vmatpush1.bf16.msra.mxu0 %v962
      %1034 = vmatprep.subr.bf16.mxu0 0
      %1035 = vmatpush1.bf16.msra.mxu0 %v963
      %1036 = vmatprep.subr.bf16.mxu0 0
      %1037 = vmatpush1.bf16.msra.mxu0 %v964
      %1038 = vmatprep.mubr.bf16.mxu0 %v777
      %1039 = vmatmul.mubr.bf16.gmra.mrb[0].mxu0 %v776
      %v1040 = vpop.f32.mrb[0].mxu0
      %v1041 = vadd.f32 %v839, %v1040
      %v1042 = vpop.f32.mrb[0].mxu0
      %v1043 = vpop.f32.mrb[0].mxu0
      %v1044 = vadd.f32 %v839, %v1043
      %v1045 = vpop.f32.mrb[0].mxu0
      %1046 = vdwg.mxu0
      %1047 = vmatprep.subr.bf16.mxu0 0
      %1048 = vmatpush1.bf16.msra.mxu0 %v965
      %1049 = vmatprep.subr.bf16.mxu0 0
      %1050 = vmatpush1.bf16.msra.mxu0 %v966
      %1051 = vmatprep.subr.bf16.mxu0 0
      %1052 = vmatpush1.bf16.msra.mxu0 %v967
      %1053 = vmatprep.subr.bf16.mxu0 0
      %1054 = vmatpush1.bf16.msra.mxu0 %v968
      %1055 = vmatprep.subr.bf16.mxu0 0
      %1056 = vmatpush1.bf16.msra.mxu0 %v969
      %1057 = vmatprep.subr.bf16.mxu0 0
      %1058 = vmatpush1.bf16.msra.mxu0 %v970
      %1059 = vmatprep.subr.bf16.mxu0 0
      %1060 = vmatpush1.bf16.msra.mxu0 %v971
      %1061 = vmatprep.subr.bf16.mxu0 0
      %1062 = vmatpush1.bf16.msra.mxu0 %v972
      %1063 = vmatprep.subr.bf16.mxu0 0
      %1064 = vmatpush1.bf16.msra.mxu0 %v973
      %1065 = vmatprep.subr.bf16.mxu0 0
      %1066 = vmatpush1.bf16.msra.mxu0 %v974
      %1067 = vmatprep.subr.bf16.mxu0 0
      %1068 = vmatpush1.bf16.msra.mxu0 %v975
      %1069 = vmatprep.subr.bf16.mxu0 0
      %1070 = vmatpush1.bf16.msra.mxu0 0
      %1071 = vmatprep.subr.bf16.mxu0 0
      %1072 = vmatpush1.bf16.msra.mxu0 0
      %1073 = vmatprep.subr.bf16.mxu0 0
      %1074 = vmatpush1.bf16.msra.mxu0 0
      %1075 = vmatprep.subr.bf16.mxu0 0
      %1076 = vmatpush1.bf16.msra.mxu0 0
      %1077 = vmatprep.subr.bf16.mxu0 0
      %1078 = vmatpush1.bf16.msra.mxu0 0
      %1079 = vmatprep.mubr.bf16.mxu0 %v1004
      %1080 = vmatmul.mubr.bf16.gmra.mrb[0].mxu0 %v778
      %v1081 = vpop.f32.mrb[0].mxu0
      %v1082 = vadd.f32 %v1041, %v1081
      %v1083 = vpop.f32.mrb[0].mxu0
      %v1084 = vpop.f32.mrb[0].mxu0
      %v1085 = vadd.f32 %v1044, %v1084
      %v1086 = vpop.f32.mrb[0].mxu0
      %1087 = vdwg.mxu0
      %v1088 = vxor.u32 %v1082, 2147483648
      %v1089 = vxor.u32 %v1085, 2147483648
      %v1090 = vmul.f32 %v1088, 1.442695
      %v1091 = vpow.pop %v1090
      %v1092 = vmul.f32 %v1089, 1.442695
      %v1093 = vpow.pop %v1092
      %v1094 = vadd.f32 %v1091, 1.0
      %v1095 = vadd.f32 %v1093, 1.0
      %v1096 = vrcp.pop %v1094
      %v1097 = vmul.f32 1.0, %v1096
      %v1098 = vrcp.pop %v1095
      %v1099 = vmul.f32 1.0, %v1098
      %v1100 = vmul.f32 %v1082, %v1097
      %v1101 = vmul.f32 %v1085, %v1099
      %v1104 = vrot.slane %v1100, 3
      %v1105 = vrot.slane %v1101, 3
      %v1106 = vsel %vm632, %v1104, %v1105
      %v1110 = vsel %vm632, 0.0, %v1104
      %v1111 = vsel %vm632, %v1105, 0.0
      %v1112 = vsel %vm643, %v1110, 0.0
      %v1113 = vsel %vm644, %v1106, 0.0
      %v1116 = vrot.slane %v1110, 2
      %v1117 = vrot.slane %v1106, 2
      %v1118 = vsel %vm653, %v1116, %v1117
      %v1119 = vrot.slane %v1111, 2
      %v1120 = vsel %vm653, %v1117, %v1119
      %v1123 = vsel %vm649, %v1118, 0.0
      %v1124 = vsel %vm650, %v1120, 0.0
      %v1125 = vrot.slane %v1110, 4
      %v1126 = vrot.slane %v1106, 4
      %v1127 = vsel %vm663, %v1125, %v1126
      %v1128 = vrot.slane %v1111, 4
      %v1129 = vsel %vm663, %v1126, %v1128
      %v1132 = vsel %vm643, %v1127, 0.0
      %v1133 = vsel %vm644, %v1129, 0.0
      %v1134 = vrot.slane %v1110, 6
      %v1135 = vrot.slane %v1106, 6
      %v1136 = vsel %vm673, %v1134, %v1135
      %v1137 = vrot.slane %v1111, 6
      %v1138 = vsel %vm673, %v1135, %v1137
      %v1141 = vsel %vm649, %v1136, 0.0
      %v1142 = vsel %vm650, %v1138, 0.0
      %v1143 = vsel %vm643, %v1106, 0.0
      %v1144 = vsel %vm644, %v1111, 0.0
      %v1145 = vsel %vm653, %v1119, %v686
      %v1147 = vsel %vm649, %v1120, 0.0
      %v1148 = vsel %vm650, %v1145, 0.0
      %v1149 = vrot.slane %v1110, 1
      %v1150 = vrot.slane %v1106, 1
      %v1151 = vsel %vm691, %v1149, %v1150
      %v1152 = vrot.slane %v1111, 1
      %v1153 = vsel %vm691, %v1150, %v1152
      %1154 = vrot.lane.b32.xlu0 %v1151, 64
      %v1155 = vpop.permute.xlu0 %1154
      %1156 = vrot.lane.b32.xlu0 %v1153, 64
      %v1157 = vpop.permute.xlu0 %1156
      %1162 = vrot.lane.b32.xlu0 %v1132, 64
      %v1163 = vpop.permute.xlu0 %1162
      %1164 = vrot.lane.b32.xlu0 %v1133, 64
      %v1165 = vpop.permute.xlu0 %1164
      %v1168 = vrot.slane %v1110, 5
      %v1169 = vrot.slane %v1106, 5
      %v1170 = vsel %vm719, %v1168, %v1169
      %v1171 = vrot.slane %v1111, 5
      %v1172 = vsel %vm719, %v1169, %v1171
      %1177 = vrot.lane.b32.xlu0 %v1141, 64
      %v1178 = vpop.permute.xlu0 %1177
      %1179 = vrot.lane.b32.xlu0 %v1142, 64
      %v1180 = vpop.permute.xlu0 %1179
      %v1183 = vsel %vm691, %v1152, %v747
      %1184 = vrot.lane.b32.xlu0 %v1183, 64
      %v1185 = vpop.permute.xlu0 %1184
      %v1187 = vsel %vm764, %v1112, %v1155
      %v1188 = vsel %vm764, %v1113, %v1157
      %v1189 = vsel %vm764, %v1123, %v1163
      %v1190 = vsel %vm764, %v1124, %v1165
      %v1191 = vsel %vm764, %v1170, %v1178
      %v1192 = vsel %vm764, %v1172, %v1180
      %v1193 = vsel %vm764, %v1143, %v1157
      %v1194 = vsel %vm764, %v1144, %v1185
      %v1195 = vpack.c.bf16 %v1188, %v1187
      %v1196 = vpack.c.bf16 %v1190, %v1189
      %v1197 = vpack.c.bf16 %v1192, %v1191
      %v1198 = vpack.c.bf16 %v1194, %v1193
      %v1199 = vpack.c.bf16 %v1148, %v1147
      %v1200 = vld [vmem:[%s4] sm:$0xf]
      %v1201 = vld [vmem:[%s4 + $0x4] sm:$0xf]
      %v1202 = vld [vmem:[%s4 + $0x8] sm:$0xf]
      %v1203 = vld [vmem:[%s4 + $0xc] sm:$0xf]
      %v1204 = vld [vmem:[%s4 + $0x10] sm:$0xf]
      %v1205 = vld [vmem:[%s4 + $0x14] sm:$0xf]
      %v1206 = vld [vmem:[%s4 + $0x18] sm:$0xf]
      %v1207 = vld [vmem:[%s4 + $0x1c] sm:$0xf]
      %v1208 = vld [vmem:[%s4 + $0x20] sm:$0xf]
      %v1209 = vld [vmem:[%s4 + $0x24] sm:$0xf]
      %v1210 = vld [vmem:[%s4 + $0x28] sm:$0xf]
      %v1211 = vld [vmem:[%s4 + $0x2c] sm:$0xf]
      %v1212 = vld [vmem:[%s4 + $0x30] sm:$0xf]
      %v1213 = vld [vmem:[%s4 + $0x34] sm:$0xf]
      %v1214 = vld [vmem:[%s4 + $0x38] sm:$0xf]
      %v1215 = vld [vmem:[%s4 + $0x3c] sm:$0xf]
      %v1216 = vld [vmem:[%s4 + $0x40] sm:$0xf]
      %v1217 = vld [vmem:[%s4 + $0x44] sm:$0xf]
      %v1218 = vld [vmem:[%s4 + $0x48] sm:$0xf]
      %v1219 = vld [vmem:[%s4 + $0x4c] sm:$0xf]
      %v1220 = vld [vmem:[%s4 + $0x50] sm:$0xf]
      %v1221 = vld [vmem:[%s4 + $0x54] sm:$0xf]
      %v1222 = vld [vmem:[%s4 + $0x58] sm:$0xf]
      %v1223 = vld [vmem:[%s4 + $0x5c] sm:$0xf]
      %v1224 = vld [vmem:[%s4 + $0x60] sm:$0xf]
      %v1225 = vld [vmem:[%s4 + $0x64] sm:$0xf]
      %v1226 = vld [vmem:[%s4 + $0x68] sm:$0xf]
      %v1227 = vld [vmem:[%s4 + $0x6c] sm:$0xf]
      %v1228 = vld [vmem:[%s4 + $0x70] sm:$0xf]
      %v1229 = vld [vmem:[%s4 + $0x74] sm:$0xf]
      %v1230 = vld [vmem:[%s4 + $0x78] sm:$0xf]
      %v1231 = vld [vmem:[%s4 + $0x7c] sm:$0xf]
      %v1232 = vld [vmem:[%s4 + $0x80] sm:$0xf]
      %v1233 = vld [vmem:[%s4 + $0x84] sm:$0xf]
      %v1234 = vld [vmem:[%s4 + $0x88] sm:$0xf]
      %v1235 = vld [vmem:[%s4 + $0x8c] sm:$0xf]
      %v1236 = vld [vmem:[%s4 + $0x90] sm:$0xf]
      %v1237 = vld [vmem:[%s4 + $0x94] sm:$0xf]
      %v1238 = vld [vmem:[%s4 + $0x98] sm:$0xf]
      %v1239 = vld [vmem:[%s4 + $0x9c] sm:$0xf]
      %v1240 = vld [vmem:[%s4 + $0xa0] sm:$0xf]
      %v1241 = vld [vmem:[%s4 + $0xa4] sm:$0xf]
      %v1242 = vld [vmem:[%s4 + $0xa8] sm:$0xf]
      %v1243 = vld [vmem:[%s4 + $0xac] sm:$0xf]
      %v1244 = vld [vmem:[%s4 + $0xb0] sm:$0xf]
      %v1245 = vld [vmem:[%s4 + $0xb4] sm:$0xf]
      %v1246 = vld [vmem:[%s4 + $0xb8] sm:$0xf]
      %v1247 = vld [vmem:[%s4 + $0xbc] sm:$0xf]
      %v1248 = vld [vmem:[%s4 + $0xc0] sm:$0xf]
      %v1249 = vld [vmem:[%s4 + $0xc4] sm:$0xf]
      %v1250 = vld [vmem:[%s4 + $0xc8] sm:$0xf]
      %v1251 = vld [vmem:[%s4 + $0xcc] sm:$0xf]
      %v1252 = vld [vmem:[%s4 + $0xd0] sm:$0xf]
      %v1253 = vld [vmem:[%s4 + $0xd4] sm:$0xf]
      %v1254 = vld [vmem:[%s4 + $0xd8] sm:$0xf]
      %v1255 = vld [vmem:[%s4 + $0xdc] sm:$0xf]
      %v1256 = vld [vmem:[%s4 + $0xe0] sm:$0xf]
      %v1257 = vld [vmem:[%s4 + $0xe4] sm:$0xf]
      %v1258 = vld [vmem:[%s4 + $0xe8] sm:$0xf]
      %v1259 = vld [vmem:[%s4 + $0xec] sm:$0xf]
      %v1260 = vld [vmem:[%s4 + $0xf0] sm:$0xf]
      %v1261 = vld [vmem:[%s4 + $0xf4] sm:$0xf]
      %v1262 = vld [vmem:[%s4 + $0xf8] sm:$0xf]
      %v1263 = vld [vmem:[%s4 + $0xfc] sm:$0xf]
      %v1264 = vld [vmem:[%s4 + $0x100] sm:$0xf]
      %v1265 = vld [vmem:[%s4 + $0x104] sm:$0xf]
      %v1266 = vld [vmem:[%s4 + $0x108] sm:$0xf]
      %v1267 = vld [vmem:[%s4 + $0x10c] sm:$0xf]
      %v1268 = vld [vmem:[%s4 + $0x110] sm:$0xf]
      %v1269 = vld [vmem:[%s4 + $0x114] sm:$0xf]
      %v1270 = vld [vmem:[%s4 + $0x118] sm:$0xf]
      %v1271 = vld [vmem:[%s4 + $0x11c] sm:$0xf]
      %v1272 = vld [vmem:[%s5] sm:$0x1]
      %v1274 = vlaneseq
      %v1275 = vshrl.u32 %v1274, 7
      %v1276 = vsub.s32 0, %v1275
      %v1277 = vrot.slane %v1272, %v1276
      %v1351 = vunpack.c.l.b16 %v1200
      %v1352 = vunpack.c.l.b16 %v1201
      %v1353 = vunpack.c.l.b16 %v1202
      %v1354 = vunpack.c.l.b16 %v1203
      %v1355 = vunpack.c.l.b16 %v1204
      %v1356 = vunpack.c.l.b16 %v1205
      %v1357 = vunpack.c.l.b16 %v1206
      %v1358 = vunpack.c.l.b16 %v1207
      %v1359 = vunpack.c.l.b16 %v1208
      %v1360 = vunpack.c.l.b16 %v1209
      %v1361 = vunpack.c.l.b16 %v1210
      %v1362 = vunpack.c.l.b16 %v1211
      %v1363 = vunpack.c.l.b16 %v1212
      %v1364 = vunpack.c.l.b16 %v1213
      %v1365 = vunpack.c.l.b16 %v1214
      %v1366 = vunpack.c.l.b16 %v1215
      %v1367 = vunpack.c.l.b16 %v1216
      %v1368 = vunpack.c.l.b16 %v1217
      %v1369 = vunpack.c.l.b16 %v1218
      %v1370 = vunpack.c.l.b16 %v1219
      %v1371 = vunpack.c.l.b16 %v1220
      %v1372 = vunpack.c.l.b16 %v1221
      %v1373 = vunpack.c.l.b16 %v1222
      %v1374 = vunpack.c.l.b16 %v1223
      %v1375 = vunpack.c.l.b16 %v1224
      %v1376 = vunpack.c.l.b16 %v1225
      %v1377 = vunpack.c.l.b16 %v1226
      %v1378 = vunpack.c.l.b16 %v1227
      %v1379 = vunpack.c.l.b16 %v1228
      %v1380 = vunpack.c.l.b16 %v1229
      %v1381 = vunpack.c.l.b16 %v1230
      %v1382 = vunpack.c.l.b16 %v1231
      %v1383 = vunpack.c.l.b16 %v1232
      %v1384 = vunpack.c.l.b16 %v1233
      %v1385 = vunpack.c.l.b16 %v1234
      %v1386 = vunpack.c.l.b16 %v1235
      %v1387 = vunpack.c.l.b16 %v1236
      %v1388 = vunpack.c.l.b16 %v1237
      %v1389 = vunpack.c.l.b16 %v1238
      %v1390 = vunpack.c.l.b16 %v1239
      %v1391 = vunpack.c.l.b16 %v1240
      %v1392 = vunpack.c.l.b16 %v1241
      %v1393 = vunpack.c.l.b16 %v1242
      %v1394 = vunpack.c.l.b16 %v1243
      %v1395 = vunpack.c.l.b16 %v1244
      %v1396 = vunpack.c.l.b16 %v1245
      %v1397 = vunpack.c.l.b16 %v1246
      %v1398 = vunpack.c.l.b16 %v1247
      %v1399 = vunpack.c.l.b16 %v1248
      %v1400 = vunpack.c.l.b16 %v1249
      %v1401 = vunpack.c.l.b16 %v1250
      %v1402 = vunpack.c.l.b16 %v1251
      %v1403 = vunpack.c.l.b16 %v1252
      %v1404 = vunpack.c.l.b16 %v1253
      %v1405 = vunpack.c.l.b16 %v1254
      %v1406 = vunpack.c.l.b16 %v1255
      %v1407 = vunpack.c.l.b16 %v1256
      %v1408 = vunpack.c.l.b16 %v1257
      %v1409 = vunpack.c.l.b16 %v1258
      %v1410 = vunpack.c.l.b16 %v1259
      %v1411 = vunpack.c.l.b16 %v1260
      %v1412 = vunpack.c.l.b16 %v1261
      %v1413 = vunpack.c.l.b16 %v1262
      %v1414 = vunpack.c.l.b16 %v1263
      %v1415 = vunpack.c.l.b16 %v1264
      %v1416 = vunpack.c.l.b16 %v1265
      %v1417 = vunpack.c.l.b16 %v1266
      %v1418 = vunpack.c.l.b16 %v1267
      %v1419 = vunpack.c.l.b16 %v1268
      %v1420 = vunpack.c.l.b16 %v1269
      %v1421 = vunpack.c.l.b16 %v1270
      %v1422 = vunpack.c.l.b16 %v1271
      %v1423 = vpack.c.b16 %v1352, %v1351
      %v1424 = vpack.c.b16 %v1354, %v1353
      %v1425 = vpack.c.b16 %v1356, %v1355
      %v1426 = vpack.c.b16 %v1358, %v1357
      %v1427 = vpack.c.b16 %v1360, %v1359
      %v1428 = vpack.c.b16 %v1362, %v1361
      %v1429 = vpack.c.b16 %v1364, %v1363
      %v1430 = vpack.c.b16 %v1366, %v1365
      %v1431 = vpack.c.b16 %v1368, %v1367
      %v1432 = vpack.c.b16 %v1370, %v1369
      %v1433 = vpack.c.b16 %v1372, %v1371
      %v1434 = vpack.c.b16 %v1374, %v1373
      %v1435 = vpack.c.b16 %v1376, %v1375
      %v1436 = vpack.c.b16 %v1378, %v1377
      %v1437 = vpack.c.b16 %v1380, %v1379
      %v1438 = vpack.c.b16 %v1382, %v1381
      %v1439 = vpack.c.b16 %v1384, %v1383
      %v1440 = vpack.c.b16 %v1386, %v1385
      %v1441 = vpack.c.b16 %v1388, %v1387
      %v1442 = vpack.c.b16 %v1390, %v1389
      %v1443 = vpack.c.b16 %v1392, %v1391
      %v1444 = vpack.c.b16 %v1394, %v1393
      %v1445 = vpack.c.b16 %v1396, %v1395
      %v1446 = vpack.c.b16 %v1398, %v1397
      %v1447 = vpack.c.b16 %v1400, %v1399
      %v1448 = vpack.c.b16 %v1402, %v1401
      %v1449 = vpack.c.b16 %v1404, %v1403
      %v1450 = vpack.c.b16 %v1406, %v1405
      %v1451 = vpack.c.b16 %v1408, %v1407
      %v1452 = vpack.c.b16 %v1410, %v1409
      %v1453 = vpack.c.b16 %v1412, %v1411
      %v1454 = vpack.c.b16 %v1414, %v1413
      %v1455 = vpack.c.b16 %v1416, %v1415
      %v1456 = vpack.c.b16 %v1418, %v1417
      %v1457 = vpack.c.b16 %v1420, %v1419
      %v1458 = vpack.c.b16 %v1422, %v1421
      %v1496 = vsel %vm764, %v1199, 0
      %1498 = vmatprep.subr.bf16.mxu0 0
      %1499 = vmatpush1.bf16.msra.mxu0 %v1423
      %1500 = vmatprep.subr.bf16.mxu0 0
      %1501 = vmatpush1.bf16.msra.mxu0 %v1424
      %1502 = vmatprep.subr.bf16.mxu0 0
      %1503 = vmatpush1.bf16.msra.mxu0 %v1425
      %1504 = vmatprep.subr.bf16.mxu0 0
      %1505 = vmatpush1.bf16.msra.mxu0 %v1426
      %1506 = vmatprep.subr.bf16.mxu0 0
      %1507 = vmatpush1.bf16.msra.mxu0 %v1427
      %1508 = vmatprep.subr.bf16.mxu0 0
      %1509 = vmatpush1.bf16.msra.mxu0 %v1428
      %1510 = vmatprep.subr.bf16.mxu0 0
      %1511 = vmatpush1.bf16.msra.mxu0 %v1429
      %1512 = vmatprep.subr.bf16.mxu0 0
      %1513 = vmatpush1.bf16.msra.mxu0 %v1430
      %1514 = vmatprep.subr.bf16.mxu0 0
      %1515 = vmatpush1.bf16.msra.mxu0 %v1431
      %1516 = vmatprep.subr.bf16.mxu0 0
      %1517 = vmatpush1.bf16.msra.mxu0 %v1432
      %1518 = vmatprep.subr.bf16.mxu0 0
      %1519 = vmatpush1.bf16.msra.mxu0 %v1433
      %1520 = vmatprep.subr.bf16.mxu0 0
      %1521 = vmatpush1.bf16.msra.mxu0 %v1434
      %1522 = vmatprep.subr.bf16.mxu0 0
      %1523 = vmatpush1.bf16.msra.mxu0 %v1435
      %1524 = vmatprep.subr.bf16.mxu0 0
      %1525 = vmatpush1.bf16.msra.mxu0 %v1436
      %1526 = vmatprep.subr.bf16.mxu0 0
      %1527 = vmatpush1.bf16.msra.mxu0 %v1437
      %1528 = vmatprep.subr.bf16.mxu0 0
      %1529 = vmatpush1.bf16.msra.mxu0 %v1438
      %1530 = vmatprep.mubr.bf16.mxu0 %v1196
      %1531 = vmatmul.mubr.bf16.gmra.mrb[0].mxu0 %v1195
      %v1532 = vpop.f32.mrb[0].mxu0
      %v1533 = vadd.f32 %v1277, %v1532
      %v1534 = vpop.f32.mrb[0].mxu0
      %v1535 = vpop.f32.mrb[0].mxu0
      %v1536 = vadd.f32 %v1277, %v1535
      %v1537 = vpop.f32.mrb[0].mxu0
      %1538 = vdwg.mxu0
      %1539 = vmatprep.subr.bf16.mxu0 0
      %1540 = vmatpush1.bf16.msra.mxu0 %v1439
      %1541 = vmatprep.subr.bf16.mxu0 0
      %1542 = vmatpush1.bf16.msra.mxu0 %v1440
      %1543 = vmatprep.subr.bf16.mxu0 0
      %1544 = vmatpush1.bf16.msra.mxu0 %v1441
      %1545 = vmatprep.subr.bf16.mxu0 0
      %1546 = vmatpush1.bf16.msra.mxu0 %v1442
      %1547 = vmatprep.subr.bf16.mxu0 0
      %1548 = vmatpush1.bf16.msra.mxu0 %v1443
      %1549 = vmatprep.subr.bf16.mxu0 0
      %1550 = vmatpush1.bf16.msra.mxu0 %v1444
      %1551 = vmatprep.subr.bf16.mxu0 0
      %1552 = vmatpush1.bf16.msra.mxu0 %v1445
      %1553 = vmatprep.subr.bf16.mxu0 0
      %1554 = vmatpush1.bf16.msra.mxu0 %v1446
      %1555 = vmatprep.subr.bf16.mxu0 0
      %1556 = vmatpush1.bf16.msra.mxu0 %v1447
      %1557 = vmatprep.subr.bf16.mxu0 0
      %1558 = vmatpush1.bf16.msra.mxu0 %v1448
      %1559 = vmatprep.subr.bf16.mxu0 0
      %1560 = vmatpush1.bf16.msra.mxu0 %v1449
      %1561 = vmatprep.subr.bf16.mxu0 0
      %1562 = vmatpush1.bf16.msra.mxu0 %v1450
      %1563 = vmatprep.subr.bf16.mxu0 0
      %1564 = vmatpush1.bf16.msra.mxu0 %v1451
      %1565 = vmatprep.subr.bf16.mxu0 0
      %1566 = vmatpush1.bf16.msra.mxu0 %v1452
      %1567 = vmatprep.subr.bf16.mxu0 0
      %1568 = vmatpush1.bf16.msra.mxu0 %v1453
      %1569 = vmatprep.subr.bf16.mxu0 0
      %1570 = vmatpush1.bf16.msra.mxu0 %v1454
      %1571 = vmatprep.mubr.bf16.mxu0 %v1198
      %1572 = vmatmul.mubr.bf16.gmra.mrb[0].mxu0 %v1197
      %v1573 = vpop.f32.mrb[0].mxu0
      %v1574 = vadd.f32 %v1533, %v1573
      %v1575 = vpop.f32.mrb[0].mxu0
      %v1576 = vpop.f32.mrb[0].mxu0
      %v1577 = vadd.f32 %v1536, %v1576
      %v1578 = vpop.f32.mrb[0].mxu0
      %1579 = vdwg.mxu0
      %1580 = vmatprep.subr.bf16.mxu0 0
      %1581 = vmatpush1.bf16.msra.mxu0 %v1455
      %1582 = vmatprep.subr.bf16.mxu0 0
      %1583 = vmatpush1.bf16.msra.mxu0 %v1456
      %1584 = vmatprep.subr.bf16.mxu0 0
      %1585 = vmatpush1.bf16.msra.mxu0 %v1457
      %1586 = vmatprep.subr.bf16.mxu0 0
      %1587 = vmatpush1.bf16.msra.mxu0 %v1458
      %1588 = vmatprep.subr.bf16.mxu0 0
      %1589 = vmatpush1.bf16.msra.mxu0 0
      %1590 = vmatprep.subr.bf16.mxu0 0
      %1591 = vmatpush1.bf16.msra.mxu0 0
      %1592 = vmatprep.subr.bf16.mxu0 0
      %1593 = vmatpush1.bf16.msra.mxu0 0
      %1594 = vmatprep.subr.bf16.mxu0 0
      %1595 = vmatpush1.bf16.msra.mxu0 0
      %1596 = vmatprep.subr.bf16.mxu0 0
      %1597 = vmatpush1.bf16.msra.mxu0 0
      %1598 = vmatprep.subr.bf16.mxu0 0
      %1599 = vmatpush1.bf16.msra.mxu0 0
      %1600 = vmatprep.subr.bf16.mxu0 0
      %1601 = vmatpush1.bf16.msra.mxu0 0
      %1602 = vmatprep.subr.bf16.mxu0 0
      %1603 = vmatpush1.bf16.msra.mxu0 0
      %1604 = vmatprep.subr.bf16.mxu0 0
      %1605 = vmatpush1.bf16.msra.mxu0 0
      %1606 = vmatprep.subr.bf16.mxu0 0
      %1607 = vmatpush1.bf16.msra.mxu0 0
      %1608 = vmatprep.subr.bf16.mxu0 0
      %1609 = vmatpush1.bf16.msra.mxu0 0
      %1610 = vmatprep.subr.bf16.mxu0 0
      %1611 = vmatpush1.bf16.msra.mxu0 0
      %1612 = vmatprep.mubr.bf16.mxu0 0
      %1613 = vmatmul.mubr.bf16.gmra.mrb[0].mxu0 %v1496
      %v1614 = vpop.f32.mrb[0].mxu0
      %v1615 = vadd.f32 %v1574, %v1614
      %v1616 = vpop.f32.mrb[0].mxu0
      %v1617 = vpop.f32.mrb[0].mxu0
      %v1618 = vadd.f32 %v1577, %v1617
      %v1619 = vpop.f32.mrb[0].mxu0
      %1620 = vdwg.mxu0
      %v1621 = vxor.u32 %v1615, 2147483648
      %v1622 = vxor.u32 %v1618, 2147483648
      %v1623 = vmul.f32 %v1621, 1.442695
      %v1624 = vpow.pop %v1623
      %v1625 = vmul.f32 %v1622, 1.442695
      %v1626 = vpow.pop %v1625
      %v1627 = vadd.f32 %v1624, 1.0
      %v1628 = vadd.f32 %v1626, 1.0
      %v1629 = vrcp.pop %v1627
      %v1630 = vmul.f32 1.0, %v1629
      %v1631 = vrcp.pop %v1628
      %v1632 = vmul.f32 1.0, %v1631
      %v1633 = vmul.f32 %v1615, %v1630
      %v1634 = vmul.f32 %v1618, %v1632
      %v1637 = vrot.slane %v1633, 3
      %v1638 = vrot.slane %v1634, 3
      %v1639 = vsel %vm632, %v1637, %v1638
      %v1643 = vsel %vm632, 0.0, %v1637
      %v1644 = vsel %vm632, %v1638, 0.0
      %v1645 = vsel %vm643, %v1643, 0.0
      %v1646 = vsel %vm644, %v1639, 0.0
      %v1649 = vrot.slane %v1643, 2
      %v1650 = vrot.slane %v1639, 2
      %v1651 = vsel %vm653, %v1649, %v1650
      %v1652 = vrot.slane %v1644, 2
      %v1653 = vsel %vm653, %v1650, %v1652
      %v1656 = vsel %vm649, %v1651, 0.0
      %v1657 = vsel %vm650, %v1653, 0.0
      %v1658 = vrot.slane %v1643, 4
      %v1659 = vrot.slane %v1639, 4
      %v1660 = vsel %vm663, %v1658, %v1659
      %v1661 = vrot.slane %v1644, 4
      %v1662 = vsel %vm663, %v1659, %v1661
      %v1665 = vsel %vm643, %v1660, 0.0
      %v1666 = vsel %vm644, %v1662, 0.0
      %v1667 = vrot.slane %v1643, 6
      %v1668 = vrot.slane %v1639, 6
      %v1669 = vsel %vm673, %v1667, %v1668
      %v1670 = vrot.slane %v1644, 6
      %v1671 = vsel %vm673, %v1668, %v1670
      %v1674 = vsel %vm649, %v1669, 0.0
      %v1675 = vsel %vm650, %v1671, 0.0
      %v1676 = vsel %vm643, %v1639, 0.0
      %v1677 = vsel %vm644, %v1644, 0.0
      %v1678 = vsel %vm653, %v1652, %v686
      %v1680 = vsel %vm649, %v1653, 0.0
      %v1681 = vsel %vm650, %v1678, 0.0
      %v1682 = vrot.slane %v1643, 1
      %v1683 = vrot.slane %v1639, 1
      %v1684 = vsel %vm691, %v1682, %v1683
      %v1685 = vrot.slane %v1644, 1
      %v1686 = vsel %vm691, %v1683, %v1685
      %1687 = vrot.lane.b32.xlu0 %v1684, 64
      %v1688 = vpop.permute.xlu0 %1687
      %1689 = vrot.lane.b32.xlu0 %v1686, 64
      %v1690 = vpop.permute.xlu0 %1689
      %1695 = vrot.lane.b32.xlu0 %v1665, 64
      %v1696 = vpop.permute.xlu0 %1695
      %1697 = vrot.lane.b32.xlu0 %v1666, 64
      %v1698 = vpop.permute.xlu0 %1697
      %v1701 = vrot.slane %v1643, 5
      %v1702 = vrot.slane %v1639, 5
      %v1703 = vsel %vm719, %v1701, %v1702
      %v1704 = vrot.slane %v1644, 5
      %v1705 = vsel %vm719, %v1702, %v1704
      %1710 = vrot.lane.b32.xlu0 %v1674, 64
      %v1711 = vpop.permute.xlu0 %1710
      %1712 = vrot.lane.b32.xlu0 %v1675, 64
      %v1713 = vpop.permute.xlu0 %1712
      %v1716 = vsel %vm691, %v1685, %v747
      %1717 = vrot.lane.b32.xlu0 %v1716, 64
      %v1718 = vpop.permute.xlu0 %1717
      %v1720 = vsel %vm764, %v1645, %v1688
      %v1721 = vsel %vm764, %v1646, %v1690
      %v1722 = vsel %vm764, %v1656, %v1696
      %v1723 = vsel %vm764, %v1657, %v1698
      %v1724 = vsel %vm764, %v1703, %v1711
      %v1725 = vsel %vm764, %v1705, %v1713
      %v1726 = vsel %vm764, %v1676, %v1690
      %v1727 = vsel %vm764, %v1677, %v1718
      %v1728 = vpack.c.bf16 %v1721, %v1720
      %v1729 = vpack.c.bf16 %v1723, %v1722
      %v1730 = vpack.c.bf16 %v1725, %v1724
      %v1731 = vpack.c.bf16 %v1727, %v1726
      %v1732 = vpack.c.bf16 %v1681, %v1680
      %v1733 = vld [vmem:[%s6] sm:$0xf]
      %v1734 = vld [vmem:[%s6 + $0x4] sm:$0xf]
      %v1735 = vld [vmem:[%s6 + $0x8] sm:$0xf]
      %v1736 = vld [vmem:[%s6 + $0xc] sm:$0xf]
      %v1737 = vld [vmem:[%s6 + $0x10] sm:$0xf]
      %v1738 = vld [vmem:[%s6 + $0x14] sm:$0xf]
      %v1739 = vld [vmem:[%s6 + $0x18] sm:$0xf]
      %v1740 = vld [vmem:[%s6 + $0x1c] sm:$0xf]
      %v1741 = vld [vmem:[%s6 + $0x20] sm:$0xf]
      %v1742 = vld [vmem:[%s6 + $0x24] sm:$0xf]
      %v1743 = vld [vmem:[%s6 + $0x28] sm:$0xf]
      %v1744 = vld [vmem:[%s6 + $0x2c] sm:$0xf]
      %v1745 = vld [vmem:[%s6 + $0x30] sm:$0xf]
      %v1746 = vld [vmem:[%s6 + $0x34] sm:$0xf]
      %v1747 = vld [vmem:[%s6 + $0x38] sm:$0xf]
      %v1748 = vld [vmem:[%s6 + $0x3c] sm:$0xf]
      %v1749 = vld [vmem:[%s6 + $0x40] sm:$0xf]
      %v1750 = vld [vmem:[%s6 + $0x44] sm:$0xf]
      %v1751 = vld [vmem:[%s6 + $0x48] sm:$0xf]
      %v1752 = vld [vmem:[%s6 + $0x4c] sm:$0xf]
      %v1753 = vld [vmem:[%s6 + $0x50] sm:$0xf]
      %v1754 = vld [vmem:[%s6 + $0x54] sm:$0xf]
      %v1755 = vld [vmem:[%s6 + $0x58] sm:$0xf]
      %v1756 = vld [vmem:[%s6 + $0x5c] sm:$0xf]
      %v1757 = vld [vmem:[%s6 + $0x60] sm:$0xf]
      %v1758 = vld [vmem:[%s6 + $0x64] sm:$0xf]
      %v1759 = vld [vmem:[%s6 + $0x68] sm:$0xf]
      %v1760 = vld [vmem:[%s6 + $0x6c] sm:$0xf]
      %v1761 = vld [vmem:[%s6 + $0x70] sm:$0xf]
      %v1762 = vld [vmem:[%s6 + $0x74] sm:$0xf]
      %v1763 = vld [vmem:[%s6 + $0x78] sm:$0xf]
      %v1764 = vld [vmem:[%s6 + $0x7c] sm:$0xf]
      %v1765 = vld [vmem:[%s6 + $0x80] sm:$0xf]
      %v1766 = vld [vmem:[%s6 + $0x84] sm:$0xf]
      %v1767 = vld [vmem:[%s6 + $0x88] sm:$0xf]
      %v1768 = vld [vmem:[%s6 + $0x8c] sm:$0xf]
      %v1769 = vld [vmem:[%s6 + $0x90] sm:$0xf]
      %v1770 = vld [vmem:[%s6 + $0x94] sm:$0xf]
      %v1771 = vld [vmem:[%s6 + $0x98] sm:$0xf]
      %v1772 = vld [vmem:[%s6 + $0x9c] sm:$0xf]
      %v1773 = vld [vmem:[%s6 + $0xa0] sm:$0xf]
      %v1774 = vld [vmem:[%s6 + $0xa4] sm:$0xf]
      %v1775 = vld [vmem:[%s6 + $0xa8] sm:$0xf]
      %v1776 = vld [vmem:[%s6 + $0xac] sm:$0xf]
      %v1777 = vld [vmem:[%s6 + $0xb0] sm:$0xf]
      %v1778 = vld [vmem:[%s6 + $0xb4] sm:$0xf]
      %v1779 = vld [vmem:[%s6 + $0xb8] sm:$0xf]
      %v1780 = vld [vmem:[%s6 + $0xbc] sm:$0xf]
      %v1781 = vld [vmem:[%s6 + $0xc0] sm:$0xf]
      %v1782 = vld [vmem:[%s6 + $0xc4] sm:$0xf]
      %v1783 = vld [vmem:[%s6 + $0xc8] sm:$0xf]
      %v1784 = vld [vmem:[%s6 + $0xcc] sm:$0xf]
      %v1785 = vld [vmem:[%s6 + $0xd0] sm:$0xf]
      %v1786 = vld [vmem:[%s6 + $0xd4] sm:$0xf]
      %v1787 = vld [vmem:[%s6 + $0xd8] sm:$0xf]
      %v1788 = vld [vmem:[%s6 + $0xdc] sm:$0xf]
      %v1789 = vld [vmem:[%s6 + $0xe0] sm:$0xf]
      %v1790 = vld [vmem:[%s6 + $0xe4] sm:$0xf]
      %v1791 = vld [vmem:[%s6 + $0xe8] sm:$0xf]
      %v1792 = vld [vmem:[%s6 + $0xec] sm:$0xf]
      %v1793 = vld [vmem:[%s6 + $0xf0] sm:$0xf]
      %v1794 = vld [vmem:[%s6 + $0xf4] sm:$0xf]
      %v1795 = vld [vmem:[%s6 + $0xf8] sm:$0xf]
      %v1796 = vld [vmem:[%s6 + $0xfc] sm:$0xf]
      %v1797 = vld [vmem:[%s6 + $0x100] sm:$0xf]
      %v1798 = vld [vmem:[%s6 + $0x104] sm:$0xf]
      %v1799 = vld [vmem:[%s6 + $0x108] sm:$0xf]
      %v1800 = vld [vmem:[%s6 + $0x10c] sm:$0xf]
      %v1801 = vld [vmem:[%s6 + $0x110] sm:$0xf]
      %v1802 = vld [vmem:[%s6 + $0x114] sm:$0xf]
      %v1803 = vld [vmem:[%s6 + $0x118] sm:$0xf]
      %v1804 = vld [vmem:[%s6 + $0x11c] sm:$0xf]
      %v1805 = vld [vmem:[%s7] sm:$0x1]
      %v1807 = vlaneseq
      %v1808 = vshrl.u32 %v1807, 7
      %v1809 = vsub.s32 0, %v1808
      %v1810 = vrot.slane %v1805, %v1809
      %v1884 = vunpack.c.l.b16 %v1733
      %v1885 = vunpack.c.l.b16 %v1734
      %v1886 = vunpack.c.l.b16 %v1735
      %v1887 = vunpack.c.l.b16 %v1736
      %v1888 = vunpack.c.l.b16 %v1737
      %v1889 = vunpack.c.l.b16 %v1738
      %v1890 = vunpack.c.l.b16 %v1739
      %v1891 = vunpack.c.l.b16 %v1740
      %v1892 = vunpack.c.l.b16 %v1741
      %v1893 = vunpack.c.l.b16 %v1742
      %v1894 = vunpack.c.l.b16 %v1743
      %v1895 = vunpack.c.l.b16 %v1744
      %v1896 = vunpack.c.l.b16 %v1745
      %v1897 = vunpack.c.l.b16 %v1746
      %v1898 = vunpack.c.l.b16 %v1747
      %v1899 = vunpack.c.l.b16 %v1748
      %v1900 = vunpack.c.l.b16 %v1749
      %v1901 = vunpack.c.l.b16 %v1750
      %v1902 = vunpack.c.l.b16 %v1751
      %v1903 = vunpack.c.l.b16 %v1752
      %v1904 = vunpack.c.l.b16 %v1753
      %v1905 = vunpack.c.l.b16 %v1754
      %v1906 = vunpack.c.l.b16 %v1755
      %v1907 = vunpack.c.l.b16 %v1756
      %v1908 = vunpack.c.l.b16 %v1757
      %v1909 = vunpack.c.l.b16 %v1758
      %v1910 = vunpack.c.l.b16 %v1759
      %v1911 = vunpack.c.l.b16 %v1760
      %v1912 = vunpack.c.l.b16 %v1761
      %v1913 = vunpack.c.l.b16 %v1762
      %v1914 = vunpack.c.l.b16 %v1763
      %v1915 = vunpack.c.l.b16 %v1764
      %v1916 = vunpack.c.l.b16 %v1765
      %v1917 = vunpack.c.l.b16 %v1766
      %v1918 = vunpack.c.l.b16 %v1767
      %v1919 = vunpack.c.l.b16 %v1768
      %v1920 = vunpack.c.l.b16 %v1769
      %v1921 = vunpack.c.l.b16 %v1770
      %v1922 = vunpack.c.l.b16 %v1771
      %v1923 = vunpack.c.l.b16 %v1772
      %v1924 = vunpack.c.l.b16 %v1773
      %v1925 = vunpack.c.l.b16 %v1774
      %v1926 = vunpack.c.l.b16 %v1775
      %v1927 = vunpack.c.l.b16 %v1776
      %v1928 = vunpack.c.l.b16 %v1777
      %v1929 = vunpack.c.l.b16 %v1778
      %v1930 = vunpack.c.l.b16 %v1779
      %v1931 = vunpack.c.l.b16 %v1780
      %v1932 = vunpack.c.l.b16 %v1781
      %v1933 = vunpack.c.l.b16 %v1782
      %v1934 = vunpack.c.l.b16 %v1783
      %v1935 = vunpack.c.l.b16 %v1784
      %v1936 = vunpack.c.l.b16 %v1785
      %v1937 = vunpack.c.l.b16 %v1786
      %v1938 = vunpack.c.l.b16 %v1787
      %v1939 = vunpack.c.l.b16 %v1788
      %v1940 = vunpack.c.l.b16 %v1789
      %v1941 = vunpack.c.l.b16 %v1790
      %v1942 = vunpack.c.l.b16 %v1791
      %v1943 = vunpack.c.l.b16 %v1792
      %v1944 = vunpack.c.l.b16 %v1793
      %v1945 = vunpack.c.l.b16 %v1794
      %v1946 = vunpack.c.l.b16 %v1795
      %v1947 = vunpack.c.l.b16 %v1796
      %v1948 = vunpack.c.l.b16 %v1797
      %v1949 = vunpack.c.l.b16 %v1798
      %v1950 = vunpack.c.l.b16 %v1799
      %v1951 = vunpack.c.l.b16 %v1800
      %v1952 = vunpack.c.l.b16 %v1801
      %v1953 = vunpack.c.l.b16 %v1802
      %v1954 = vunpack.c.l.b16 %v1803
      %v1955 = vunpack.c.l.b16 %v1804
      %v1956 = vpack.c.b16 %v1885, %v1884
      %v1957 = vpack.c.b16 %v1887, %v1886
      %v1958 = vpack.c.b16 %v1889, %v1888
      %v1959 = vpack.c.b16 %v1891, %v1890
      %v1960 = vpack.c.b16 %v1893, %v1892
      %v1961 = vpack.c.b16 %v1895, %v1894
      %v1962 = vpack.c.b16 %v1897, %v1896
      %v1963 = vpack.c.b16 %v1899, %v1898
      %v1964 = vpack.c.b16 %v1901, %v1900
      %v1965 = vpack.c.b16 %v1903, %v1902
      %v1966 = vpack.c.b16 %v1905, %v1904
      %v1967 = vpack.c.b16 %v1907, %v1906
      %v1968 = vpack.c.b16 %v1909, %v1908
      %v1969 = vpack.c.b16 %v1911, %v1910
      %v1970 = vpack.c.b16 %v1913, %v1912
      %v1971 = vpack.c.b16 %v1915, %v1914
      %v1972 = vpack.c.b16 %v1917, %v1916
      %v1973 = vpack.c.b16 %v1919, %v1918
      %v1974 = vpack.c.b16 %v1921, %v1920
      %v1975 = vpack.c.b16 %v1923, %v1922
      %v1976 = vpack.c.b16 %v1925, %v1924
      %v1977 = vpack.c.b16 %v1927, %v1926
      %v1978 = vpack.c.b16 %v1929, %v1928
      %v1979 = vpack.c.b16 %v1931, %v1930
      %v1980 = vpack.c.b16 %v1933, %v1932
      %v1981 = vpack.c.b16 %v1935, %v1934
      %v1982 = vpack.c.b16 %v1937, %v1936
      %v1983 = vpack.c.b16 %v1939, %v1938
      %v1984 = vpack.c.b16 %v1941, %v1940
      %v1985 = vpack.c.b16 %v1943, %v1942
      %v1986 = vpack.c.b16 %v1945, %v1944
      %v1987 = vpack.c.b16 %v1947, %v1946
      %v1988 = vpack.c.b16 %v1949, %v1948
      %v1989 = vpack.c.b16 %v1951, %v1950
      %v1990 = vpack.c.b16 %v1953, %v1952
      %v1991 = vpack.c.b16 %v1955, %v1954
      %v2029 = vsel %vm764, %v1732, 0
      %2031 = vmatprep.subr.bf16.mxu0 0
      %2032 = vmatpush1.bf16.msra.mxu0 %v1956
      %2033 = vmatprep.subr.bf16.mxu0 0
      %2034 = vmatpush1.bf16.msra.mxu0 %v1957
      %2035 = vmatprep.subr.bf16.mxu0 0
      %2036 = vmatpush1.bf16.msra.mxu0 %v1958
      %2037 = vmatprep.subr.bf16.mxu0 0
      %2038 = vmatpush1.bf16.msra.mxu0 %v1959
      %2039 = vmatprep.subr.bf16.mxu0 0
      %2040 = vmatpush1.bf16.msra.mxu0 %v1960
      %2041 = vmatprep.subr.bf16.mxu0 0
      %2042 = vmatpush1.bf16.msra.mxu0 %v1961
      %2043 = vmatprep.subr.bf16.mxu0 0
      %2044 = vmatpush1.bf16.msra.mxu0 %v1962
      %2045 = vmatprep.subr.bf16.mxu0 0
      %2046 = vmatpush1.bf16.msra.mxu0 %v1963
      %2047 = vmatprep.subr.bf16.mxu0 0
      %2048 = vmatpush1.bf16.msra.mxu0 %v1964
      %2049 = vmatprep.subr.bf16.mxu0 0
      %2050 = vmatpush1.bf16.msra.mxu0 %v1965
      %2051 = vmatprep.subr.bf16.mxu0 0
      %2052 = vmatpush1.bf16.msra.mxu0 %v1966
      %2053 = vmatprep.subr.bf16.mxu0 0
      %2054 = vmatpush1.bf16.msra.mxu0 %v1967
      %2055 = vmatprep.subr.bf16.mxu0 0
      %2056 = vmatpush1.bf16.msra.mxu0 %v1968
      %2057 = vmatprep.subr.bf16.mxu0 0
      %2058 = vmatpush1.bf16.msra.mxu0 %v1969
      %2059 = vmatprep.subr.bf16.mxu0 0
      %2060 = vmatpush1.bf16.msra.mxu0 %v1970
      %2061 = vmatprep.subr.bf16.mxu0 0
      %2062 = vmatpush1.bf16.msra.mxu0 %v1971
      %2063 = vmatprep.mubr.bf16.mxu0 %v1729
      %2064 = vmatmul.mubr.bf16.gmra.mrb[0].mxu0 %v1728
      %v2065 = vpop.f32.mrb[0].mxu0
      %v2066 = vadd.f32 %v1810, %v2065
      %v2067 = vpop.f32.mrb[0].mxu0
      %v2068 = vpop.f32.mrb[0].mxu0
      %v2069 = vadd.f32 %v1810, %v2068
      %v2070 = vpop.f32.mrb[0].mxu0
      %2071 = vdwg.mxu0
      %2072 = vmatprep.subr.bf16.mxu0 0
      %2073 = vmatpush1.bf16.msra.mxu0 %v1972
      %2074 = vmatprep.subr.bf16.mxu0 0
      %2075 = vmatpush1.bf16.msra.mxu0 %v1973
      %2076 = vmatprep.subr.bf16.mxu0 0
      %2077 = vmatpush1.bf16.msra.mxu0 %v1974
      %2078 = vmatprep.subr.bf16.mxu0 0
      %2079 = vmatpush1.bf16.msra.mxu0 %v1975
      %2080 = vmatprep.subr.bf16.mxu0 0
      %2081 = vmatpush1.bf16.msra.mxu0 %v1976
      %2082 = vmatprep.subr.bf16.mxu0 0
      %2083 = vmatpush1.bf16.msra.mxu0 %v1977
      %2084 = vmatprep.subr.bf16.mxu0 0
      %2085 = vmatpush1.bf16.msra.mxu0 %v1978
      %2086 = vmatprep.subr.bf16.mxu0 0
      %2087 = vmatpush1.bf16.msra.mxu0 %v1979
      %2088 = vmatprep.subr.bf16.mxu0 0
      %2089 = vmatpush1.bf16.msra.mxu0 %v1980
      %2090 = vmatprep.subr.bf16.mxu0 0
      %2091 = vmatpush1.bf16.msra.mxu0 %v1981
      %2092 = vmatprep.subr.bf16.mxu0 0
      %2093 = vmatpush1.bf16.msra.mxu0 %v1982
      %2094 = vmatprep.subr.bf16.mxu0 0
      %2095 = vmatpush1.bf16.msra.mxu0 %v1983
      %2096 = vmatprep.subr.bf16.mxu0 0
      %2097 = vmatpush1.bf16.msra.mxu0 %v1984
      %2098 = vmatprep.subr.bf16.mxu0 0
      %2099 = vmatpush1.bf16.msra.mxu0 %v1985
      %2100 = vmatprep.subr.bf16.mxu0 0
      %2101 = vmatpush1.bf16.msra.mxu0 %v1986
      %2102 = vmatprep.subr.bf16.mxu0 0
      %2103 = vmatpush1.bf16.msra.mxu0 %v1987
      %2104 = vmatprep.mubr.bf16.mxu0 %v1731
      %2105 = vmatmul.mubr.bf16.gmra.mrb[0].mxu0 %v1730
      %v2106 = vpop.f32.mrb[0].mxu0
      %v2107 = vadd.f32 %v2066, %v2106
      %v2108 = vpop.f32.mrb[0].mxu0
      %v2109 = vpop.f32.mrb[0].mxu0
      %v2110 = vadd.f32 %v2069, %v2109
      %v2111 = vpop.f32.mrb[0].mxu0
      %2112 = vdwg.mxu0
      %2113 = vmatprep.subr.bf16.mxu0 0
      %2114 = vmatpush1.bf16.msra.mxu0 %v1988
      %2115 = vmatprep.subr.bf16.mxu0 0
      %2116 = vmatpush1.bf16.msra.mxu0 %v1989
      %2117 = vmatprep.subr.bf16.mxu0 0
      %2118 = vmatpush1.bf16.msra.mxu0 %v1990
      %2119 = vmatprep.subr.bf16.mxu0 0
      %2120 = vmatpush1.bf16.msra.mxu0 %v1991
      %2121 = vmatprep.subr.bf16.mxu0 0
      %2122 = vmatpush1.bf16.msra.mxu0 0
      %2123 = vmatprep.subr.bf16.mxu0 0
      %2124 = vmatpush1.bf16.msra.mxu0 0
      %2125 = vmatprep.subr.bf16.mxu0 0
      %2126 = vmatpush1.bf16.msra.mxu0 0
      %2127 = vmatprep.subr.bf16.mxu0 0
      %2128 = vmatpush1.bf16.msra.mxu0 0
      %2129 = vmatprep.subr.bf16.mxu0 0
      %2130 = vmatpush1.bf16.msra.mxu0 0
      %2131 = vmatprep.subr.bf16.mxu0 0
      %2132 = vmatpush1.bf16.msra.mxu0 0
      %2133 = vmatprep.subr.bf16.mxu0 0
      %2134 = vmatpush1.bf16.msra.mxu0 0
      %2135 = vmatprep.subr.bf16.mxu0 0
      %2136 = vmatpush1.bf16.msra.mxu0 0
      %2137 = vmatprep.subr.bf16.mxu0 0
      %2138 = vmatpush1.bf16.msra.mxu0 0
      %2139 = vmatprep.subr.bf16.mxu0 0
      %2140 = vmatpush1.bf16.msra.mxu0 0
      %2141 = vmatprep.subr.bf16.mxu0 0
      %2142 = vmatpush1.bf16.msra.mxu0 0
      %2143 = vmatprep.subr.bf16.mxu0 0
      %2144 = vmatpush1.bf16.msra.mxu0 0
      %2145 = vmatprep.mubr.bf16.mxu0 0
      %2146 = vmatmul.mubr.bf16.gmra.mrb[0].mxu0 %v2029
      %v2147 = vpop.f32.mrb[0].mxu0
      %v2148 = vadd.f32 %v2107, %v2147
      %v2149 = vpop.f32.mrb[0].mxu0
      %v2150 = vpop.f32.mrb[0].mxu0
      %v2151 = vadd.f32 %v2110, %v2150
      %v2152 = vpop.f32.mrb[0].mxu0
      %2153 = vdwg.mxu0
      %v2154 = vxor.u32 %v2148, 2147483648
      %v2155 = vxor.u32 %v2151, 2147483648
      %v2156 = vmul.f32 %v2154, 1.442695
      %v2157 = vpow.pop %v2156
      %v2158 = vmul.f32 %v2155, 1.442695
      %v2159 = vpow.pop %v2158
      %v2160 = vadd.f32 %v2157, 1.0
      %v2161 = vadd.f32 %v2159, 1.0
      %v2162 = vrcp.pop %v2160
      %v2163 = vmul.f32 1.0, %v2162
      %v2164 = vrcp.pop %v2161
      %v2165 = vmul.f32 1.0, %v2164
      %v2166 = vmul.f32 %v2148, %v2163
      %v2167 = vmul.f32 %v2151, %v2165
      %v2170 = vrot.slane %v2166, 3
      %v2171 = vrot.slane %v2167, 3
      %v2172 = vsel %vm632, %v2170, %v2171
      %v2176 = vsel %vm632, 0.0, %v2170
      %v2177 = vsel %vm632, %v2171, 0.0
      %v2178 = vsel %vm643, %v2176, 0.0
      %v2179 = vsel %vm644, %v2172, 0.0
      %v2182 = vrot.slane %v2176, 2
      %v2183 = vrot.slane %v2172, 2
      %v2184 = vsel %vm653, %v2182, %v2183
      %v2185 = vrot.slane %v2177, 2
      %v2186 = vsel %vm653, %v2183, %v2185
      %v2189 = vsel %vm649, %v2184, 0.0
      %v2190 = vsel %vm650, %v2186, 0.0
      %v2191 = vrot.slane %v2176, 4
      %v2192 = vrot.slane %v2172, 4
      %v2193 = vsel %vm663, %v2191, %v2192
      %v2194 = vrot.slane %v2177, 4
      %v2195 = vsel %vm663, %v2192, %v2194
      %v2198 = vsel %vm643, %v2193, 0.0
      %v2199 = vsel %vm644, %v2195, 0.0
      %v2200 = vrot.slane %v2176, 6
      %v2201 = vrot.slane %v2172, 6
      %v2202 = vsel %vm673, %v2200, %v2201
      %v2203 = vrot.slane %v2177, 6
      %v2204 = vsel %vm673, %v2201, %v2203
      %v2207 = vsel %vm649, %v2202, 0.0
      %v2208 = vsel %vm650, %v2204, 0.0
      %v2209 = vsel %vm643, %v2172, 0.0
      %v2210 = vsel %vm644, %v2177, 0.0
      %v2211 = vsel %vm653, %v2185, %v686
      %v2213 = vsel %vm649, %v2186, 0.0
      %v2214 = vsel %vm650, %v2211, 0.0
      %v2215 = vrot.slane %v2176, 1
      %v2216 = vrot.slane %v2172, 1
      %v2217 = vsel %vm691, %v2215, %v2216
      %v2218 = vrot.slane %v2177, 1
      %v2219 = vsel %vm691, %v2216, %v2218
      %2220 = vrot.lane.b32.xlu0 %v2217, 64
      %v2221 = vpop.permute.xlu0 %2220
      %2222 = vrot.lane.b32.xlu0 %v2219, 64
      %v2223 = vpop.permute.xlu0 %2222
      %2228 = vrot.lane.b32.xlu0 %v2198, 64
      %v2229 = vpop.permute.xlu0 %2228
      %2230 = vrot.lane.b32.xlu0 %v2199, 64
      %v2231 = vpop.permute.xlu0 %2230
      %v2234 = vrot.slane %v2176, 5
      %v2235 = vrot.slane %v2172, 5
      %v2236 = vsel %vm719, %v2234, %v2235
      %v2237 = vrot.slane %v2177, 5
      %v2238 = vsel %vm719, %v2235, %v2237
      %2243 = vrot.lane.b32.xlu0 %v2207, 64
      %v2244 = vpop.permute.xlu0 %2243
      %2245 = vrot.lane.b32.xlu0 %v2208, 64
      %v2246 = vpop.permute.xlu0 %2245
      %v2249 = vsel %vm691, %v2218, %v747
      %2250 = vrot.lane.b32.xlu0 %v2249, 64
      %v2251 = vpop.permute.xlu0 %2250
      %v2253 = vsel %vm764, %v2178, %v2221
      %v2254 = vsel %vm764, %v2179, %v2223
      %v2255 = vsel %vm764, %v2189, %v2229
      %v2256 = vsel %vm764, %v2190, %v2231
      %v2257 = vsel %vm764, %v2236, %v2244
      %v2258 = vsel %vm764, %v2238, %v2246
      %v2259 = vsel %vm764, %v2209, %v2223
      %v2260 = vsel %vm764, %v2210, %v2251
      %v2261 = vpack.c.bf16 %v2254, %v2253
      %v2262 = vpack.c.bf16 %v2256, %v2255
      %v2263 = vpack.c.bf16 %v2258, %v2257
      %v2264 = vpack.c.bf16 %v2260, %v2259
      %v2265 = vpack.c.bf16 %v2214, %v2213
      %v2266 = vld [vmem:[%s8] sm:$0xf]
      %v2267 = vld [vmem:[%s8 + $0x4] sm:$0xf]
      %v2268 = vld [vmem:[%s8 + $0x8] sm:$0xf]
      %v2269 = vld [vmem:[%s8 + $0xc] sm:$0xf]
      %v2270 = vld [vmem:[%s8 + $0x10] sm:$0xf]
      %v2271 = vld [vmem:[%s8 + $0x14] sm:$0xf]
      %v2272 = vld [vmem:[%s8 + $0x18] sm:$0xf]
      %v2273 = vld [vmem:[%s8 + $0x1c] sm:$0xf]
      %v2274 = vld [vmem:[%s8 + $0x20] sm:$0xf]
      %v2275 = vld [vmem:[%s8 + $0x24] sm:$0xf]
      %v2276 = vld [vmem:[%s8 + $0x28] sm:$0xf]
      %v2277 = vld [vmem:[%s8 + $0x2c] sm:$0xf]
      %v2278 = vld [vmem:[%s8 + $0x30] sm:$0xf]
      %v2279 = vld [vmem:[%s8 + $0x34] sm:$0xf]
      %v2280 = vld [vmem:[%s8 + $0x38] sm:$0xf]
      %v2281 = vld [vmem:[%s8 + $0x3c] sm:$0xf]
      %v2282 = vld [vmem:[%s8 + $0x40] sm:$0xf]
      %v2283 = vld [vmem:[%s8 + $0x44] sm:$0xf]
      %v2284 = vld [vmem:[%s8 + $0x48] sm:$0xf]
      %v2285 = vld [vmem:[%s8 + $0x4c] sm:$0xf]
      %v2286 = vld [vmem:[%s8 + $0x50] sm:$0xf]
      %v2287 = vld [vmem:[%s8 + $0x54] sm:$0xf]
      %v2288 = vld [vmem:[%s8 + $0x58] sm:$0xf]
      %v2289 = vld [vmem:[%s8 + $0x5c] sm:$0xf]
      %v2290 = vld [vmem:[%s8 + $0x60] sm:$0xf]
      %v2291 = vld [vmem:[%s8 + $0x64] sm:$0xf]
      %v2292 = vld [vmem:[%s8 + $0x68] sm:$0xf]
      %v2293 = vld [vmem:[%s8 + $0x6c] sm:$0xf]
      %v2294 = vld [vmem:[%s8 + $0x70] sm:$0xf]
      %v2295 = vld [vmem:[%s8 + $0x74] sm:$0xf]
      %v2296 = vld [vmem:[%s8 + $0x78] sm:$0xf]
      %v2297 = vld [vmem:[%s8 + $0x7c] sm:$0xf]
      %v2298 = vld [vmem:[%s8 + $0x80] sm:$0xf]
      %v2299 = vld [vmem:[%s8 + $0x84] sm:$0xf]
      %v2300 = vld [vmem:[%s8 + $0x88] sm:$0xf]
      %v2301 = vld [vmem:[%s8 + $0x8c] sm:$0xf]
      %v2302 = vld [vmem:[%s8 + $0x90] sm:$0xf]
      %v2303 = vld [vmem:[%s8 + $0x94] sm:$0xf]
      %v2304 = vld [vmem:[%s8 + $0x98] sm:$0xf]
      %v2305 = vld [vmem:[%s8 + $0x9c] sm:$0xf]
      %v2306 = vld [vmem:[%s8 + $0xa0] sm:$0xf]
      %v2307 = vld [vmem:[%s8 + $0xa4] sm:$0xf]
      %v2308 = vld [vmem:[%s8 + $0xa8] sm:$0xf]
      %v2309 = vld [vmem:[%s8 + $0xac] sm:$0xf]
      %v2310 = vld [vmem:[%s8 + $0xb0] sm:$0xf]
      %v2311 = vld [vmem:[%s8 + $0xb4] sm:$0xf]
      %v2312 = vld [vmem:[%s8 + $0xb8] sm:$0xf]
      %v2313 = vld [vmem:[%s8 + $0xbc] sm:$0xf]
      %v2314 = vld [vmem:[%s8 + $0xc0] sm:$0xf]
      %v2315 = vld [vmem:[%s8 + $0xc4] sm:$0xf]
      %v2316 = vld [vmem:[%s8 + $0xc8] sm:$0xf]
      %v2317 = vld [vmem:[%s8 + $0xcc] sm:$0xf]
      %v2318 = vld [vmem:[%s8 + $0xd0] sm:$0xf]
      %v2319 = vld [vmem:[%s8 + $0xd4] sm:$0xf]
      %v2320 = vld [vmem:[%s8 + $0xd8] sm:$0xf]
      %v2321 = vld [vmem:[%s8 + $0xdc] sm:$0xf]
      %v2322 = vld [vmem:[%s8 + $0xe0] sm:$0xf]
      %v2323 = vld [vmem:[%s8 + $0xe4] sm:$0xf]
      %v2324 = vld [vmem:[%s8 + $0xe8] sm:$0xf]
      %v2325 = vld [vmem:[%s8 + $0xec] sm:$0xf]
      %v2326 = vld [vmem:[%s8 + $0xf0] sm:$0xf]
      %v2327 = vld [vmem:[%s8 + $0xf4] sm:$0xf]
      %v2328 = vld [vmem:[%s8 + $0xf8] sm:$0xf]
      %v2329 = vld [vmem:[%s8 + $0xfc] sm:$0xf]
      %v2330 = vld [vmem:[%s8 + $0x100] sm:$0xf]
      %v2331 = vld [vmem:[%s8 + $0x104] sm:$0xf]
      %v2332 = vld [vmem:[%s8 + $0x108] sm:$0xf]
      %v2333 = vld [vmem:[%s8 + $0x10c] sm:$0xf]
      %v2334 = vld [vmem:[%s8 + $0x110] sm:$0xf]
      %v2335 = vld [vmem:[%s8 + $0x114] sm:$0xf]
      %v2336 = vld [vmem:[%s8 + $0x118] sm:$0xf]
      %v2337 = vld [vmem:[%s8 + $0x11c] sm:$0xf]
      %v2338 = vld [vmem:[%s9] sm:$0x1]
      %v2340 = vlaneseq
      %v2341 = vshrl.u32 %v2340, 7
      %v2342 = vsub.s32 0, %v2341
      %v2343 = vrot.slane %v2338, %v2342
      %v2417 = vunpack.c.l.b16 %v2266
      %v2418 = vunpack.c.l.b16 %v2267
      %v2419 = vunpack.c.l.b16 %v2268
      %v2420 = vunpack.c.l.b16 %v2269
      %v2421 = vunpack.c.l.b16 %v2270
      %v2422 = vunpack.c.l.b16 %v2271
      %v2423 = vunpack.c.l.b16 %v2272
      %v2424 = vunpack.c.l.b16 %v2273
      %v2425 = vunpack.c.l.b16 %v2274
      %v2426 = vunpack.c.l.b16 %v2275
      %v2427 = vunpack.c.l.b16 %v2276
      %v2428 = vunpack.c.l.b16 %v2277
      %v2429 = vunpack.c.l.b16 %v2278
      %v2430 = vunpack.c.l.b16 %v2279
      %v2431 = vunpack.c.l.b16 %v2280
      %v2432 = vunpack.c.l.b16 %v2281
      %v2433 = vunpack.c.l.b16 %v2282
      %v2434 = vunpack.c.l.b16 %v2283
      %v2435 = vunpack.c.l.b16 %v2284
      %v2436 = vunpack.c.l.b16 %v2285
      %v2437 = vunpack.c.l.b16 %v2286
      %v2438 = vunpack.c.l.b16 %v2287
      %v2439 = vunpack.c.l.b16 %v2288
      %v2440 = vunpack.c.l.b16 %v2289
      %v2441 = vunpack.c.l.b16 %v2290
      %v2442 = vunpack.c.l.b16 %v2291
      %v2443 = vunpack.c.l.b16 %v2292
      %v2444 = vunpack.c.l.b16 %v2293
      %v2445 = vunpack.c.l.b16 %v2294
      %v2446 = vunpack.c.l.b16 %v2295
      %v2447 = vunpack.c.l.b16 %v2296
      %v2448 = vunpack.c.l.b16 %v2297
      %v2449 = vunpack.c.l.b16 %v2298
      %v2450 = vunpack.c.l.b16 %v2299
      %v2451 = vunpack.c.l.b16 %v2300
      %v2452 = vunpack.c.l.b16 %v2301
      %v2453 = vunpack.c.l.b16 %v2302
      %v2454 = vunpack.c.l.b16 %v2303
      %v2455 = vunpack.c.l.b16 %v2304
      %v2456 = vunpack.c.l.b16 %v2305
      %v2457 = vunpack.c.l.b16 %v2306
      %v2458 = vunpack.c.l.b16 %v2307
      %v2459 = vunpack.c.l.b16 %v2308
      %v2460 = vunpack.c.l.b16 %v2309
      %v2461 = vunpack.c.l.b16 %v2310
      %v2462 = vunpack.c.l.b16 %v2311
      %v2463 = vunpack.c.l.b16 %v2312
      %v2464 = vunpack.c.l.b16 %v2313
      %v2465 = vunpack.c.l.b16 %v2314
      %v2466 = vunpack.c.l.b16 %v2315
      %v2467 = vunpack.c.l.b16 %v2316
      %v2468 = vunpack.c.l.b16 %v2317
      %v2469 = vunpack.c.l.b16 %v2318
      %v2470 = vunpack.c.l.b16 %v2319
      %v2471 = vunpack.c.l.b16 %v2320
      %v2472 = vunpack.c.l.b16 %v2321
      %v2473 = vunpack.c.l.b16 %v2322
      %v2474 = vunpack.c.l.b16 %v2323
      %v2475 = vunpack.c.l.b16 %v2324
      %v2476 = vunpack.c.l.b16 %v2325
      %v2477 = vunpack.c.l.b16 %v2326
      %v2478 = vunpack.c.l.b16 %v2327
      %v2479 = vunpack.c.l.b16 %v2328
      %v2480 = vunpack.c.l.b16 %v2329
      %v2481 = vunpack.c.l.b16 %v2330
      %v2482 = vunpack.c.l.b16 %v2331
      %v2483 = vunpack.c.l.b16 %v2332
      %v2484 = vunpack.c.l.b16 %v2333
      %v2485 = vunpack.c.l.b16 %v2334
      %v2486 = vunpack.c.l.b16 %v2335
      %v2487 = vunpack.c.l.b16 %v2336
      %v2488 = vunpack.c.l.b16 %v2337
      %v2489 = vpack.c.b16 %v2418, %v2417
      %v2490 = vpack.c.b16 %v2420, %v2419
      %v2491 = vpack.c.b16 %v2422, %v2421
      %v2492 = vpack.c.b16 %v2424, %v2423
      %v2493 = vpack.c.b16 %v2426, %v2425
      %v2494 = vpack.c.b16 %v2428, %v2427
      %v2495 = vpack.c.b16 %v2430, %v2429
      %v2496 = vpack.c.b16 %v2432, %v2431
      %v2497 = vpack.c.b16 %v2434, %v2433
      %v2498 = vpack.c.b16 %v2436, %v2435
      %v2499 = vpack.c.b16 %v2438, %v2437
      %v2500 = vpack.c.b16 %v2440, %v2439
      %v2501 = vpack.c.b16 %v2442, %v2441
      %v2502 = vpack.c.b16 %v2444, %v2443
      %v2503 = vpack.c.b16 %v2446, %v2445
      %v2504 = vpack.c.b16 %v2448, %v2447
      %v2505 = vpack.c.b16 %v2450, %v2449
      %v2506 = vpack.c.b16 %v2452, %v2451
      %v2507 = vpack.c.b16 %v2454, %v2453
      %v2508 = vpack.c.b16 %v2456, %v2455
      %v2509 = vpack.c.b16 %v2458, %v2457
      %v2510 = vpack.c.b16 %v2460, %v2459
      %v2511 = vpack.c.b16 %v2462, %v2461
      %v2512 = vpack.c.b16 %v2464, %v2463
      %v2513 = vpack.c.b16 %v2466, %v2465
      %v2514 = vpack.c.b16 %v2468, %v2467
      %v2515 = vpack.c.b16 %v2470, %v2469
      %v2516 = vpack.c.b16 %v2472, %v2471
      %v2517 = vpack.c.b16 %v2474, %v2473
      %v2518 = vpack.c.b16 %v2476, %v2475
      %v2519 = vpack.c.b16 %v2478, %v2477
      %v2520 = vpack.c.b16 %v2480, %v2479
      %v2521 = vpack.c.b16 %v2482, %v2481
      %v2522 = vpack.c.b16 %v2484, %v2483
      %v2523 = vpack.c.b16 %v2486, %v2485
      %v2524 = vpack.c.b16 %v2488, %v2487
      %v2562 = vsel %vm764, %v2265, 0
      %2564 = vmatprep.subr.bf16.mxu0 0
      %2565 = vmatpush1.bf16.msra.mxu0 %v2489
      %2566 = vmatprep.subr.bf16.mxu0 0
      %2567 = vmatpush1.bf16.msra.mxu0 %v2490
      %2568 = vmatprep.subr.bf16.mxu0 0
      %2569 = vmatpush1.bf16.msra.mxu0 %v2491
      %2570 = vmatprep.subr.bf16.mxu0 0
      %2571 = vmatpush1.bf16.msra.mxu0 %v2492
      %2572 = vmatprep.subr.bf16.mxu0 0
      %2573 = vmatpush1.bf16.msra.mxu0 %v2493
      %2574 = vmatprep.subr.bf16.mxu0 0
      %2575 = vmatpush1.bf16.msra.mxu0 %v2494
      %2576 = vmatprep.subr.bf16.mxu0 0
      %2577 = vmatpush1.bf16.msra.mxu0 %v2495
      %2578 = vmatprep.subr.bf16.mxu0 0
      %2579 = vmatpush1.bf16.msra.mxu0 %v2496
      %2580 = vmatprep.subr.bf16.mxu0 0
      %2581 = vmatpush1.bf16.msra.mxu0 %v2497
      %2582 = vmatprep.subr.bf16.mxu0 0
      %2583 = vmatpush1.bf16.msra.mxu0 %v2498
      %2584 = vmatprep.subr.bf16.mxu0 0
      %2585 = vmatpush1.bf16.msra.mxu0 %v2499
      %2586 = vmatprep.subr.bf16.mxu0 0
      %2587 = vmatpush1.bf16.msra.mxu0 %v2500
      %2588 = vmatprep.subr.bf16.mxu0 0
      %2589 = vmatpush1.bf16.msra.mxu0 %v2501
      %2590 = vmatprep.subr.bf16.mxu0 0
      %2591 = vmatpush1.bf16.msra.mxu0 %v2502
      %2592 = vmatprep.subr.bf16.mxu0 0
      %2593 = vmatpush1.bf16.msra.mxu0 %v2503
      %2594 = vmatprep.subr.bf16.mxu0 0
      %2595 = vmatpush1.bf16.msra.mxu0 %v2504
      %2596 = vmatprep.mubr.bf16.mxu0 %v2262
      %2597 = vmatmul.mubr.bf16.gmra.mrb[0].mxu0 %v2261
      %v2598 = vpop.f32.mrb[0].mxu0
      %v2599 = vadd.f32 %v2343, %v2598
      %v2600 = vpop.f32.mrb[0].mxu0
      %v2601 = vpop.f32.mrb[0].mxu0
      %v2602 = vadd.f32 %v2343, %v2601
      %v2603 = vpop.f32.mrb[0].mxu0
      %2604 = vdwg.mxu0
      %2605 = vmatprep.subr.bf16.mxu0 0
      %2606 = vmatpush1.bf16.msra.mxu0 %v2505
      %2607 = vmatprep.subr.bf16.mxu0 0
      %2608 = vmatpush1.bf16.msra.mxu0 %v2506
      %2609 = vmatprep.subr.bf16.mxu0 0
      %2610 = vmatpush1.bf16.msra.mxu0 %v2507
      %2611 = vmatprep.subr.bf16.mxu0 0
      %2612 = vmatpush1.bf16.msra.mxu0 %v2508
      %2613 = vmatprep.subr.bf16.mxu0 0
      %2614 = vmatpush1.bf16.msra.mxu0 %v2509
      %2615 = vmatprep.subr.bf16.mxu0 0
      %2616 = vmatpush1.bf16.msra.mxu0 %v2510
      %2617 = vmatprep.subr.bf16.mxu0 0
      %2618 = vmatpush1.bf16.msra.mxu0 %v2511
      %2619 = vmatprep.subr.bf16.mxu0 0
      %2620 = vmatpush1.bf16.msra.mxu0 %v2512
      %2621 = vmatprep.subr.bf16.mxu0 0
      %2622 = vmatpush1.bf16.msra.mxu0 %v2513
      %2623 = vmatprep.subr.bf16.mxu0 0
      %2624 = vmatpush1.bf16.msra.mxu0 %v2514
      %2625 = vmatprep.subr.bf16.mxu0 0
      %2626 = vmatpush1.bf16.msra.mxu0 %v2515
      %2627 = vmatprep.subr.bf16.mxu0 0
      %2628 = vmatpush1.bf16.msra.mxu0 %v2516
      %2629 = vmatprep.subr.bf16.mxu0 0
      %2630 = vmatpush1.bf16.msra.mxu0 %v2517
      %2631 = vmatprep.subr.bf16.mxu0 0
      %2632 = vmatpush1.bf16.msra.mxu0 %v2518
      %2633 = vmatprep.subr.bf16.mxu0 0
      %2634 = vmatpush1.bf16.msra.mxu0 %v2519
      %2635 = vmatprep.subr.bf16.mxu0 0
      %2636 = vmatpush1.bf16.msra.mxu0 %v2520
      %2637 = vmatprep.mubr.bf16.mxu0 %v2264
      %2638 = vmatmul.mubr.bf16.gmra.mrb[0].mxu0 %v2263
      %v2639 = vpop.f32.mrb[0].mxu0
      %v2640 = vadd.f32 %v2599, %v2639
      %v2641 = vpop.f32.mrb[0].mxu0
      %v2642 = vpop.f32.mrb[0].mxu0
      %v2643 = vadd.f32 %v2602, %v2642
      %v2644 = vpop.f32.mrb[0].mxu0
      %2645 = vdwg.mxu0
      %2646 = vmatprep.subr.bf16.mxu0 0
      %2647 = vmatpush1.bf16.msra.mxu0 %v2521
      %2648 = vmatprep.subr.bf16.mxu0 0
      %2649 = vmatpush1.bf16.msra.mxu0 %v2522
      %2650 = vmatprep.subr.bf16.mxu0 0
      %2651 = vmatpush1.bf16.msra.mxu0 %v2523
      %2652 = vmatprep.subr.bf16.mxu0 0
      %2653 = vmatpush1.bf16.msra.mxu0 %v2524
      %2654 = vmatprep.subr.bf16.mxu0 0
      %2655 = vmatpush1.bf16.msra.mxu0 0
      %2656 = vmatprep.subr.bf16.mxu0 0
      %2657 = vmatpush1.bf16.msra.mxu0 0
      %2658 = vmatprep.subr.bf16.mxu0 0
      %2659 = vmatpush1.bf16.msra.mxu0 0
      %2660 = vmatprep.subr.bf16.mxu0 0
      %2661 = vmatpush1.bf16.msra.mxu0 0
      %2662 = vmatprep.subr.bf16.mxu0 0
      %2663 = vmatpush1.bf16.msra.mxu0 0
      %2664 = vmatprep.subr.bf16.mxu0 0
      %2665 = vmatpush1.bf16.msra.mxu0 0
      %2666 = vmatprep.subr.bf16.mxu0 0
      %2667 = vmatpush1.bf16.msra.mxu0 0
      %2668 = vmatprep.subr.bf16.mxu0 0
      %2669 = vmatpush1.bf16.msra.mxu0 0
      %2670 = vmatprep.subr.bf16.mxu0 0
      %2671 = vmatpush1.bf16.msra.mxu0 0
      %2672 = vmatprep.subr.bf16.mxu0 0
      %2673 = vmatpush1.bf16.msra.mxu0 0
      %2674 = vmatprep.subr.bf16.mxu0 0
      %2675 = vmatpush1.bf16.msra.mxu0 0
      %2676 = vmatprep.subr.bf16.mxu0 0
      %2677 = vmatpush1.bf16.msra.mxu0 0
      %2678 = vmatprep.mubr.bf16.mxu0 0
      %2679 = vmatmul.mubr.bf16.gmra.mrb[0].mxu0 %v2562
      %v2680 = vpop.f32.mrb[0].mxu0
      %v2681 = vadd.f32 %v2640, %v2680
      %v2682 = vpop.f32.mrb[0].mxu0
      %v2683 = vpop.f32.mrb[0].mxu0
      %v2684 = vadd.f32 %v2643, %v2683
      %v2685 = vpop.f32.mrb[0].mxu0
      %2686 = vdwg.mxu0
      %v2687 = vmax.f32 %v2681, -30.0
      %v2688 = vmax.f32 %v2684, -30.0
      %v2689 = vmin.f32 %v2687, 20.0
      %v2690 = vmin.f32 %v2688, 20.0
      %v2691 = vmul.f32 %v2689, 0.5
      %v2692 = vmul.f32 %v2690, 0.5
      %v2693 = vmul.f32 %v2691, 1.442695
      %v2694 = vpow.pop %v2693
      %v2695 = vmul.f32 %v2692, 1.442695
      %v2696 = vpow.pop %v2695
      %v2697 = vld [vmem:[%s590] sm:$0xff]
      %v2698 = vld [vmem:[%s590 + $0x8] sm:$0xff]
      %2701 = vrot.lane.b32.xlu0 %v2697, 4
      %v2702 = vpop.permute.xlu0 %2701
      %2703 = vrot.lane.b32.xlu0 %v2698, 4
      %v2704 = vpop.permute.xlu0 %2703
      %v2707 = vmul.f32 %v2694, %v2702
      %v2708 = vmul.f32 %v2696, %v2704
      %2711 = vrot.lane.b32.xlu0 %v2707, 124
      %v2712 = vpop.permute.xlu0 %2711
      %2713 = vrot.lane.b32.xlu0 %v2708, 124
      %v2714 = vpop.permute.xlu0 %2713
      %v2717 = vadd.f32 %v2681, %v2712
      %v2718 = vadd.f32 %v2684, %v2714
      %v2721 = vrot.slane %v2717, 3
      %v2722 = vrot.slane %v2718, 3
      %v2723 = vsel %vm632, %v2721, %v2722
      %v2727 = vsel %vm632, 0.0, %v2721
      %v2728 = vsel %vm632, %v2722, 0.0
      %v2729 = vsel %vm643, %v2727, 0.0
      %v2730 = vsel %vm644, %v2723, 0.0
      %v2733 = vrot.slane %v2727, 2
      %v2734 = vrot.slane %v2723, 2
      %v2735 = vsel %vm653, %v2733, %v2734
      %v2736 = vrot.slane %v2728, 2
      %v2737 = vsel %vm653, %v2734, %v2736
      %v2740 = vsel %vm649, %v2735, 0.0
      %v2741 = vsel %vm650, %v2737, 0.0
      %v2742 = vrot.slane %v2727, 4
      %v2743 = vrot.slane %v2723, 4
      %v2744 = vsel %vm663, %v2742, %v2743
      %v2745 = vrot.slane %v2728, 4
      %v2746 = vsel %vm663, %v2743, %v2745
      %v2749 = vsel %vm643, %v2744, 0.0
      %v2750 = vsel %vm644, %v2746, 0.0
      %v2751 = vrot.slane %v2727, 6
      %v2752 = vrot.slane %v2723, 6
      %v2753 = vsel %vm673, %v2751, %v2752
      %v2754 = vrot.slane %v2728, 6
      %v2755 = vsel %vm673, %v2752, %v2754
      %v2758 = vsel %vm649, %v2753, 0.0
      %v2759 = vsel %vm650, %v2755, 0.0
      %v2760 = vsel %vm643, %v2723, 0.0
      %v2761 = vsel %vm644, %v2728, 0.0
      %v2762 = vsel %vm653, %v2736, %v686
      %v2764 = vsel %vm649, %v2737, 0.0
      %v2765 = vsel %vm650, %v2762, 0.0
      %v2766 = vrot.slane %v2727, 1
      %v2767 = vrot.slane %v2723, 1
      %v2768 = vsel %vm691, %v2766, %v2767
      %v2769 = vrot.slane %v2728, 1
      %v2770 = vsel %vm691, %v2767, %v2769
      %2771 = vrot.lane.b32.xlu0 %v2768, 4
      %v2772 = vpop.permute.xlu0 %2771
      %2773 = vrot.lane.b32.xlu0 %v2770, 4
      %v2774 = vpop.permute.xlu0 %2773
      %2779 = vrot.lane.b32.xlu0 %v2740, 8
      %v2780 = vpop.permute.xlu0 %2779
      %2781 = vrot.lane.b32.xlu0 %v2741, 8
      %v2782 = vpop.permute.xlu0 %2781
      %2787 = vrot.lane.b32.xlu0 %v2749, 12
      %v2788 = vpop.permute.xlu0 %2787
      %2789 = vrot.lane.b32.xlu0 %v2750, 12
      %v2790 = vpop.permute.xlu0 %2789
      %v2793 = vrot.slane %v2727, 5
      %v2794 = vrot.slane %v2723, 5
      %v2795 = vsel %vm719, %v2793, %v2794
      %v2796 = vrot.slane %v2728, 5
      %v2797 = vsel %vm719, %v2794, %v2796
      %2798 = vrot.lane.b32.xlu0 %v2795, 16
      %v2799 = vpop.permute.xlu0 %2798
      %2800 = vrot.lane.b32.xlu0 %v2797, 16
      %v2801 = vpop.permute.xlu0 %2800
      %2806 = vrot.lane.b32.xlu0 %v2758, 20
      %v2807 = vpop.permute.xlu0 %2806
      %2808 = vrot.lane.b32.xlu0 %v2759, 20
      %v2809 = vpop.permute.xlu0 %2808
      %2814 = vrot.lane.b32.xlu0 %v2760, 24
      %v2815 = vpop.permute.xlu0 %2814
      %2816 = vrot.lane.b32.xlu0 %v2761, 24
      %v2817 = vpop.permute.xlu0 %2816
      %v2820 = vsel %vm691, %v2769, %v747
      %2821 = vrot.lane.b32.xlu0 %v2770, 28
      %v2822 = vpop.permute.xlu0 %2821
      %2823 = vrot.lane.b32.xlu0 %v2820, 28
      %v2824 = vpop.permute.xlu0 %2823
      %2829 = vrot.lane.b32.xlu0 %v2764, 32
      %v2830 = vpop.permute.xlu0 %2829
      %2831 = vrot.lane.b32.xlu0 %v2765, 32
      %v2832 = vpop.permute.xlu0 %2831
      %vm2835 = vcmask 31744
      %v2836 = vsel %vm2835, %v2729, %v2772
      %v2837 = vsel %vm2835, %v2730, %v2774
      %vm2838 = vcmask 64512
      %v2839 = vsel %vm2838, %v2836, %v2780
      %v2840 = vsel %vm2838, %v2837, %v2782
      %vm2841 = vcmask 97280
      %v2842 = vsel %vm2841, %v2839, %v2788
      %v2843 = vsel %vm2841, %v2840, %v2790
      %v2844 = vsel %vm761, %v2842, %v2799
      %v2845 = vsel %vm761, %v2843, %v2801
      %vm2846 = vcmask 162816
      %v2847 = vsel %vm2846, %v2844, %v2807
      %v2848 = vsel %vm2846, %v2845, %v2809
      %vm2849 = vcmask 195584
      %v2850 = vsel %vm2849, %v2847, %v2815
      %v2851 = vsel %vm2849, %v2848, %v2817
      %vm2852 = vcmask 228352
      %v2853 = vsel %vm2852, %v2850, %v2822
      %v2854 = vsel %vm2852, %v2851, %v2824
      %v2855 = vsel %vm770, %v2853, %v2830
      %v2856 = vsel %vm770, %v2854, %v2832
      %v2857 = vpack.c.bf16 %v2856, %v2855
      %v2858 = vld [vmem:[%s10] sm:$0xf]
      %v2859 = vld [vmem:[%s10 + $0x4] sm:$0xf]
      %v2860 = vld [vmem:[%s10 + $0x8] sm:$0xf]
      %v2861 = vld [vmem:[%s10 + $0xc] sm:$0xf]
      %v2862 = vld [vmem:[%s10 + $0x10] sm:$0x3]
      %v2863 = vld [vmem:[%s11] sm:$0x1]
      %v2865 = vlaneseq
      %v2866 = vshrl.u32 %v2865, 7
      %v2867 = vsub.s32 0, %v2866
      %v2868 = vrot.slane %v2863, %v2867
      %v2875 = vunpack.c.l.b16 %v2858
      %v2876 = vunpack.c.l.b16 %v2859
      %v2877 = vunpack.c.l.b16 %v2860
      %v2878 = vunpack.c.l.b16 %v2861
      %v2879 = vunpack.c.l.b16 %v2862
      %v2880 = vpack.c.b16 %v2876, %v2875
      %v2881 = vpack.c.b16 %v2878, %v2877
      %v2882 = vpack.c.b16 %v2879, %v2879
      %vm2885 = vcmask 293888
      %v2887 = vsel %vm2885, %v2857, 0
      %v2890 = vsel %vm673, %v2882, 0
      %2892 = vmatprep.subr.bf16.mxu0 0
      %2893 = vmatpush1.bf16.msra.mxu0 %v2880
      %2894 = vmatprep.subr.bf16.mxu0 0
      %2895 = vmatpush1.bf16.msra.mxu0 %v2881
      %2896 = vmatprep.subr.bf16.mxu0 0
      %2897 = vmatpush1.bf16.msra.mxu0 %v2890
      %2898 = vmatprep.subr.bf16.mxu0 0
      %2899 = vmatpush1.bf16.msra.mxu0 0
      %2900 = vmatprep.subr.bf16.mxu0 0
      %2901 = vmatpush1.bf16.msra.mxu0 0
      %2902 = vmatprep.subr.bf16.mxu0 0
      %2903 = vmatpush1.bf16.msra.mxu0 0
      %2904 = vmatprep.subr.bf16.mxu0 0
      %2905 = vmatpush1.bf16.msra.mxu0 0
      %2906 = vmatprep.subr.bf16.mxu0 0
      %2907 = vmatpush1.bf16.msra.mxu0 0
      %2908 = vmatprep.subr.bf16.mxu0 0
      %2909 = vmatpush1.bf16.msra.mxu0 0
      %2910 = vmatprep.subr.bf16.mxu0 0
      %2911 = vmatpush1.bf16.msra.mxu0 0
      %2912 = vmatprep.subr.bf16.mxu0 0
      %2913 = vmatpush1.bf16.msra.mxu0 0
      %2914 = vmatprep.subr.bf16.mxu0 0
      %2915 = vmatpush1.bf16.msra.mxu0 0
      %2916 = vmatprep.subr.bf16.mxu0 0
      %2917 = vmatpush1.bf16.msra.mxu0 0
      %2918 = vmatprep.subr.bf16.mxu0 0
      %2919 = vmatpush1.bf16.msra.mxu0 0
      %2920 = vmatprep.subr.bf16.mxu0 0
      %2921 = vmatpush1.bf16.msra.mxu0 0
      %2922 = vmatprep.subr.bf16.mxu0 0
      %2923 = vmatpush1.bf16.msra.mxu0 0
      %2924 = vmatprep.mubr.bf16.mxu0 0
      %2925 = vmatmul.mubr.bf16.gmra.mrb[0].mxu0 %v2887
      %v2926 = vpop.f32.mrb[0].mxu0
      %v2927 = vadd.f32 %v2868, %v2926
      %v2928 = vpop.f32.mrb[0].mxu0
      %v2929 = vpop.f32.mrb[0].mxu0
      %v2930 = vadd.f32 %v2868, %v2929
      %v2931 = vpop.f32.mrb[0].mxu0
      %2932 = vdwg.mxu0
      %v2933 = vxor.u32 %v2927, 2147483648
      %v2934 = vxor.u32 %v2930, 2147483648
      %v2935 = vmul.f32 %v2933, 1.442695
      %v2936 = vpow.pop %v2935
      %v2937 = vmul.f32 %v2934, 1.442695
      %v2938 = vpow.pop %v2937
      %v2939 = vadd.f32 %v2936, 1.0
      %v2940 = vadd.f32 %v2938, 1.0
      %v2941 = vrcp.pop %v2939
      %v2942 = vmul.f32 1.0, %v2941
      %v2943 = vrcp.pop %v2940
      %v2944 = vmul.f32 1.0, %v2943
      %v2945 = vmul.f32 %v2927, %v2942
      %v2946 = vmul.f32 %v2930, %v2944
      %v2949 = vrot.slane %v2945, 3
      %v2950 = vrot.slane %v2946, 3
      %v2951 = vsel %vm632, %v2949, %v2950
      %v2955 = vsel %vm632, 0.0, %v2949
      %v2956 = vsel %vm632, %v2950, 0.0
      %v2957 = vsel %vm643, %v2955, 0.0
      %v2958 = vsel %vm644, %v2951, 0.0
      %v2961 = vrot.slane %v2955, 2
      %v2962 = vrot.slane %v2951, 2
      %v2963 = vsel %vm653, %v2961, %v2962
      %v2964 = vrot.slane %v2956, 2
      %v2965 = vsel %vm653, %v2962, %v2964
      %v2968 = vsel %vm649, %v2963, 0.0
      %v2969 = vsel %vm650, %v2965, 0.0
      %v2970 = vrot.slane %v2955, 4
      %v2971 = vrot.slane %v2951, 4
      %v2972 = vsel %vm663, %v2970, %v2971
      %v2973 = vrot.slane %v2956, 4
      %v2974 = vsel %vm663, %v2971, %v2973
      %v2977 = vsel %vm643, %v2972, 0.0
      %v2978 = vsel %vm644, %v2974, 0.0
      %v2979 = vrot.slane %v2955, 6
      %v2980 = vrot.slane %v2951, 6
      %v2981 = vsel %vm673, %v2979, %v2980
      %v2982 = vrot.slane %v2956, 6
      %v2983 = vsel %vm673, %v2980, %v2982
      %v2986 = vsel %vm649, %v2981, 0.0
      %v2987 = vsel %vm650, %v2983, 0.0
      %v2988 = vsel %vm643, %v2951, 0.0
      %v2989 = vsel %vm644, %v2956, 0.0
      %v2990 = vsel %vm653, %v2964, %v686
      %v2992 = vsel %vm649, %v2965, 0.0
      %v2993 = vsel %vm650, %v2990, 0.0
      %v2994 = vrot.slane %v2955, 1
      %v2995 = vrot.slane %v2951, 1
      %v2996 = vsel %vm691, %v2994, %v2995
      %v2997 = vrot.slane %v2956, 1
      %v2998 = vsel %vm691, %v2995, %v2997
      %2999 = vrot.lane.b32.xlu0 %v2996, 64
      %v3000 = vpop.permute.xlu0 %2999
      %3001 = vrot.lane.b32.xlu0 %v2998, 64
      %v3002 = vpop.permute.xlu0 %3001
      %3007 = vrot.lane.b32.xlu0 %v2977, 64
      %v3008 = vpop.permute.xlu0 %3007
      %3009 = vrot.lane.b32.xlu0 %v2978, 64
      %v3010 = vpop.permute.xlu0 %3009
      %v3013 = vrot.slane %v2955, 5
      %v3014 = vrot.slane %v2951, 5
      %v3015 = vsel %vm719, %v3013, %v3014
      %v3016 = vrot.slane %v2956, 5
      %v3017 = vsel %vm719, %v3014, %v3016
      %3022 = vrot.lane.b32.xlu0 %v2986, 64
      %v3023 = vpop.permute.xlu0 %3022
      %3024 = vrot.lane.b32.xlu0 %v2987, 64
      %v3025 = vpop.permute.xlu0 %3024
      %v3028 = vsel %vm691, %v2997, %v747
      %3029 = vrot.lane.b32.xlu0 %v3028, 64
      %v3030 = vpop.permute.xlu0 %3029
      %v3032 = vsel %vm764, %v2957, %v3000
      %v3033 = vsel %vm764, %v2958, %v3002
      %v3034 = vsel %vm764, %v2968, %v3008
      %v3035 = vsel %vm764, %v2969, %v3010
      %v3036 = vsel %vm764, %v3015, %v3023
      %v3037 = vsel %vm764, %v3017, %v3025
      %v3038 = vsel %vm764, %v2988, %v3002
      %v3039 = vsel %vm764, %v2989, %v3030
      %v3040 = vpack.c.bf16 %v3033, %v3032
      %v3041 = vpack.c.bf16 %v3035, %v3034
      %v3042 = vpack.c.bf16 %v3037, %v3036
      %v3043 = vpack.c.bf16 %v3039, %v3038
      %v3044 = vpack.c.bf16 %v2993, %v2992
      %v3045 = vld [vmem:[%s12] sm:$0xf]
      %v3046 = vld [vmem:[%s12 + $0x4] sm:$0xf]
      %v3047 = vld [vmem:[%s12 + $0x8] sm:$0xf]
      %v3048 = vld [vmem:[%s12 + $0xc] sm:$0xf]
      %v3049 = vld [vmem:[%s12 + $0x10] sm:$0xf]
      %v3050 = vld [vmem:[%s12 + $0x14] sm:$0xf]
      %v3051 = vld [vmem:[%s12 + $0x18] sm:$0xf]
      %v3052 = vld [vmem:[%s12 + $0x1c] sm:$0xf]
      %v3053 = vld [vmem:[%s12 + $0x20] sm:$0xf]
      %v3054 = vld [vmem:[%s12 + $0x24] sm:$0xf]
      %v3055 = vld [vmem:[%s12 + $0x28] sm:$0xf]
      %v3056 = vld [vmem:[%s12 + $0x2c] sm:$0xf]
      %v3057 = vld [vmem:[%s12 + $0x30] sm:$0xf]
      %v3058 = vld [vmem:[%s12 + $0x34] sm:$0xf]
      %v3059 = vld [vmem:[%s12 + $0x38] sm:$0xf]
      %v3060 = vld [vmem:[%s12 + $0x3c] sm:$0xf]
      %v3061 = vld [vmem:[%s12 + $0x40] sm:$0xf]
      %v3062 = vld [vmem:[%s12 + $0x44] sm:$0xf]
      %v3063 = vld [vmem:[%s12 + $0x48] sm:$0xf]
      %v3064 = vld [vmem:[%s12 + $0x4c] sm:$0xf]
      %v3065 = vld [vmem:[%s12 + $0x50] sm:$0xf]
      %v3066 = vld [vmem:[%s12 + $0x54] sm:$0xf]
      %v3067 = vld [vmem:[%s12 + $0x58] sm:$0xf]
      %v3068 = vld [vmem:[%s12 + $0x5c] sm:$0xf]
      %v3069 = vld [vmem:[%s12 + $0x60] sm:$0xf]
      %v3070 = vld [vmem:[%s12 + $0x64] sm:$0xf]
      %v3071 = vld [vmem:[%s12 + $0x68] sm:$0xf]
      %v3072 = vld [vmem:[%s12 + $0x6c] sm:$0xf]
      %v3073 = vld [vmem:[%s12 + $0x70] sm:$0xf]
      %v3074 = vld [vmem:[%s12 + $0x74] sm:$0xf]
      %v3075 = vld [vmem:[%s12 + $0x78] sm:$0xf]
      %v3076 = vld [vmem:[%s12 + $0x7c] sm:$0xf]
      %v3077 = vld [vmem:[%s12 + $0x80] sm:$0xf]
      %v3078 = vld [vmem:[%s12 + $0x84] sm:$0xf]
      %v3079 = vld [vmem:[%s12 + $0x88] sm:$0xf]
      %v3080 = vld [vmem:[%s12 + $0x8c] sm:$0xf]
      %v3081 = vld [vmem:[%s12 + $0x90] sm:$0xf]
      %v3082 = vld [vmem:[%s12 + $0x94] sm:$0xf]
      %v3083 = vld [vmem:[%s12 + $0x98] sm:$0xf]
      %v3084 = vld [vmem:[%s12 + $0x9c] sm:$0xf]
      %v3085 = vld [vmem:[%s12 + $0xa0] sm:$0xf]
      %v3086 = vld [vmem:[%s12 + $0xa4] sm:$0xf]
      %v3087 = vld [vmem:[%s12 + $0xa8] sm:$0xf]
      %v3088 = vld [vmem:[%s12 + $0xac] sm:$0xf]
      %v3089 = vld [vmem:[%s12 + $0xb0] sm:$0xf]
      %v3090 = vld [vmem:[%s12 + $0xb4] sm:$0xf]
      %v3091 = vld [vmem:[%s12 + $0xb8] sm:$0xf]
      %v3092 = vld [vmem:[%s12 + $0xbc] sm:$0xf]
      %v3093 = vld [vmem:[%s12 + $0xc0] sm:$0xf]
      %v3094 = vld [vmem:[%s12 + $0xc4] sm:$0xf]
      %v3095 = vld [vmem:[%s12 + $0xc8] sm:$0xf]
      %v3096 = vld [vmem:[%s12 + $0xcc] sm:$0xf]
      %v3097 = vld [vmem:[%s12 + $0xd0] sm:$0xf]
      %v3098 = vld [vmem:[%s12 + $0xd4] sm:$0xf]
      %v3099 = vld [vmem:[%s12 + $0xd8] sm:$0xf]
      %v3100 = vld [vmem:[%s12 + $0xdc] sm:$0xf]
      %v3101 = vld [vmem:[%s12 + $0xe0] sm:$0xf]
      %v3102 = vld [vmem:[%s12 + $0xe4] sm:$0xf]
      %v3103 = vld [vmem:[%s12 + $0xe8] sm:$0xf]
      %v3104 = vld [vmem:[%s12 + $0xec] sm:$0xf]
      %v3105 = vld [vmem:[%s12 + $0xf0] sm:$0xf]
      %v3106 = vld [vmem:[%s12 + $0xf4] sm:$0xf]
      %v3107 = vld [vmem:[%s12 + $0xf8] sm:$0xf]
      %v3108 = vld [vmem:[%s12 + $0xfc] sm:$0xf]
      %v3109 = vld [vmem:[%s12 + $0x100] sm:$0xf]
      %v3110 = vld [vmem:[%s12 + $0x104] sm:$0xf]
      %v3111 = vld [vmem:[%s12 + $0x108] sm:$0xf]
      %v3112 = vld [vmem:[%s12 + $0x10c] sm:$0xf]
      %v3113 = vld [vmem:[%s12 + $0x110] sm:$0xf]
      %v3114 = vld [vmem:[%s12 + $0x114] sm:$0xf]
      %v3115 = vld [vmem:[%s12 + $0x118] sm:$0xf]
      %v3116 = vld [vmem:[%s12 + $0x11c] sm:$0xf]
      %v3117 = vld [vmem:[%s13] sm:$0x1]
      %v3119 = vlaneseq
      %v3120 = vshrl.u32 %v3119, 7
      %v3121 = vsub.s32 0, %v3120
      %v3122 = vrot.slane %v3117, %v3121
      %v3196 = vunpack.c.l.b16 %v3045
      %v3197 = vunpack.c.l.b16 %v3046
      %v3198 = vunpack.c.l.b16 %v3047
      %v3199 = vunpack.c.l.b16 %v3048
      %v3200 = vunpack.c.l.b16 %v3049
      %v3201 = vunpack.c.l.b16 %v3050
      %v3202 = vunpack.c.l.b16 %v3051
      %v3203 = vunpack.c.l.b16 %v3052
      %v3204 = vunpack.c.l.b16 %v3053
      %v3205 = vunpack.c.l.b16 %v3054
      %v3206 = vunpack.c.l.b16 %v3055
      %v3207 = vunpack.c.l.b16 %v3056
      %v3208 = vunpack.c.l.b16 %v3057
      %v3209 = vunpack.c.l.b16 %v3058
      %v3210 = vunpack.c.l.b16 %v3059
      %v3211 = vunpack.c.l.b16 %v3060
      %v3212 = vunpack.c.l.b16 %v3061
      %v3213 = vunpack.c.l.b16 %v3062
      %v3214 = vunpack.c.l.b16 %v3063
      %v3215 = vunpack.c.l.b16 %v3064
      %v3216 = vunpack.c.l.b16 %v3065
      %v3217 = vunpack.c.l.b16 %v3066
      %v3218 = vunpack.c.l.b16 %v3067
      %v3219 = vunpack.c.l.b16 %v3068
      %v3220 = vunpack.c.l.b16 %v3069
      %v3221 = vunpack.c.l.b16 %v3070
      %v3222 = vunpack.c.l.b16 %v3071
      %v3223 = vunpack.c.l.b16 %v3072
      %v3224 = vunpack.c.l.b16 %v3073
      %v3225 = vunpack.c.l.b16 %v3074
      %v3226 = vunpack.c.l.b16 %v3075
      %v3227 = vunpack.c.l.b16 %v3076
      %v3228 = vunpack.c.l.b16 %v3077
      %v3229 = vunpack.c.l.b16 %v3078
      %v3230 = vunpack.c.l.b16 %v3079
      %v3231 = vunpack.c.l.b16 %v3080
      %v3232 = vunpack.c.l.b16 %v3081
      %v3233 = vunpack.c.l.b16 %v3082
      %v3234 = vunpack.c.l.b16 %v3083
      %v3235 = vunpack.c.l.b16 %v3084
      %v3236 = vunpack.c.l.b16 %v3085
      %v3237 = vunpack.c.l.b16 %v3086
      %v3238 = vunpack.c.l.b16 %v3087
      %v3239 = vunpack.c.l.b16 %v3088
      %v3240 = vunpack.c.l.b16 %v3089
      %v3241 = vunpack.c.l.b16 %v3090
      %v3242 = vunpack.c.l.b16 %v3091
      %v3243 = vunpack.c.l.b16 %v3092
      %v3244 = vunpack.c.l.b16 %v3093
      %v3245 = vunpack.c.l.b16 %v3094
      %v3246 = vunpack.c.l.b16 %v3095
      %v3247 = vunpack.c.l.b16 %v3096
      %v3248 = vunpack.c.l.b16 %v3097
      %v3249 = vunpack.c.l.b16 %v3098
      %v3250 = vunpack.c.l.b16 %v3099
      %v3251 = vunpack.c.l.b16 %v3100
      %v3252 = vunpack.c.l.b16 %v3101
      %v3253 = vunpack.c.l.b16 %v3102
      %v3254 = vunpack.c.l.b16 %v3103
      %v3255 = vunpack.c.l.b16 %v3104
      %v3256 = vunpack.c.l.b16 %v3105
      %v3257 = vunpack.c.l.b16 %v3106
      %v3258 = vunpack.c.l.b16 %v3107
      %v3259 = vunpack.c.l.b16 %v3108
      %v3260 = vunpack.c.l.b16 %v3109
      %v3261 = vunpack.c.l.b16 %v3110
      %v3262 = vunpack.c.l.b16 %v3111
      %v3263 = vunpack.c.l.b16 %v3112
      %v3264 = vunpack.c.l.b16 %v3113
      %v3265 = vunpack.c.l.b16 %v3114
      %v3266 = vunpack.c.l.b16 %v3115
      %v3267 = vunpack.c.l.b16 %v3116
      %v3268 = vpack.c.b16 %v3197, %v3196
      %v3269 = vpack.c.b16 %v3199, %v3198
      %v3270 = vpack.c.b16 %v3201, %v3200
      %v3271 = vpack.c.b16 %v3203, %v3202
      %v3272 = vpack.c.b16 %v3205, %v3204
      %v3273 = vpack.c.b16 %v3207, %v3206
      %v3274 = vpack.c.b16 %v3209, %v3208
      %v3275 = vpack.c.b16 %v3211, %v3210
      %v3276 = vpack.c.b16 %v3213, %v3212
      %v3277 = vpack.c.b16 %v3215, %v3214
      %v3278 = vpack.c.b16 %v3217, %v3216
      %v3279 = vpack.c.b16 %v3219, %v3218
      %v3280 = vpack.c.b16 %v3221, %v3220
      %v3281 = vpack.c.b16 %v3223, %v3222
      %v3282 = vpack.c.b16 %v3225, %v3224
      %v3283 = vpack.c.b16 %v3227, %v3226
      %v3284 = vpack.c.b16 %v3229, %v3228
      %v3285 = vpack.c.b16 %v3231, %v3230
      %v3286 = vpack.c.b16 %v3233, %v3232
      %v3287 = vpack.c.b16 %v3235, %v3234
      %v3288 = vpack.c.b16 %v3237, %v3236
      %v3289 = vpack.c.b16 %v3239, %v3238
      %v3290 = vpack.c.b16 %v3241, %v3240
      %v3291 = vpack.c.b16 %v3243, %v3242
      %v3292 = vpack.c.b16 %v3245, %v3244
      %v3293 = vpack.c.b16 %v3247, %v3246
      %v3294 = vpack.c.b16 %v3249, %v3248
      %v3295 = vpack.c.b16 %v3251, %v3250
      %v3296 = vpack.c.b16 %v3253, %v3252
      %v3297 = vpack.c.b16 %v3255, %v3254
      %v3298 = vpack.c.b16 %v3257, %v3256
      %v3299 = vpack.c.b16 %v3259, %v3258
      %v3300 = vpack.c.b16 %v3261, %v3260
      %v3301 = vpack.c.b16 %v3263, %v3262
      %v3302 = vpack.c.b16 %v3265, %v3264
      %v3303 = vpack.c.b16 %v3267, %v3266
      %v3341 = vsel %vm764, %v3044, 0
      %3343 = vmatprep.subr.bf16.mxu0 0
      %3344 = vmatpush1.bf16.msra.mxu0 %v3268
      %3345 = vmatprep.subr.bf16.mxu0 0
      %3346 = vmatpush1.bf16.msra.mxu0 %v3269
      %3347 = vmatprep.subr.bf16.mxu0 0
      %3348 = vmatpush1.bf16.msra.mxu0 %v3270
      %3349 = vmatprep.subr.bf16.mxu0 0
      %3350 = vmatpush1.bf16.msra.mxu0 %v3271
      %3351 = vmatprep.subr.bf16.mxu0 0
      %3352 = vmatpush1.bf16.msra.mxu0 %v3272
      %3353 = vmatprep.subr.bf16.mxu0 0
      %3354 = vmatpush1.bf16.msra.mxu0 %v3273
      %3355 = vmatprep.subr.bf16.mxu0 0
      %3356 = vmatpush1.bf16.msra.mxu0 %v3274
      %3357 = vmatprep.subr.bf16.mxu0 0
      %3358 = vmatpush1.bf16.msra.mxu0 %v3275
      %3359 = vmatprep.subr.bf16.mxu0 0
      %3360 = vmatpush1.bf16.msra.mxu0 %v3276
      %3361 = vmatprep.subr.bf16.mxu0 0
      %3362 = vmatpush1.bf16.msra.mxu0 %v3277
      %3363 = vmatprep.subr.bf16.mxu0 0
      %3364 = vmatpush1.bf16.msra.mxu0 %v3278
      %3365 = vmatprep.subr.bf16.mxu0 0
      %3366 = vmatpush1.bf16.msra.mxu0 %v3279
      %3367 = vmatprep.subr.bf16.mxu0 0
      %3368 = vmatpush1.bf16.msra.mxu0 %v3280
      %3369 = vmatprep.subr.bf16.mxu0 0
      %3370 = vmatpush1.bf16.msra.mxu0 %v3281
      %3371 = vmatprep.subr.bf16.mxu0 0
      %3372 = vmatpush1.bf16.msra.mxu0 %v3282
      %3373 = vmatprep.subr.bf16.mxu0 0
      %3374 = vmatpush1.bf16.msra.mxu0 %v3283
      %3375 = vmatprep.mubr.bf16.mxu0 %v3041
      %3376 = vmatmul.mubr.bf16.gmra.mrb[0].mxu0 %v3040
      %v3377 = vpop.f32.mrb[0].mxu0
      %v3378 = vadd.f32 %v3122, %v3377
      %v3379 = vpop.f32.mrb[0].mxu0
      %v3380 = vpop.f32.mrb[0].mxu0
      %v3381 = vadd.f32 %v3122, %v3380
      %v3382 = vpop.f32.mrb[0].mxu0
      %3383 = vdwg.mxu0
      %3384 = vmatprep.subr.bf16.mxu0 0
      %3385 = vmatpush1.bf16.msra.mxu0 %v3284
      %3386 = vmatprep.subr.bf16.mxu0 0
      %3387 = vmatpush1.bf16.msra.mxu0 %v3285
      %3388 = vmatprep.subr.bf16.mxu0 0
      %3389 = vmatpush1.bf16.msra.mxu0 %v3286
      %3390 = vmatprep.subr.bf16.mxu0 0
      %3391 = vmatpush1.bf16.msra.mxu0 %v3287
      %3392 = vmatprep.subr.bf16.mxu0 0
      %3393 = vmatpush1.bf16.msra.mxu0 %v3288
      %3394 = vmatprep.subr.bf16.mxu0 0
      %3395 = vmatpush1.bf16.msra.mxu0 %v3289
      %3396 = vmatprep.subr.bf16.mxu0 0
      %3397 = vmatpush1.bf16.msra.mxu0 %v3290
      %3398 = vmatprep.subr.bf16.mxu0 0
      %3399 = vmatpush1.bf16.msra.mxu0 %v3291
      %3400 = vmatprep.subr.bf16.mxu0 0
      %3401 = vmatpush1.bf16.msra.mxu0 %v3292
      %3402 = vmatprep.subr.bf16.mxu0 0
      %3403 = vmatpush1.bf16.msra.mxu0 %v3293
      %3404 = vmatprep.subr.bf16.mxu0 0
      %3405 = vmatpush1.bf16.msra.mxu0 %v3294
      %3406 = vmatprep.subr.bf16.mxu0 0
      %3407 = vmatpush1.bf16.msra.mxu0 %v3295
      %3408 = vmatprep.subr.bf16.mxu0 0
      %3409 = vmatpush1.bf16.msra.mxu0 %v3296
      %3410 = vmatprep.subr.bf16.mxu0 0
      %3411 = vmatpush1.bf16.msra.mxu0 %v3297
      %3412 = vmatprep.subr.bf16.mxu0 0
      %3413 = vmatpush1.bf16.msra.mxu0 %v3298
      %3414 = vmatprep.subr.bf16.mxu0 0
      %3415 = vmatpush1.bf16.msra.mxu0 %v3299
      %3416 = vmatprep.mubr.bf16.mxu0 %v3043
      %3417 = vmatmul.mubr.bf16.gmra.mrb[0].mxu0 %v3042
      %v3418 = vpop.f32.mrb[0].mxu0
      %v3419 = vadd.f32 %v3378, %v3418
      %v3420 = vpop.f32.mrb[0].mxu0
      %v3421 = vpop.f32.mrb[0].mxu0
      %v3422 = vadd.f32 %v3381, %v3421
      %v3423 = vpop.f32.mrb[0].mxu0
      %3424 = vdwg.mxu0
      %3425 = vmatprep.subr.bf16.mxu0 0
      %3426 = vmatpush1.bf16.msra.mxu0 %v3300
      %3427 = vmatprep.subr.bf16.mxu0 0
      %3428 = vmatpush1.bf16.msra.mxu0 %v3301
      %3429 = vmatprep.subr.bf16.mxu0 0
      %3430 = vmatpush1.bf16.msra.mxu0 %v3302
      %3431 = vmatprep.subr.bf16.mxu0 0
      %3432 = vmatpush1.bf16.msra.mxu0 %v3303
      %3433 = vmatprep.subr.bf16.mxu0 0
      %3434 = vmatpush1.bf16.msra.mxu0 0
      %3435 = vmatprep.subr.bf16.mxu0 0
      %3436 = vmatpush1.bf16.msra.mxu0 0
      %3437 = vmatprep.subr.bf16.mxu0 0
      %3438 = vmatpush1.bf16.msra.mxu0 0
      %3439 = vmatprep.subr.bf16.mxu0 0
      %3440 = vmatpush1.bf16.msra.mxu0 0
      %3441 = vmatprep.subr.bf16.mxu0 0
      %3442 = vmatpush1.bf16.msra.mxu0 0
      %3443 = vmatprep.subr.bf16.mxu0 0
      %3444 = vmatpush1.bf16.msra.mxu0 0
      %3445 = vmatprep.subr.bf16.mxu0 0
      %3446 = vmatpush1.bf16.msra.mxu0 0
      %3447 = vmatprep.subr.bf16.mxu0 0
      %3448 = vmatpush1.bf16.msra.mxu0 0
      %3449 = vmatprep.subr.bf16.mxu0 0
      %3450 = vmatpush1.bf16.msra.mxu0 0
      %3451 = vmatprep.subr.bf16.mxu0 0
      %3452 = vmatpush1.bf16.msra.mxu0 0
      %3453 = vmatprep.subr.bf16.mxu0 0
      %3454 = vmatpush1.bf16.msra.mxu0 0
      %3455 = vmatprep.subr.bf16.mxu0 0
      %3456 = vmatpush1.bf16.msra.mxu0 0
      %3457 = vmatprep.mubr.bf16.mxu0 0
      %3458 = vmatmul.mubr.bf16.gmra.mrb[0].mxu0 %v3341
      %v3459 = vpop.f32.mrb[0].mxu0
      %v3460 = vadd.f32 %v3419, %v3459
      %v3461 = vpop.f32.mrb[0].mxu0
      %v3462 = vpop.f32.mrb[0].mxu0
      %v3463 = vadd.f32 %v3422, %v3462
      %v3464 = vpop.f32.mrb[0].mxu0
      %3465 = vdwg.mxu0
      %v3466 = vxor.u32 %v3460, 2147483648
      %v3467 = vxor.u32 %v3463, 2147483648
      %v3468 = vmul.f32 %v3466, 1.442695
      %v3469 = vpow.pop %v3468
      %v3470 = vmul.f32 %v3467, 1.442695
      %v3471 = vpow.pop %v3470
      %v3472 = vadd.f32 %v3469, 1.0
      %v3473 = vadd.f32 %v3471, 1.0
      %v3474 = vrcp.pop %v3472
      %v3475 = vmul.f32 1.0, %v3474
      %v3476 = vrcp.pop %v3473
      %v3477 = vmul.f32 1.0, %v3476
      %v3478 = vmul.f32 %v3460, %v3475
      %v3479 = vmul.f32 %v3463, %v3477
      %v3482 = vrot.slane %v3478, 3
      %v3483 = vrot.slane %v3479, 3
      %v3484 = vsel %vm632, %v3482, %v3483
      %v3488 = vsel %vm632, 0.0, %v3482
      %v3489 = vsel %vm632, %v3483, 0.0
      %v3490 = vsel %vm643, %v3488, 0.0
      %v3491 = vsel %vm644, %v3484, 0.0
      %v3494 = vrot.slane %v3488, 2
      %v3495 = vrot.slane %v3484, 2
      %v3496 = vsel %vm653, %v3494, %v3495
      %v3497 = vrot.slane %v3489, 2
      %v3498 = vsel %vm653, %v3495, %v3497
      %v3501 = vsel %vm649, %v3496, 0.0
      %v3502 = vsel %vm650, %v3498, 0.0
      %v3503 = vrot.slane %v3488, 4
      %v3504 = vrot.slane %v3484, 4
      %v3505 = vsel %vm663, %v3503, %v3504
      %v3506 = vrot.slane %v3489, 4
      %v3507 = vsel %vm663, %v3504, %v3506
      %v3510 = vsel %vm643, %v3505, 0.0
      %v3511 = vsel %vm644, %v3507, 0.0
      %v3512 = vrot.slane %v3488, 6
      %v3513 = vrot.slane %v3484, 6
      %v3514 = vsel %vm673, %v3512, %v3513
      %v3515 = vrot.slane %v3489, 6
      %v3516 = vsel %vm673, %v3513, %v3515
      %v3519 = vsel %vm649, %v3514, 0.0
      %v3520 = vsel %vm650, %v3516, 0.0
      %v3521 = vsel %vm643, %v3484, 0.0
      %v3522 = vsel %vm644, %v3489, 0.0
      %v3523 = vsel %vm653, %v3497, %v686
      %v3525 = vsel %vm649, %v3498, 0.0
      %v3526 = vsel %vm650, %v3523, 0.0
      %v3527 = vrot.slane %v3488, 1
      %v3528 = vrot.slane %v3484, 1
      %v3529 = vsel %vm691, %v3527, %v3528
      %v3530 = vrot.slane %v3489, 1
      %v3531 = vsel %vm691, %v3528, %v3530
      %3532 = vrot.lane.b32.xlu0 %v3529, 64
      %v3533 = vpop.permute.xlu0 %3532
      %3534 = vrot.lane.b32.xlu0 %v3531, 64
      %v3535 = vpop.permute.xlu0 %3534
      %3540 = vrot.lane.b32.xlu0 %v3510, 64
      %v3541 = vpop.permute.xlu0 %3540
      %3542 = vrot.lane.b32.xlu0 %v3511, 64
      %v3543 = vpop.permute.xlu0 %3542
      %v3546 = vrot.slane %v3488, 5
      %v3547 = vrot.slane %v3484, 5
      %v3548 = vsel %vm719, %v3546, %v3547
      %v3549 = vrot.slane %v3489, 5
      %v3550 = vsel %vm719, %v3547, %v3549
      %3555 = vrot.lane.b32.xlu0 %v3519, 64
      %v3556 = vpop.permute.xlu0 %3555
      %3557 = vrot.lane.b32.xlu0 %v3520, 64
      %v3558 = vpop.permute.xlu0 %3557
      %v3561 = vsel %vm691, %v3530, %v747
      %3562 = vrot.lane.b32.xlu0 %v3561, 64
      %v3563 = vpop.permute.xlu0 %3562
      %v3565 = vsel %vm764, %v3490, %v3533
      %v3566 = vsel %vm764, %v3491, %v3535
      %v3567 = vsel %vm764, %v3501, %v3541
      %v3568 = vsel %vm764, %v3502, %v3543
      %v3569 = vsel %vm764, %v3548, %v3556
      %v3570 = vsel %vm764, %v3550, %v3558
      %v3571 = vsel %vm764, %v3521, %v3535
      %v3572 = vsel %vm764, %v3522, %v3563
      %v3573 = vpack.c.bf16 %v3566, %v3565
      %v3574 = vpack.c.bf16 %v3568, %v3567
      %v3575 = vpack.c.bf16 %v3570, %v3569
      %v3576 = vpack.c.bf16 %v3572, %v3571
      %v3577 = vpack.c.bf16 %v3526, %v3525
      %v3578 = vld [vmem:[%s14] sm:$0xf]
      %v3579 = vld [vmem:[%s14 + $0x4] sm:$0xf]
      %v3580 = vld [vmem:[%s14 + $0x8] sm:$0xf]
      %v3581 = vld [vmem:[%s14 + $0xc] sm:$0xf]
      %v3582 = vld [vmem:[%s14 + $0x10] sm:$0xf]
      %v3583 = vld [vmem:[%s14 + $0x14] sm:$0xf]
      %v3584 = vld [vmem:[%s14 + $0x18] sm:$0xf]
      %v3585 = vld [vmem:[%s14 + $0x1c] sm:$0xf]
      %v3586 = vld [vmem:[%s14 + $0x20] sm:$0xf]
      %v3587 = vld [vmem:[%s14 + $0x24] sm:$0xf]
      %v3588 = vld [vmem:[%s14 + $0x28] sm:$0xf]
      %v3589 = vld [vmem:[%s14 + $0x2c] sm:$0xf]
      %v3590 = vld [vmem:[%s14 + $0x30] sm:$0xf]
      %v3591 = vld [vmem:[%s14 + $0x34] sm:$0xf]
      %v3592 = vld [vmem:[%s14 + $0x38] sm:$0xf]
      %v3593 = vld [vmem:[%s14 + $0x3c] sm:$0xf]
      %v3594 = vld [vmem:[%s14 + $0x40] sm:$0xf]
      %v3595 = vld [vmem:[%s14 + $0x44] sm:$0xf]
      %v3596 = vld [vmem:[%s14 + $0x48] sm:$0xf]
      %v3597 = vld [vmem:[%s14 + $0x4c] sm:$0xf]
      %v3598 = vld [vmem:[%s14 + $0x50] sm:$0xf]
      %v3599 = vld [vmem:[%s14 + $0x54] sm:$0xf]
      %v3600 = vld [vmem:[%s14 + $0x58] sm:$0xf]
      %v3601 = vld [vmem:[%s14 + $0x5c] sm:$0xf]
      %v3602 = vld [vmem:[%s14 + $0x60] sm:$0xf]
      %v3603 = vld [vmem:[%s14 + $0x64] sm:$0xf]
      %v3604 = vld [vmem:[%s14 + $0x68] sm:$0xf]
      %v3605 = vld [vmem:[%s14 + $0x6c] sm:$0xf]
      %v3606 = vld [vmem:[%s14 + $0x70] sm:$0xf]
      %v3607 = vld [vmem:[%s14 + $0x74] sm:$0xf]
      %v3608 = vld [vmem:[%s14 + $0x78] sm:$0xf]
      %v3609 = vld [vmem:[%s14 + $0x7c] sm:$0xf]
      %v3610 = vld [vmem:[%s14 + $0x80] sm:$0xf]
      %v3611 = vld [vmem:[%s14 + $0x84] sm:$0xf]
      %v3612 = vld [vmem:[%s14 + $0x88] sm:$0xf]
      %v3613 = vld [vmem:[%s14 + $0x8c] sm:$0xf]
      %v3614 = vld [vmem:[%s14 + $0x90] sm:$0xf]
      %v3615 = vld [vmem:[%s14 + $0x94] sm:$0xf]
      %v3616 = vld [vmem:[%s14 + $0x98] sm:$0xf]
      %v3617 = vld [vmem:[%s14 + $0x9c] sm:$0xf]
      %v3618 = vld [vmem:[%s14 + $0xa0] sm:$0xf]
      %v3619 = vld [vmem:[%s14 + $0xa4] sm:$0xf]
      %v3620 = vld [vmem:[%s14 + $0xa8] sm:$0xf]
      %v3621 = vld [vmem:[%s14 + $0xac] sm:$0xf]
      %v3622 = vld [vmem:[%s14 + $0xb0] sm:$0xf]
      %v3623 = vld [vmem:[%s14 + $0xb4] sm:$0xf]
      %v3624 = vld [vmem:[%s14 + $0xb8] sm:$0xf]
      %v3625 = vld [vmem:[%s14 + $0xbc] sm:$0xf]
      %v3626 = vld [vmem:[%s14 + $0xc0] sm:$0xf]
      %v3627 = vld [vmem:[%s14 + $0xc4] sm:$0xf]
      %v3628 = vld [vmem:[%s14 + $0xc8] sm:$0xf]
      %v3629 = vld [vmem:[%s14 + $0xcc] sm:$0xf]
      %v3630 = vld [vmem:[%s14 + $0xd0] sm:$0xf]
      %v3631 = vld [vmem:[%s14 + $0xd4] sm:$0xf]
      %v3632 = vld [vmem:[%s14 + $0xd8] sm:$0xf]
      %v3633 = vld [vmem:[%s14 + $0xdc] sm:$0xf]
      %v3634 = vld [vmem:[%s14 + $0xe0] sm:$0xf]
      %v3635 = vld [vmem:[%s14 + $0xe4] sm:$0xf]
      %v3636 = vld [vmem:[%s14 + $0xe8] sm:$0xf]
      %v3637 = vld [vmem:[%s14 + $0xec] sm:$0xf]
      %v3638 = vld [vmem:[%s14 + $0xf0] sm:$0xf]
      %v3639 = vld [vmem:[%s14 + $0xf4] sm:$0xf]
      %v3640 = vld [vmem:[%s14 + $0xf8] sm:$0xf]
      %v3641 = vld [vmem:[%s14 + $0xfc] sm:$0xf]
      %v3642 = vld [vmem:[%s14 + $0x100] sm:$0xf]
      %v3643 = vld [vmem:[%s14 + $0x104] sm:$0xf]
      %v3644 = vld [vmem:[%s14 + $0x108] sm:$0xf]
      %v3645 = vld [vmem:[%s14 + $0x10c] sm:$0xf]
      %v3646 = vld [vmem:[%s14 + $0x110] sm:$0xf]
      %v3647 = vld [vmem:[%s14 + $0x114] sm:$0xf]
      %v3648 = vld [vmem:[%s14 + $0x118] sm:$0xf]
      %v3649 = vld [vmem:[%s14 + $0x11c] sm:$0xf]
      %v3650 = vld [vmem:[%s15] sm:$0x1]
      %v3652 = vlaneseq
      %v3653 = vshrl.u32 %v3652, 7
      %v3654 = vsub.s32 0, %v3653
      %v3655 = vrot.slane %v3650, %v3654
      %v3729 = vunpack.c.l.b16 %v3578
      %v3730 = vunpack.c.l.b16 %v3579
      %v3731 = vunpack.c.l.b16 %v3580
      %v3732 = vunpack.c.l.b16 %v3581
      %v3733 = vunpack.c.l.b16 %v3582
      %v3734 = vunpack.c.l.b16 %v3583
      %v3735 = vunpack.c.l.b16 %v3584
      %v3736 = vunpack.c.l.b16 %v3585
      %v3737 = vunpack.c.l.b16 %v3586
      %v3738 = vunpack.c.l.b16 %v3587
      %v3739 = vunpack.c.l.b16 %v3588
      %v3740 = vunpack.c.l.b16 %v3589
      %v3741 = vunpack.c.l.b16 %v3590
      %v3742 = vunpack.c.l.b16 %v3591
      %v3743 = vunpack.c.l.b16 %v3592
      %v3744 = vunpack.c.l.b16 %v3593
      %v3745 = vunpack.c.l.b16 %v3594
      %v3746 = vunpack.c.l.b16 %v3595
      %v3747 = vunpack.c.l.b16 %v3596
      %v3748 = vunpack.c.l.b16 %v3597
      %v3749 = vunpack.c.l.b16 %v3598
      %v3750 = vunpack.c.l.b16 %v3599
      %v3751 = vunpack.c.l.b16 %v3600
      %v3752 = vunpack.c.l.b16 %v3601
      %v3753 = vunpack.c.l.b16 %v3602
      %v3754 = vunpack.c.l.b16 %v3603
      %v3755 = vunpack.c.l.b16 %v3604
      %v3756 = vunpack.c.l.b16 %v3605
      %v3757 = vunpack.c.l.b16 %v3606
      %v3758 = vunpack.c.l.b16 %v3607
      %v3759 = vunpack.c.l.b16 %v3608
      %v3760 = vunpack.c.l.b16 %v3609
      %v3761 = vunpack.c.l.b16 %v3610
      %v3762 = vunpack.c.l.b16 %v3611
      %v3763 = vunpack.c.l.b16 %v3612
      %v3764 = vunpack.c.l.b16 %v3613
      %v3765 = vunpack.c.l.b16 %v3614
      %v3766 = vunpack.c.l.b16 %v3615
      %v3767 = vunpack.c.l.b16 %v3616
      %v3768 = vunpack.c.l.b16 %v3617
      %v3769 = vunpack.c.l.b16 %v3618
      %v3770 = vunpack.c.l.b16 %v3619
      %v3771 = vunpack.c.l.b16 %v3620
      %v3772 = vunpack.c.l.b16 %v3621
      %v3773 = vunpack.c.l.b16 %v3622
      %v3774 = vunpack.c.l.b16 %v3623
      %v3775 = vunpack.c.l.b16 %v3624
      %v3776 = vunpack.c.l.b16 %v3625
      %v3777 = vunpack.c.l.b16 %v3626
      %v3778 = vunpack.c.l.b16 %v3627
      %v3779 = vunpack.c.l.b16 %v3628
      %v3780 = vunpack.c.l.b16 %v3629
      %v3781 = vunpack.c.l.b16 %v3630
      %v3782 = vunpack.c.l.b16 %v3631
      %v3783 = vunpack.c.l.b16 %v3632
      %v3784 = vunpack.c.l.b16 %v3633
      %v3785 = vunpack.c.l.b16 %v3634
      %v3786 = vunpack.c.l.b16 %v3635
      %v3787 = vunpack.c.l.b16 %v3636
      %v3788 = vunpack.c.l.b16 %v3637
      %v3789 = vunpack.c.l.b16 %v3638
      %v3790 = vunpack.c.l.b16 %v3639
      %v3791 = vunpack.c.l.b16 %v3640
      %v3792 = vunpack.c.l.b16 %v3641
      %v3793 = vunpack.c.l.b16 %v3642
      %v3794 = vunpack.c.l.b16 %v3643
      %v3795 = vunpack.c.l.b16 %v3644
      %v3796 = vunpack.c.l.b16 %v3645
      %v3797 = vunpack.c.l.b16 %v3646
      %v3798 = vunpack.c.l.b16 %v3647
      %v3799 = vunpack.c.l.b16 %v3648
      %v3800 = vunpack.c.l.b16 %v3649
      %v3801 = vpack.c.b16 %v3730, %v3729
      %v3802 = vpack.c.b16 %v3732, %v3731
      %v3803 = vpack.c.b16 %v3734, %v3733
      %v3804 = vpack.c.b16 %v3736, %v3735
      %v3805 = vpack.c.b16 %v3738, %v3737
      %v3806 = vpack.c.b16 %v3740, %v3739
      %v3807 = vpack.c.b16 %v3742, %v3741
      %v3808 = vpack.c.b16 %v3744, %v3743
      %v3809 = vpack.c.b16 %v3746, %v3745
      %v3810 = vpack.c.b16 %v3748, %v3747
      %v3811 = vpack.c.b16 %v3750, %v3749
      %v3812 = vpack.c.b16 %v3752, %v3751
      %v3813 = vpack.c.b16 %v3754, %v3753
      %v3814 = vpack.c.b16 %v3756, %v3755
      %v3815 = vpack.c.b16 %v3758, %v3757
      %v3816 = vpack.c.b16 %v3760, %v3759
      %v3817 = vpack.c.b16 %v3762, %v3761
      %v3818 = vpack.c.b16 %v3764, %v3763
      %v3819 = vpack.c.b16 %v3766, %v3765
      %v3820 = vpack.c.b16 %v3768, %v3767
      %v3821 = vpack.c.b16 %v3770, %v3769
      %v3822 = vpack.c.b16 %v3772, %v3771
      %v3823 = vpack.c.b16 %v3774, %v3773
      %v3824 = vpack.c.b16 %v3776, %v3775
      %v3825 = vpack.c.b16 %v3778, %v3777
      %v3826 = vpack.c.b16 %v3780, %v3779
      %v3827 = vpack.c.b16 %v3782, %v3781
      %v3828 = vpack.c.b16 %v3784, %v3783
      %v3829 = vpack.c.b16 %v3786, %v3785
      %v3830 = vpack.c.b16 %v3788, %v3787
      %v3831 = vpack.c.b16 %v3790, %v3789
      %v3832 = vpack.c.b16 %v3792, %v3791
      %v3833 = vpack.c.b16 %v3794, %v3793
      %v3834 = vpack.c.b16 %v3796, %v3795
      %v3835 = vpack.c.b16 %v3798, %v3797
      %v3836 = vpack.c.b16 %v3800, %v3799
      %v3874 = vsel %vm764, %v3577, 0
      %3876 = vmatprep.subr.bf16.mxu0 0
      %3877 = vmatpush1.bf16.msra.mxu0 %v3801
      %3878 = vmatprep.subr.bf16.mxu0 0
      %3879 = vmatpush1.bf16.msra.mxu0 %v3802
      %3880 = vmatprep.subr.bf16.mxu0 0
      %3881 = vmatpush1.bf16.msra.mxu0 %v3803
      %3882 = vmatprep.subr.bf16.mxu0 0
      %3883 = vmatpush1.bf16.msra.mxu0 %v3804
      %3884 = vmatprep.subr.bf16.mxu0 0
      %3885 = vmatpush1.bf16.msra.mxu0 %v3805
      %3886 = vmatprep.subr.bf16.mxu0 0
      %3887 = vmatpush1.bf16.msra.mxu0 %v3806
      %3888 = vmatprep.subr.bf16.mxu0 0
      %3889 = vmatpush1.bf16.msra.mxu0 %v3807
      %3890 = vmatprep.subr.bf16.mxu0 0
      %3891 = vmatpush1.bf16.msra.mxu0 %v3808
      %3892 = vmatprep.subr.bf16.mxu0 0
      %3893 = vmatpush1.bf16.msra.mxu0 %v3809
      %3894 = vmatprep.subr.bf16.mxu0 0
      %3895 = vmatpush1.bf16.msra.mxu0 %v3810
      %3896 = vmatprep.subr.bf16.mxu0 0
      %3897 = vmatpush1.bf16.msra.mxu0 %v3811
      %3898 = vmatprep.subr.bf16.mxu0 0
      %3899 = vmatpush1.bf16.msra.mxu0 %v3812
      %3900 = vmatprep.subr.bf16.mxu0 0
      %3901 = vmatpush1.bf16.msra.mxu0 %v3813
      %3902 = vmatprep.subr.bf16.mxu0 0
      %3903 = vmatpush1.bf16.msra.mxu0 %v3814
      %3904 = vmatprep.subr.bf16.mxu0 0
      %3905 = vmatpush1.bf16.msra.mxu0 %v3815
      %3906 = vmatprep.subr.bf16.mxu0 0
      %3907 = vmatpush1.bf16.msra.mxu0 %v3816
      %3908 = vmatprep.mubr.bf16.mxu0 %v3574
      %3909 = vmatmul.mubr.bf16.gmra.mrb[0].mxu0 %v3573
      %v3910 = vpop.f32.mrb[0].mxu0
      %v3911 = vadd.f32 %v3655, %v3910
      %v3912 = vpop.f32.mrb[0].mxu0
      %v3913 = vpop.f32.mrb[0].mxu0
      %v3914 = vadd.f32 %v3655, %v3913
      %v3915 = vpop.f32.mrb[0].mxu0
      %3916 = vdwg.mxu0
      %3917 = vmatprep.subr.bf16.mxu0 0
      %3918 = vmatpush1.bf16.msra.mxu0 %v3817
      %3919 = vmatprep.subr.bf16.mxu0 0
      %3920 = vmatpush1.bf16.msra.mxu0 %v3818
      %3921 = vmatprep.subr.bf16.mxu0 0
      %3922 = vmatpush1.bf16.msra.mxu0 %v3819
      %3923 = vmatprep.subr.bf16.mxu0 0
      %3924 = vmatpush1.bf16.msra.mxu0 %v3820
      %3925 = vmatprep.subr.bf16.mxu0 0
      %3926 = vmatpush1.bf16.msra.mxu0 %v3821
      %3927 = vmatprep.subr.bf16.mxu0 0
      %3928 = vmatpush1.bf16.msra.mxu0 %v3822
      %3929 = vmatprep.subr.bf16.mxu0 0
      %3930 = vmatpush1.bf16.msra.mxu0 %v3823
      %3931 = vmatprep.subr.bf16.mxu0 0
      %3932 = vmatpush1.bf16.msra.mxu0 %v3824
      %3933 = vmatprep.subr.bf16.mxu0 0
      %3934 = vmatpush1.bf16.msra.mxu0 %v3825
      %3935 = vmatprep.subr.bf16.mxu0 0
      %3936 = vmatpush1.bf16.msra.mxu0 %v3826
      %3937 = vmatprep.subr.bf16.mxu0 0
      %3938 = vmatpush1.bf16.msra.mxu0 %v3827
      %3939 = vmatprep.subr.bf16.mxu0 0
      %3940 = vmatpush1.bf16.msra.mxu0 %v3828
      %3941 = vmatprep.subr.bf16.mxu0 0
      %3942 = vmatpush1.bf16.msra.mxu0 %v3829
      %3943 = vmatprep.subr.bf16.mxu0 0
      %3944 = vmatpush1.bf16.msra.mxu0 %v3830
      %3945 = vmatprep.subr.bf16.mxu0 0
      %3946 = vmatpush1.bf16.msra.mxu0 %v3831
      %3947 = vmatprep.subr.bf16.mxu0 0
      %3948 = vmatpush1.bf16.msra.mxu0 %v3832
      %3949 = vmatprep.mubr.bf16.mxu0 %v3576
      %3950 = vmatmul.mubr.bf16.gmra.mrb[0].mxu0 %v3575
      %v3951 = vpop.f32.mrb[0].mxu0
      %v3952 = vadd.f32 %v3911, %v3951
      %v3953 = vpop.f32.mrb[0].mxu0
      %v3954 = vpop.f32.mrb[0].mxu0
      %v3955 = vadd.f32 %v3914, %v3954
      %v3956 = vpop.f32.mrb[0].mxu0
      %3957 = vdwg.mxu0
      %3958 = vmatprep.subr.bf16.mxu0 0
      %3959 = vmatpush1.bf16.msra.mxu0 %v3833
      %3960 = vmatprep.subr.bf16.mxu0 0
      %3961 = vmatpush1.bf16.msra.mxu0 %v3834
      %3962 = vmatprep.subr.bf16.mxu0 0
      %3963 = vmatpush1.bf16.msra.mxu0 %v3835
      %3964 = vmatprep.subr.bf16.mxu0 0
      %3965 = vmatpush1.bf16.msra.mxu0 %v3836
      %3966 = vmatprep.subr.bf16.mxu0 0
      %3967 = vmatpush1.bf16.msra.mxu0 0
      %3968 = vmatprep.subr.bf16.mxu0 0
      %3969 = vmatpush1.bf16.msra.mxu0 0
      %3970 = vmatprep.subr.bf16.mxu0 0
      %3971 = vmatpush1.bf16.msra.mxu0 0
      %3972 = vmatprep.subr.bf16.mxu0 0
      %3973 = vmatpush1.bf16.msra.mxu0 0
      %3974 = vmatprep.subr.bf16.mxu0 0
      %3975 = vmatpush1.bf16.msra.mxu0 0
      %3976 = vmatprep.subr.bf16.mxu0 0
      %3977 = vmatpush1.bf16.msra.mxu0 0
      %3978 = vmatprep.subr.bf16.mxu0 0
      %3979 = vmatpush1.bf16.msra.mxu0 0
      %3980 = vmatprep.subr.bf16.mxu0 0
      %3981 = vmatpush1.bf16.msra.mxu0 0
      %3982 = vmatprep.subr.bf16.mxu0 0
      %3983 = vmatpush1.bf16.msra.mxu0 0
      %3984 = vmatprep.subr.bf16.mxu0 0
      %3985 = vmatpush1.bf16.msra.mxu0 0
      %3986 = vmatprep.subr.bf16.mxu0 0
      %3987 = vmatpush1.bf16.msra.mxu0 0
      %3988 = vmatprep.subr.bf16.mxu0 0
      %3989 = vmatpush1.bf16.msra.mxu0 0
      %3990 = vmatprep.mubr.bf16.mxu0 0
      %3991 = vmatmul.mubr.bf16.gmra.mrb[0].mxu0 %v3874
      %v3992 = vpop.f32.mrb[0].mxu0
      %v3993 = vadd.f32 %v3952, %v3992
      %v3994 = vpop.f32.mrb[0].mxu0
      %v3995 = vpop.f32.mrb[0].mxu0
      %v3996 = vadd.f32 %v3955, %v3995
      %v3997 = vpop.f32.mrb[0].mxu0
      %3998 = vdwg.mxu0
      %v3999 = vxor.u32 %v3993, 2147483648
      %v4000 = vxor.u32 %v3996, 2147483648
      %v4001 = vmul.f32 %v3999, 1.442695
      %v4002 = vpow.pop %v4001
      %v4003 = vmul.f32 %v4000, 1.442695
      %v4004 = vpow.pop %v4003
      %v4005 = vadd.f32 %v4002, 1.0
      %v4006 = vadd.f32 %v4004, 1.0
      %v4007 = vrcp.pop %v4005
      %v4008 = vmul.f32 1.0, %v4007
      %v4009 = vrcp.pop %v4006
      %v4010 = vmul.f32 1.0, %v4009
      %v4011 = vmul.f32 %v3993, %v4008
      %v4012 = vmul.f32 %v3996, %v4010
      %v4015 = vrot.slane %v4011, 3
      %v4016 = vrot.slane %v4012, 3
      %v4017 = vsel %vm632, %v4015, %v4016
      %v4021 = vsel %vm632, 0.0, %v4015
      %v4022 = vsel %vm632, %v4016, 0.0
      %v4023 = vsel %vm643, %v4021, 0.0
      %v4024 = vsel %vm644, %v4017, 0.0
      %v4027 = vrot.slane %v4021, 2
      %v4028 = vrot.slane %v4017, 2
      %v4029 = vsel %vm653, %v4027, %v4028
      %v4030 = vrot.slane %v4022, 2
      %v4031 = vsel %vm653, %v4028, %v4030
      %v4034 = vsel %vm649, %v4029, 0.0
      %v4035 = vsel %vm650, %v4031, 0.0
      %v4036 = vrot.slane %v4021, 4
      %v4037 = vrot.slane %v4017, 4
      %v4038 = vsel %vm663, %v4036, %v4037
      %v4039 = vrot.slane %v4022, 4
      %v4040 = vsel %vm663, %v4037, %v4039
      %v4043 = vsel %vm643, %v4038, 0.0
      %v4044 = vsel %vm644, %v4040, 0.0
      %v4045 = vrot.slane %v4021, 6
      %v4046 = vrot.slane %v4017, 6
      %v4047 = vsel %vm673, %v4045, %v4046
      %v4048 = vrot.slane %v4022, 6
      %v4049 = vsel %vm673, %v4046, %v4048
      %v4052 = vsel %vm649, %v4047, 0.0
      %v4053 = vsel %vm650, %v4049, 0.0
      %v4054 = vsel %vm643, %v4017, 0.0
      %v4055 = vsel %vm644, %v4022, 0.0
      %v4056 = vsel %vm653, %v4030, %v686
      %v4058 = vsel %vm649, %v4031, 0.0
      %v4059 = vsel %vm650, %v4056, 0.0
      %v4060 = vrot.slane %v4021, 1
      %v4061 = vrot.slane %v4017, 1
      %v4062 = vsel %vm691, %v4060, %v4061
      %v4063 = vrot.slane %v4022, 1
      %v4064 = vsel %vm691, %v4061, %v4063
      %4065 = vrot.lane.b32.xlu0 %v4062, 64
      %v4066 = vpop.permute.xlu0 %4065
      %4067 = vrot.lane.b32.xlu0 %v4064, 64
      %v4068 = vpop.permute.xlu0 %4067
      %4073 = vrot.lane.b32.xlu0 %v4043, 64
      %v4074 = vpop.permute.xlu0 %4073
      %4075 = vrot.lane.b32.xlu0 %v4044, 64
      %v4076 = vpop.permute.xlu0 %4075
      %v4079 = vrot.slane %v4021, 5
      %v4080 = vrot.slane %v4017, 5
      %v4081 = vsel %vm719, %v4079, %v4080
      %v4082 = vrot.slane %v4022, 5
      %v4083 = vsel %vm719, %v4080, %v4082
      %4088 = vrot.lane.b32.xlu0 %v4052, 64
      %v4089 = vpop.permute.xlu0 %4088
      %4090 = vrot.lane.b32.xlu0 %v4053, 64
      %v4091 = vpop.permute.xlu0 %4090
      %v4094 = vsel %vm691, %v4063, %v747
      %4095 = vrot.lane.b32.xlu0 %v4094, 64
      %v4096 = vpop.permute.xlu0 %4095
      %v4098 = vsel %vm764, %v4023, %v4066
      %v4099 = vsel %vm764, %v4024, %v4068
      %v4100 = vsel %vm764, %v4034, %v4074
      %v4101 = vsel %vm764, %v4035, %v4076
      %v4102 = vsel %vm764, %v4081, %v4089
      %v4103 = vsel %vm764, %v4083, %v4091
      %v4104 = vsel %vm764, %v4054, %v4068
      %v4105 = vsel %vm764, %v4055, %v4096
      %v4106 = vpack.c.bf16 %v4099, %v4098
      %v4107 = vpack.c.bf16 %v4101, %v4100
      %v4108 = vpack.c.bf16 %v4103, %v4102
      %v4109 = vpack.c.bf16 %v4105, %v4104
      %v4110 = vpack.c.bf16 %v4059, %v4058
      %v4111 = vld [vmem:[%s16] sm:$0xf]
      %v4112 = vld [vmem:[%s16 + $0x4] sm:$0xf]
      %v4113 = vld [vmem:[%s16 + $0x8] sm:$0xf]
      %v4114 = vld [vmem:[%s16 + $0xc] sm:$0xf]
      %v4115 = vld [vmem:[%s16 + $0x10] sm:$0xf]
      %v4116 = vld [vmem:[%s16 + $0x14] sm:$0xf]
      %v4117 = vld [vmem:[%s16 + $0x18] sm:$0xf]
      %v4118 = vld [vmem:[%s16 + $0x1c] sm:$0xf]
      %v4119 = vld [vmem:[%s16 + $0x20] sm:$0xf]
      %v4120 = vld [vmem:[%s16 + $0x24] sm:$0xf]
      %v4121 = vld [vmem:[%s16 + $0x28] sm:$0xf]
      %v4122 = vld [vmem:[%s16 + $0x2c] sm:$0xf]
      %v4123 = vld [vmem:[%s16 + $0x30] sm:$0xf]
      %v4124 = vld [vmem:[%s16 + $0x34] sm:$0xf]
      %v4125 = vld [vmem:[%s16 + $0x38] sm:$0xf]
      %v4126 = vld [vmem:[%s16 + $0x3c] sm:$0xf]
      %v4127 = vld [vmem:[%s16 + $0x40] sm:$0xf]
      %v4128 = vld [vmem:[%s16 + $0x44] sm:$0xf]
      %v4129 = vld [vmem:[%s16 + $0x48] sm:$0xf]
      %v4130 = vld [vmem:[%s16 + $0x4c] sm:$0xf]
      %v4131 = vld [vmem:[%s16 + $0x50] sm:$0xf]
      %v4132 = vld [vmem:[%s16 + $0x54] sm:$0xf]
      %v4133 = vld [vmem:[%s16 + $0x58] sm:$0xf]
      %v4134 = vld [vmem:[%s16 + $0x5c] sm:$0xf]
      %v4135 = vld [vmem:[%s16 + $0x60] sm:$0xf]
      %v4136 = vld [vmem:[%s16 + $0x64] sm:$0xf]
      %v4137 = vld [vmem:[%s16 + $0x68] sm:$0xf]
      %v4138 = vld [vmem:[%s16 + $0x6c] sm:$0xf]
      %v4139 = vld [vmem:[%s16 + $0x70] sm:$0xf]
      %v4140 = vld [vmem:[%s16 + $0x74] sm:$0xf]
      %v4141 = vld [vmem:[%s16 + $0x78] sm:$0xf]
      %v4142 = vld [vmem:[%s16 + $0x7c] sm:$0xf]
      %v4143 = vld [vmem:[%s16 + $0x80] sm:$0xf]
      %v4144 = vld [vmem:[%s16 + $0x84] sm:$0xf]
      %v4145 = vld [vmem:[%s16 + $0x88] sm:$0xf]
      %v4146 = vld [vmem:[%s16 + $0x8c] sm:$0xf]
      %v4147 = vld [vmem:[%s16 + $0x90] sm:$0xf]
      %v4148 = vld [vmem:[%s16 + $0x94] sm:$0xf]
      %v4149 = vld [vmem:[%s16 + $0x98] sm:$0xf]
      %v4150 = vld [vmem:[%s16 + $0x9c] sm:$0xf]
      %v4151 = vld [vmem:[%s16 + $0xa0] sm:$0xf]
      %v4152 = vld [vmem:[%s16 + $0xa4] sm:$0xf]
      %v4153 = vld [vmem:[%s16 + $0xa8] sm:$0xf]
      %v4154 = vld [vmem:[%s16 + $0xac] sm:$0xf]
      %v4155 = vld [vmem:[%s16 + $0xb0] sm:$0xf]
      %v4156 = vld [vmem:[%s16 + $0xb4] sm:$0xf]
      %v4157 = vld [vmem:[%s16 + $0xb8] sm:$0xf]
      %v4158 = vld [vmem:[%s16 + $0xbc] sm:$0xf]
      %v4159 = vld [vmem:[%s16 + $0xc0] sm:$0xf]
      %v4160 = vld [vmem:[%s16 + $0xc4] sm:$0xf]
      %v4161 = vld [vmem:[%s16 + $0xc8] sm:$0xf]
      %v4162 = vld [vmem:[%s16 + $0xcc] sm:$0xf]
      %v4163 = vld [vmem:[%s16 + $0xd0] sm:$0xf]
      %v4164 = vld [vmem:[%s16 + $0xd4] sm:$0xf]
      %v4165 = vld [vmem:[%s16 + $0xd8] sm:$0xf]
      %v4166 = vld [vmem:[%s16 + $0xdc] sm:$0xf]
      %v4167 = vld [vmem:[%s16 + $0xe0] sm:$0xf]
      %v4168 = vld [vmem:[%s16 + $0xe4] sm:$0xf]
      %v4169 = vld [vmem:[%s16 + $0xe8] sm:$0xf]
      %v4170 = vld [vmem:[%s16 + $0xec] sm:$0xf]
      %v4171 = vld [vmem:[%s16 + $0xf0] sm:$0xf]
      %v4172 = vld [vmem:[%s16 + $0xf4] sm:$0xf]
      %v4173 = vld [vmem:[%s16 + $0xf8] sm:$0xf]
      %v4174 = vld [vmem:[%s16 + $0xfc] sm:$0xf]
      %v4175 = vld [vmem:[%s16 + $0x100] sm:$0xf]
      %v4176 = vld [vmem:[%s16 + $0x104] sm:$0xf]
      %v4177 = vld [vmem:[%s16 + $0x108] sm:$0xf]
      %v4178 = vld [vmem:[%s16 + $0x10c] sm:$0xf]
      %v4179 = vld [vmem:[%s16 + $0x110] sm:$0xf]
      %v4180 = vld [vmem:[%s16 + $0x114] sm:$0xf]
      %v4181 = vld [vmem:[%s16 + $0x118] sm:$0xf]
      %v4182 = vld [vmem:[%s16 + $0x11c] sm:$0xf]
      %v4183 = vld [vmem:[%s17] sm:$0x1]
      %v4185 = vlaneseq
      %v4186 = vshrl.u32 %v4185, 7
      %v4187 = vsub.s32 0, %v4186
      %v4188 = vrot.slane %v4183, %v4187
      %v4262 = vunpack.c.l.b16 %v4111
      %v4263 = vunpack.c.l.b16 %v4112
      %v4264 = vunpack.c.l.b16 %v4113
      %v4265 = vunpack.c.l.b16 %v4114
      %v4266 = vunpack.c.l.b16 %v4115
      %v4267 = vunpack.c.l.b16 %v4116
      %v4268 = vunpack.c.l.b16 %v4117
      %v4269 = vunpack.c.l.b16 %v4118
      %v4270 = vunpack.c.l.b16 %v4119
      %v4271 = vunpack.c.l.b16 %v4120
      %v4272 = vunpack.c.l.b16 %v4121
      %v4273 = vunpack.c.l.b16 %v4122
      %v4274 = vunpack.c.l.b16 %v4123
      %v4275 = vunpack.c.l.b16 %v4124
      %v4276 = vunpack.c.l.b16 %v4125
      %v4277 = vunpack.c.l.b16 %v4126
      %v4278 = vunpack.c.l.b16 %v4127
      %v4279 = vunpack.c.l.b16 %v4128
      %v4280 = vunpack.c.l.b16 %v4129
      %v4281 = vunpack.c.l.b16 %v4130
      %v4282 = vunpack.c.l.b16 %v4131
      %v4283 = vunpack.c.l.b16 %v4132
      %v4284 = vunpack.c.l.b16 %v4133
      %v4285 = vunpack.c.l.b16 %v4134
      %v4286 = vunpack.c.l.b16 %v4135
      %v4287 = vunpack.c.l.b16 %v4136
      %v4288 = vunpack.c.l.b16 %v4137
      %v4289 = vunpack.c.l.b16 %v4138
      %v4290 = vunpack.c.l.b16 %v4139
      %v4291 = vunpack.c.l.b16 %v4140
      %v4292 = vunpack.c.l.b16 %v4141
      %v4293 = vunpack.c.l.b16 %v4142
      %v4294 = vunpack.c.l.b16 %v4143
      %v4295 = vunpack.c.l.b16 %v4144
      %v4296 = vunpack.c.l.b16 %v4145
      %v4297 = vunpack.c.l.b16 %v4146
      %v4298 = vunpack.c.l.b16 %v4147
      %v4299 = vunpack.c.l.b16 %v4148
      %v4300 = vunpack.c.l.b16 %v4149
      %v4301 = vunpack.c.l.b16 %v4150
      %v4302 = vunpack.c.l.b16 %v4151
      %v4303 = vunpack.c.l.b16 %v4152
      %v4304 = vunpack.c.l.b16 %v4153
      %v4305 = vunpack.c.l.b16 %v4154
      %v4306 = vunpack.c.l.b16 %v4155
      %v4307 = vunpack.c.l.b16 %v4156
      %v4308 = vunpack.c.l.b16 %v4157
      %v4309 = vunpack.c.l.b16 %v4158
      %v4310 = vunpack.c.l.b16 %v4159
      %v4311 = vunpack.c.l.b16 %v4160
      %v4312 = vunpack.c.l.b16 %v4161
      %v4313 = vunpack.c.l.b16 %v4162
      %v4314 = vunpack.c.l.b16 %v4163
      %v4315 = vunpack.c.l.b16 %v4164
      %v4316 = vunpack.c.l.b16 %v4165
      %v4317 = vunpack.c.l.b16 %v4166
      %v4318 = vunpack.c.l.b16 %v4167
      %v4319 = vunpack.c.l.b16 %v4168
      %v4320 = vunpack.c.l.b16 %v4169
      %v4321 = vunpack.c.l.b16 %v4170
      %v4322 = vunpack.c.l.b16 %v4171
      %v4323 = vunpack.c.l.b16 %v4172
      %v4324 = vunpack.c.l.b16 %v4173
      %v4325 = vunpack.c.l.b16 %v4174
      %v4326 = vunpack.c.l.b16 %v4175
      %v4327 = vunpack.c.l.b16 %v4176
      %v4328 = vunpack.c.l.b16 %v4177
      %v4329 = vunpack.c.l.b16 %v4178
      %v4330 = vunpack.c.l.b16 %v4179
      %v4331 = vunpack.c.l.b16 %v4180
      %v4332 = vunpack.c.l.b16 %v4181
      %v4333 = vunpack.c.l.b16 %v4182
      %v4334 = vpack.c.b16 %v4263, %v4262
      %v4335 = vpack.c.b16 %v4265, %v4264
      %v4336 = vpack.c.b16 %v4267, %v4266
      %v4337 = vpack.c.b16 %v4269, %v4268
      %v4338 = vpack.c.b16 %v4271, %v4270
      %v4339 = vpack.c.b16 %v4273, %v4272
      %v4340 = vpack.c.b16 %v4275, %v4274
      %v4341 = vpack.c.b16 %v4277, %v4276
      %v4342 = vpack.c.b16 %v4279, %v4278
      %v4343 = vpack.c.b16 %v4281, %v4280
      %v4344 = vpack.c.b16 %v4283, %v4282
      %v4345 = vpack.c.b16 %v4285, %v4284
      %v4346 = vpack.c.b16 %v4287, %v4286
      %v4347 = vpack.c.b16 %v4289, %v4288
      %v4348 = vpack.c.b16 %v4291, %v4290
      %v4349 = vpack.c.b16 %v4293, %v4292
      %v4350 = vpack.c.b16 %v4295, %v4294
      %v4351 = vpack.c.b16 %v4297, %v4296
      %v4352 = vpack.c.b16 %v4299, %v4298
      %v4353 = vpack.c.b16 %v4301, %v4300
      %v4354 = vpack.c.b16 %v4303, %v4302
      %v4355 = vpack.c.b16 %v4305, %v4304
      %v4356 = vpack.c.b16 %v4307, %v4306
      %v4357 = vpack.c.b16 %v4309, %v4308
      %v4358 = vpack.c.b16 %v4311, %v4310
      %v4359 = vpack.c.b16 %v4313, %v4312
      %v4360 = vpack.c.b16 %v4315, %v4314
      %v4361 = vpack.c.b16 %v4317, %v4316
      %v4362 = vpack.c.b16 %v4319, %v4318
      %v4363 = vpack.c.b16 %v4321, %v4320
      %v4364 = vpack.c.b16 %v4323, %v4322
      %v4365 = vpack.c.b16 %v4325, %v4324
      %v4366 = vpack.c.b16 %v4327, %v4326
      %v4367 = vpack.c.b16 %v4329, %v4328
      %v4368 = vpack.c.b16 %v4331, %v4330
      %v4369 = vpack.c.b16 %v4333, %v4332
      %v4407 = vsel %vm764, %v4110, 0
      %4409 = vmatprep.subr.bf16.mxu0 0
      %4410 = vmatpush1.bf16.msra.mxu0 %v4334
      %4411 = vmatprep.subr.bf16.mxu0 0
      %4412 = vmatpush1.bf16.msra.mxu0 %v4335
      %4413 = vmatprep.subr.bf16.mxu0 0
      %4414 = vmatpush1.bf16.msra.mxu0 %v4336
      %4415 = vmatprep.subr.bf16.mxu0 0
      %4416 = vmatpush1.bf16.msra.mxu0 %v4337
      %4417 = vmatprep.subr.bf16.mxu0 0
      %4418 = vmatpush1.bf16.msra.mxu0 %v4338
      %4419 = vmatprep.subr.bf16.mxu0 0
      %4420 = vmatpush1.bf16.msra.mxu0 %v4339
      %4421 = vmatprep.subr.bf16.mxu0 0
      %4422 = vmatpush1.bf16.msra.mxu0 %v4340
      %4423 = vmatprep.subr.bf16.mxu0 0
      %4424 = vmatpush1.bf16.msra.mxu0 %v4341
      %4425 = vmatprep.subr.bf16.mxu0 0
      %4426 = vmatpush1.bf16.msra.mxu0 %v4342
      %4427 = vmatprep.subr.bf16.mxu0 0
      %4428 = vmatpush1.bf16.msra.mxu0 %v4343
      %4429 = vmatprep.subr.bf16.mxu0 0
      %4430 = vmatpush1.bf16.msra.mxu0 %v4344
      %4431 = vmatprep.subr.bf16.mxu0 0
      %4432 = vmatpush1.bf16.msra.mxu0 %v4345
      %4433 = vmatprep.subr.bf16.mxu0 0
      %4434 = vmatpush1.bf16.msra.mxu0 %v4346
      %4435 = vmatprep.subr.bf16.mxu0 0
      %4436 = vmatpush1.bf16.msra.mxu0 %v4347
      %4437 = vmatprep.subr.bf16.mxu0 0
      %4438 = vmatpush1.bf16.msra.mxu0 %v4348
      %4439 = vmatprep.subr.bf16.mxu0 0
      %4440 = vmatpush1.bf16.msra.mxu0 %v4349
      %4441 = vmatprep.mubr.bf16.mxu0 %v4107
      %4442 = vmatmul.mubr.bf16.gmra.mrb[0].mxu0 %v4106
      %v4443 = vpop.f32.mrb[0].mxu0
      %v4444 = vadd.f32 %v4188, %v4443
      %v4445 = vpop.f32.mrb[0].mxu0
      %v4446 = vpop.f32.mrb[0].mxu0
      %v4447 = vadd.f32 %v4188, %v4446
      %v4448 = vpop.f32.mrb[0].mxu0
      %4449 = vdwg.mxu0
      %4450 = vmatprep.subr.bf16.mxu0 0
      %4451 = vmatpush1.bf16.msra.mxu0 %v4350
      %4452 = vmatprep.subr.bf16.mxu0 0
      %4453 = vmatpush1.bf16.msra.mxu0 %v4351
      %4454 = vmatprep.subr.bf16.mxu0 0
      %4455 = vmatpush1.bf16.msra.mxu0 %v4352
      %4456 = vmatprep.subr.bf16.mxu0 0
      %4457 = vmatpush1.bf16.msra.mxu0 %v4353
      %4458 = vmatprep.subr.bf16.mxu0 0
      %4459 = vmatpush1.bf16.msra.mxu0 %v4354
      %4460 = vmatprep.subr.bf16.mxu0 0
      %4461 = vmatpush1.bf16.msra.mxu0 %v4355
      %4462 = vmatprep.subr.bf16.mxu0 0
      %4463 = vmatpush1.bf16.msra.mxu0 %v4356
      %4464 = vmatprep.subr.bf16.mxu0 0
      %4465 = vmatpush1.bf16.msra.mxu0 %v4357
      %4466 = vmatprep.subr.bf16.mxu0 0
      %4467 = vmatpush1.bf16.msra.mxu0 %v4358
      %4468 = vmatprep.subr.bf16.mxu0 0
      %4469 = vmatpush1.bf16.msra.mxu0 %v4359
      %4470 = vmatprep.subr.bf16.mxu0 0
      %4471 = vmatpush1.bf16.msra.mxu0 %v4360
      %4472 = vmatprep.subr.bf16.mxu0 0
      %4473 = vmatpush1.bf16.msra.mxu0 %v4361
      %4474 = vmatprep.subr.bf16.mxu0 0
      %4475 = vmatpush1.bf16.msra.mxu0 %v4362
      %4476 = vmatprep.subr.bf16.mxu0 0
      %4477 = vmatpush1.bf16.msra.mxu0 %v4363
      %4478 = vmatprep.subr.bf16.mxu0 0
      %4479 = vmatpush1.bf16.msra.mxu0 %v4364
      %4480 = vmatprep.subr.bf16.mxu0 0
      %4481 = vmatpush1.bf16.msra.mxu0 %v4365
      %4482 = vmatprep.mubr.bf16.mxu0 %v4109
      %4483 = vmatmul.mubr.bf16.gmra.mrb[0].mxu0 %v4108
      %v4484 = vpop.f32.mrb[0].mxu0
      %v4485 = vadd.f32 %v4444, %v4484
      %v4486 = vpop.f32.mrb[0].mxu0
      %v4487 = vpop.f32.mrb[0].mxu0
      %v4488 = vadd.f32 %v4447, %v4487
      %v4489 = vpop.f32.mrb[0].mxu0
      %4490 = vdwg.mxu0
      %4491 = vmatprep.subr.bf16.mxu0 0
      %4492 = vmatpush1.bf16.msra.mxu0 %v4366
      %4493 = vmatprep.subr.bf16.mxu0 0
      %4494 = vmatpush1.bf16.msra.mxu0 %v4367
      %4495 = vmatprep.subr.bf16.mxu0 0
      %4496 = vmatpush1.bf16.msra.mxu0 %v4368
      %4497 = vmatprep.subr.bf16.mxu0 0
      %4498 = vmatpush1.bf16.msra.mxu0 %v4369
      %4499 = vmatprep.subr.bf16.mxu0 0
      %4500 = vmatpush1.bf16.msra.mxu0 0
      %4501 = vmatprep.subr.bf16.mxu0 0
      %4502 = vmatpush1.bf16.msra.mxu0 0
      %4503 = vmatprep.subr.bf16.mxu0 0
      %4504 = vmatpush1.bf16.msra.mxu0 0
      %4505 = vmatprep.subr.bf16.mxu0 0
      %4506 = vmatpush1.bf16.msra.mxu0 0
      %4507 = vmatprep.subr.bf16.mxu0 0
      %4508 = vmatpush1.bf16.msra.mxu0 0
      %4509 = vmatprep.subr.bf16.mxu0 0
      %4510 = vmatpush1.bf16.msra.mxu0 0
      %4511 = vmatprep.subr.bf16.mxu0 0
      %4512 = vmatpush1.bf16.msra.mxu0 0
      %4513 = vmatprep.subr.bf16.mxu0 0
      %4514 = vmatpush1.bf16.msra.mxu0 0
      %4515 = vmatprep.subr.bf16.mxu0 0
      %4516 = vmatpush1.bf16.msra.mxu0 0
      %4517 = vmatprep.subr.bf16.mxu0 0
      %4518 = vmatpush1.bf16.msra.mxu0 0
      %4519 = vmatprep.subr.bf16.mxu0 0
      %4520 = vmatpush1.bf16.msra.mxu0 0
      %4521 = vmatprep.subr.bf16.mxu0 0
      %4522 = vmatpush1.bf16.msra.mxu0 0
      %4523 = vmatprep.mubr.bf16.mxu0 0
      %4524 = vmatmul.mubr.bf16.gmra.mrb[0].mxu0 %v4407
      %v4525 = vpop.f32.mrb[0].mxu0
      %v4526 = vadd.f32 %v4485, %v4525
      %v4527 = vpop.f32.mrb[0].mxu0
      %v4528 = vpop.f32.mrb[0].mxu0
      %v4529 = vadd.f32 %v4488, %v4528
      %v4530 = vpop.f32.mrb[0].mxu0
      %4531 = vdwg.mxu0
      %4532 = vst.msk [vmem:[%s595] sm:$0xff] %vm755, %v4526
      %4533 = vst.msk [vmem:[%s595 + $0x8] sm:$0xff] %vm755, %v4529
      %p4534 = scmp.lt.s32.totalorder %s29, 1
      %s4535 = scalar_select %p4534, %s29, 1
      %s4536 = smul.addr %s4535, 2
      %s4537 = smul.addr %s4536, 8
      %s4538 = scalar_lea.vmem %s18, %s4537
      // Predicated region
      $region93: #{diffusers_compression_forward.1} parent=91 // pred_check
        %p4539 = pneg %p435
      $region94: #{diffusers_compression_forward.1} parent=91 // pred_check_branch
        %4541 = sbr.rel (%p4539) target = $region96
      $region95: #{diffusers_compression_forward.1} parent=91 // pred_region
        _
      $region96: #{diffusers_compression_forward.1} parent=91 // pred_fallthru
        _
    $region92: #{diffusers_compression_forward.1} parent=5 // pred_fallthru
      _
    %p4542 = scmp.le.s32.totalorder 2, %s24
    // Predicated region
    $region97: #{diffusers_compression_forward.1} parent=5 // pred_check
      %p4543 = pneg %p4542
    $region98: #{diffusers_compression_forward.1} parent=5 // pred_check_branch
      %4545 = sbr.rel (%p4543) target = $region100
    $region99: #{diffusers_compression_forward.1} parent=5 // pred_region
      %s4546 = ssub.s32 %s24, 2
      // Predicated region
      $region101: #{diffusers_compression_forward.1} parent=99 // pred_check
        %p4547 = pneg %p441
      $region102: #{diffusers_compression_forward.1} parent=99 // pred_check_branch
        %4549 = sbr.rel (%p4547) target = $region104
      $region103: #{diffusers_compression_forward.1} parent=99 // pred_region
        %p4550 = scmp.lt.s32.totalorder %s30, 1
        %s4551 = scalar_select %p4550, %s30, 1
        %s4552 = smul.addr %s4551, 2
        %s4553 = smul.addr %s4552, 8
        %s4554 = scalar_lea.vmem %s18, %s4553
      $region104: #{diffusers_compression_forward.1} parent=99 // pred_fallthru
        _
    $region100: #{diffusers_compression_forward.1} parent=5 // pred_fallthru
      _
  $region6: #{diffusers_compression_forward.1} parent=0 // loop_footer
    %s28 = sadd.s32 1, %s24
  $region7: #{diffusers_compression_forward.1} parent=0 // loop_footer_branch
    %23 = sbr.rel target = $region3
  $region8: #{diffusers_compression_forward.1} parent=0 // loop_exit
    _

</llo_original>
